<compile_context>
chip_gen: v7x
topology: tpu7x:2x2x1
jax: 0.10.0
libtpu: 0.0.40
codegen_flags: <defaults>
</compile_context>

<pallas_src>
import jax
import jax.numpy as jnp
from jax.experimental import pallas as pl
from jax.experimental.pallas import tpu as pltpu

_BP_MAX = 512  # pairs per grid step (multiple of 128; 256-1024 sweet spot)


def _round_up(x, m):
    return ((x + m - 1) // m) * m


# ---------------------------------------------------------------------------
# Kernel
# ---------------------------------------------------------------------------
def _tensor_network_kernel(w_ref, e_ref, out_ref):
    # w_ref  : (T, N_pad)  augmented weights [W_flat | W_block | bias | zeros],
    #                      VMEM-resident across all grid steps.
    # e_ref  : (2F, BP)    this block's embeddings, batch in lanes.
    # out_ref: (T, BP)     relu(scores), batch in lanes (lane-dense store).
    two_f, bp = e_ref.shape
    f = two_f // 2
    n_pad = w_ref.shape[1]

    e1t = e_ref[0:f, :]            # (F, BP)  e1^T
    e2t = e_ref[f:two_f, :]        # (F, BP)  e2^T

    # flatten(e1 x e2^T): outer[i*F + j, b] = e1[b, i] * e2[b, j]
    # (sublane broadcast + leading-dim merge only; lane dim untouched)
    outer = (e1t[:, None, :] * e2t[None, :, :]).reshape(f * f, bp)   # (F*F, BP)

    # tail = [1; 0; ...; 0]: row 0 drives the bias column of w_aug, the rest is
    # the zero padding of the contraction dim up to N_pad (a multiple of 128).
    tail_rows = n_pad - f * f - two_f
    row_id = jax.lax.broadcasted_iota(jnp.int32, (tail_rows, bp), 0)
    tail = (row_id == 0).astype(jnp.float32)                         # (tail, BP)

    v = jnp.concatenate([outer, e_ref[...], tail], axis=0)           # (N_pad, BP)

    s = jnp.dot(w_ref[...], v,
                preferred_element_type=jnp.float32,
                precision=jax.lax.Precision.HIGHEST)                 # (T, BP), MXU
    out_ref[...] = jnp.maximum(s, 0.0)


def _tensor_network_pallas(e12, w_aug, bp):
    """e12: (2F, B_pad) batch-in-lanes embeddings, w_aug: (T, N_pad) -> (T, B_pad)."""
    two_f, b_pad = e12.shape
    t, n_pad = w_aug.shape
    return pl.pallas_call(
        _tensor_network_kernel,
        out_shape=jax.ShapeDtypeStruct((t, b_pad), jnp.float32),
        grid=(pl.cdiv(b_pad, bp),),
        in_specs=[
            pl.BlockSpec((t, n_pad), lambda g: (0, 0)),    # weights: VMEM resident
            pl.BlockSpec((two_f, bp), lambda g: (0, g)),   # this block's pairs
        ],
        out_specs=pl.BlockSpec((t, bp), lambda g: (0, g)),
        compiler_params=pltpu.CompilerParams(
            dimension_semantics=("parallel",),             # shard pair blocks (v7x)
            vmem_limit_bytes=32 * 1024 * 1024),
    )(w_aug, e12)


# ---------------------------------------------------------------------------
# One-time parameter preparation (hoisted out of the per-call path)
# ---------------------------------------------------------------------------
def prepare_params(weight_matrix, weight_matrix_block, bias):
    """(F,F,T), (T,2F), (T,1) -> (T, N_pad) slab, N_pad = roundup(F*F+2F+1, 128)."""
    f, _, t = weight_matrix.shape
    n = f * f + 2 * f + 1
    n_pad = _round_up(n, 128)
    w_flat = jnp.transpose(weight_matrix, (2, 0, 1)).reshape(t, f * f)  # [t,i*F+j]=W[i,j,t]
    w_aug = jnp.concatenate(
        [w_flat, weight_matrix_block, bias, jnp.zeros((t, n_pad - n), jnp.float32)],
        axis=1).astype(jnp.float32)
    return w_aug


# ---------------------------------------------------------------------------
# Public forward passes
# ---------------------------------------------------------------------------
@jax.jit
def tensor_network_batched(e1_batch, e2_batch, w_aug):
    """Batched pairs: (B, F), (B, F) -> (B, T)."""
    b, _ = e1_batch.shape
    bp = min(_BP_MAX, _round_up(b, 128))
    b_pad = _round_up(b, bp)
    e12 = jnp.concatenate([e1_batch.T, e2_batch.T], axis=0).astype(jnp.float32)  # (2F, B)
    if b_pad != b:
        e12 = jnp.pad(e12, ((0, 0), (0, b_pad - b)))
    out_t = _tensor_network_pallas(e12, w_aug, bp)    # (T, B_pad)
    return out_t[:, :b].T                             # (B, T)


@jax.jit
def tensor_network(embedding_1, embedding_2, w_aug):
    """Module-equivalent single-pair forward: (F,1), (F,1) -> (T,1).

    NOTE: a single pair (~35 KFLOPs) is launch-overhead dominated; it is padded
    into one BP block of the batched kernel. Prefer tensor_network_batched."""
    f = embedding_1.shape[0]
    e1 = embedding_1.reshape(1, f)
    e2 = embedding_2.reshape(1, f)
    return tensor_network_batched(e1, e2, w_aug)[0][:, None]   # (T, 1)


# ---------------------------------------------------------------------------
# Pure-JAX mirror of the PyTorch forward (correctness check)
# ---------------------------------------------------------------------------
def reference(embedding_1, embedding_2, weight_matrix, weight_matrix_block, bias):
    f, _, t = weight_matrix.shape
    hp = jax.lax.Precision.HIGHEST
    scoring = jnp.matmul(embedding_1.T, weight_matrix.reshape(f, f * t), precision=hp)
    scoring = scoring.reshape(f, t)
    scoring = jnp.matmul(scoring.T, embedding_2, precision=hp)
    combined = jnp.concatenate([embedding_1, embedding_2], axis=0)
    block_scoring = jnp.matmul(weight_matrix_block, combined, precision=hp)
    return jnp.maximum(scoring + block_scoring + bias, 0.0)


if __name__ == "__main__":
    # args.filters_3 = 32, args.tensor_neurons = 16 (SimGNN-ish small sizes)
    F, T = 32, 16
    B = 8

    key = jax.random.PRNGKey(0)
    k1, k2, k3, k4, k5, k6, k7 = jax.random.split(key, 7)

    # Embeddings after attention: column vectors (F, 1) / batched rows (B, F).
    e1 = jax.random.normal(k1, (F, 1), dtype=jnp.float32)
    e2 = jax.random.normal(k2, (F, 1), dtype=jnp.float32)
    e1_b = jax.random.normal(k6, (B, F), dtype=jnp.float32)
    e2_b = jax.random.normal(k7, (B, F), dtype=jnp.float32)

    # Deterministic xavier_uniform-style parameter init (shapes from __init__).
    a_w = (6.0 / (F * T + F * T)) ** 0.5
    weight_matrix = jax.random.uniform(k3, (F, F, T), jnp.float32, -a_w, a_w)
    a_wb = (6.0 / (T + 2 * F)) ** 0.5
    weight_matrix_block = jax.random.uniform(k4, (T, 2 * F), jnp.float32, -a_wb, a_wb)
    a_b = (6.0 / (T + 1)) ** 0.5
    bias = jax.random.uniform(k5, (T, 1), jnp.float32, -a_b, a_b)

    # One-time weight prep (outside the per-call path).
    w_aug = jax.block_until_ready(
        prepare_params(weight_matrix, weight_matrix_block, bias))

    # --- batched pairs through the Pallas kernel ---
    out_b = jax.block_until_ready(tensor_network_batched(e1_b, e2_b, w_aug))
    ref_b = jnp.stack([
        reference(e1_b[i].reshape(F, 1), e2_b[i].reshape(F, 1),
                  weight_matrix, weight_matrix_block, bias)[:, 0]
        for i in range(B)
    ])
    assert out_b.shape == (B, T), out_b.shape
    assert jnp.allclose(out_b, ref_b, atol=1e-4, rtol=1e-4), (out_b, ref_b)

    # --- single pair (module-equivalent forward) ---
    out = jax.block_until_ready(tensor_network(e1, e2, w_aug))
    ref = reference(e1, e2, weight_matrix, weight_matrix_block, bias)
    assert out.shape == (T, 1), out.shape
    assert jnp.allclose(out, ref, atol=1e-4, rtol=1e-4), (out, ref)

    print("KERNEL_OK")
</pallas_src>

<mosaic_0001>
module attributes {stable_mosaic.version = 11 : i64} {
  func.func @_tensor_network_kernel(%arg0: i32, %arg1: memref<16x1152xf32, #tpu.memory_space<vmem>>, %arg2: memref<64x128xf32, #tpu.memory_space<vmem>>, %arg3: memref<16x128xf32, #tpu.memory_space<vmem>>) attributes {dimension_semantics = [#tpu.dimension_semantics<parallel>], iteration_bounds = array<i64: 1>, scalar_prefetch = 0 : i64, scratch_operands = 0 : i64, tpu.core_type = #tpu.core_type<tc>, window_params = [{pipeline_mode = #tpu.pipeline_mode<synchronous>, transform_indices = @transform_0, window_bounds = array<i64: 16, 1152>}, {transform_indices = @transform_1, window_bounds = array<i64: 64, 128>}, {transform_indices = @transform_2, window_bounds = array<i64: 16, 128>}]} {
    %c0 = arith.constant 0 : index
    %c0_0 = arith.constant 0 : index
    %0 = vector.load %arg2[%c0, %c0_0] : memref<64x128xf32, #tpu.memory_space<vmem>>, vector<32x128xf32>
    %c32 = arith.constant 32 : index
    %c0_1 = arith.constant 0 : index
    %1 = vector.load %arg2[%c32, %c0_1] : memref<64x128xf32, #tpu.memory_space<vmem>>, vector<32x128xf32>
    %2 = vector.shape_cast %0 : vector<32x128xf32> to vector<32x1x128xf32>
    %3 = vector.shape_cast %1 : vector<32x128xf32> to vector<1x32x128xf32>
    %4 = vector.broadcast %2 : vector<32x1x128xf32> to vector<32x32x128xf32>
    %5 = vector.broadcast %3 : vector<1x32x128xf32> to vector<32x32x128xf32>
    %6 = arith.mulf %4, %5 : vector<32x32x128xf32>
    %7 = vector.shape_cast %6 : vector<32x32x128xf32> to vector<1024x128xf32>
    %8 = tpu.iota {dimensions = array<i32: 0>} : vector<64x128xi32>
    %c0_i32 = arith.constant 0 : i32
    %9 = vector.broadcast %c0_i32 : i32 to vector<64x128xi32>
    %10 = arith.cmpi eq, %8, %9 : vector<64x128xi32>
    %11 = arith.extui %10 : vector<64x128xi1> to vector<64x128xi32>
    %12 = arith.sitofp %11 : vector<64x128xi32> to vector<64x128xf32>
    %c0_2 = arith.constant 0 : index
    %c0_3 = arith.constant 0 : index
    %13 = vector.load %arg2[%c0_2, %c0_3] : memref<64x128xf32, #tpu.memory_space<vmem>>, vector<64x128xf32>
    %14 = tpu.concatenate %7, %13, %12 in 0 : vector<1024x128xf32>, vector<64x128xf32>, vector<64x128xf32> -> vector<1152x128xf32>
    %c0_4 = arith.constant 0 : index
    %c0_5 = arith.constant 0 : index
    %15 = vector.load %arg1[%c0_4, %c0_5] : memref<16x1152xf32, #tpu.memory_space<vmem>>, vector<16x1152xf32>
    %cst = arith.constant dense<0.000000e+00> : vector<16x128xf32>
    %16 = tpu.matmul %15, %14, %cst {dimension_numbers = #tpu.dot_dimension_numbers<[1], [0], [0], [1], [0, 0, 1, 1], [], []>, precision = #tpu.contract_precision<fp32>} : vector<16x1152xf32>, vector<1152x128xf32>, vector<16x128xf32> -> vector<16x128xf32>
    %cst_6 = arith.constant 0.000000e+00 : f32
    %17 = vector.broadcast %cst_6 : f32 to vector<16x128xf32>
    %18 = arith.maximumf %16, %17 : vector<16x128xf32>
    %c0_7 = arith.constant 0 : index
    %c0_8 = arith.constant 0 : index
    %19 = vector.load %arg3[%c0_7, %c0_8] : memref<16x128xf32, #tpu.memory_space<vmem>>, vector<16x128xf32>
    tpu.vector_store %arg3[%c0_7, %c0_8], %18 {strides = array<i32>} : memref<16x128xf32, #tpu.memory_space<vmem>>, vector<16x128xf32>,
    return
  }
  func.func @transform_0(%arg0: i32) -> (i32, i32) {
    %c0_i32 = arith.constant 0 : i32
    %c0_i32_0 = arith.constant 0 : i32
    %c0_i32_1 = arith.constant 0 : i32
    return %c0_i32, %c0_i32_0 : i32, i32
  }
  func.func @transform_1(%arg0: i32) -> (i32, i32) {
    %c0_i32 = arith.constant 0 : i32
    %c0_i32_0 = arith.constant 0 : i32
    return %c0_i32, %arg0 : i32, i32
  }
  func.func @transform_2(%arg0: i32) -> (i32, i32) {
    %c0_i32 = arith.constant 0 : i32
    %c0_i32_0 = arith.constant 0 : i32
    return %c0_i32, %arg0 : i32, i32
  }
}

</mosaic_0001>

<llo_original>
// kernel: tensor_network_batched.1
$region0: #{tensor_network_batched.1}
  #allocation0 [shape = 'u32[]', space=smem, size = 0x4, offset = 0x4, fixed_abs, tag = 'smem constant byte address 0x4 - core index']
  #allocation1 [shape = 'u32[144,128]{1,0:T(1,128)}', space=vmem, size = 0x12000, scoped, tag = 'internal scratch']
  %s0 = inlined_call_operand.vmem [shape: f32[16,1152], index: 0, kind: input, shape index: {}]
  %s1 = inlined_call_operand.vmem [shape: f32[64,128], index: 1, kind: input, shape index: {}]
  %s2 = inlined_call_operand.vmem [shape: f32[16,128], index: 2, kind: output, shape index: {}]
  %s3 = sld [smem:[#allocation0]]
  $region18: #{tensor_network_batched.1} parent=0
    _
  %s5 = ssub.s32 1, %s3
  %s6 = scalar_select 0, %s5, %s3
  // Predicated region
  $region2: #{tensor_network_batched.1} parent=0 // pred_check
    _
  $region3: #{tensor_network_batched.1} parent=0 // pred_check_branch
    %8 = sbr.rel (0) target = $region5
  $region4: #{tensor_network_batched.1} parent=0 // pred_region
    _
  $region5: #{tensor_network_batched.1} parent=0 // pred_fallthru
    _
  // Predicated region
  $region6: #{tensor_network_batched.1} parent=0 // pred_check
    _
  $region7: #{tensor_network_batched.1} parent=0 // pred_check_branch
    %10 = sbr.rel (0) target = $region9
  $region8: #{tensor_network_batched.1} parent=0 // pred_region
    _
  $region9: #{tensor_network_batched.1} parent=0 // pred_fallthru
    _
  %v11 = vld [vmem:[%s1] sm:$0xff]
  %v12 = vld [vmem:[%s1 + $0x8] sm:$0xff]
  %v13 = vld [vmem:[%s1 + $0x10] sm:$0xff]
  %v14 = vld [vmem:[%s1 + $0x18] sm:$0xff]
  %v15 = vld [vmem:[%s1 + $0x20] sm:$0xff]
  %v16 = vld [vmem:[%s1 + $0x28] sm:$0xff]
  %v17 = vld [vmem:[%s1 + $0x30] sm:$0xff]
  %v18 = vld [vmem:[%s1 + $0x38] sm:$0xff]
  %v23 = vcombine.high %v11, %v11
  %v25 = vunpack.c.l.s4 1966171168
  %v26 = vunpack.c.0.s8 %v25
  %v27 = vlaneseq
  %v28 = vshrl.u32 %v27, 7
  %v29 = vsub.s32 %v26, %v28
  %v30 = vrot.slane %v11, %v29
  %v32 = vunpack.c.l.s4 1966171168
  %v33 = vunpack.c.0.s8 %v32
  %v34 = vlaneseq
  %v35 = vshrl.u32 %v34, 7
  %v36 = vsub.s32 %v33, %v35
  %v37 = vrot.slane %v23, %v36
  %v38 = vcombine.high %v30, %v30
  %v39 = vcombine.high %v37, %v37
  %v41 = vunpack.c.l.s4 1966171168
  %v42 = vunpack.c.0.s8 %v41
  %v43 = vlaneseq
  %v44 = vshrl.u32 %v43, 7
  %v45 = vsub.s32 %v42, %v44
  %v46 = vrot.slane %v30, %v45
  %v48 = vunpack.c.l.s4 1966171168
  %v49 = vunpack.c.0.s8 %v48
  %v50 = vlaneseq
  %v51 = vshrl.u32 %v50, 7
  %v52 = vsub.s32 %v49, %v51
  %v53 = vrot.slane %v37, %v52
  %v55 = vunpack.c.l.s4 1966171168
  %v56 = vunpack.c.0.s8 %v55
  %v57 = vlaneseq
  %v58 = vshrl.u32 %v57, 7
  %v59 = vsub.s32 %v56, %v58
  %v60 = vrot.slane %v38, %v59
  %v62 = vunpack.c.l.s4 1966171168
  %v63 = vunpack.c.0.s8 %v62
  %v64 = vlaneseq
  %v65 = vshrl.u32 %v64, 7
  %v66 = vsub.s32 %v63, %v65
  %v67 = vrot.slane %v39, %v66
  %v68 = vcombine.high %v46, %v46
  %v69 = vcombine.high %v53, %v53
  %v70 = vcombine.high %v60, %v60
  %v71 = vcombine.high %v67, %v67
  %v72 = vcombine.high %v12, %v12
  %v74 = vunpack.c.l.s4 1966171168
  %v75 = vunpack.c.0.s8 %v74
  %v76 = vlaneseq
  %v77 = vshrl.u32 %v76, 7
  %v78 = vsub.s32 %v75, %v77
  %v79 = vrot.slane %v12, %v78
  %v81 = vunpack.c.l.s4 1966171168
  %v82 = vunpack.c.0.s8 %v81
  %v83 = vlaneseq
  %v84 = vshrl.u32 %v83, 7
  %v85 = vsub.s32 %v82, %v84
  %v86 = vrot.slane %v72, %v85
  %v87 = vcombine.high %v79, %v79
  %v88 = vcombine.high %v86, %v86
  %v90 = vunpack.c.l.s4 1966171168
  %v91 = vunpack.c.0.s8 %v90
  %v92 = vlaneseq
  %v93 = vshrl.u32 %v92, 7
  %v94 = vsub.s32 %v91, %v93
  %v95 = vrot.slane %v79, %v94
  %v97 = vunpack.c.l.s4 1966171168
  %v98 = vunpack.c.0.s8 %v97
  %v99 = vlaneseq
  %v100 = vshrl.u32 %v99, 7
  %v101 = vsub.s32 %v98, %v100
  %v102 = vrot.slane %v86, %v101
  %v104 = vunpack.c.l.s4 1966171168
  %v105 = vunpack.c.0.s8 %v104
  %v106 = vlaneseq
  %v107 = vshrl.u32 %v106, 7
  %v108 = vsub.s32 %v105, %v107
  %v109 = vrot.slane %v87, %v108
  %v111 = vunpack.c.l.s4 1966171168
  %v112 = vunpack.c.0.s8 %v111
  %v113 = vlaneseq
  %v114 = vshrl.u32 %v113, 7
  %v115 = vsub.s32 %v112, %v114
  %v116 = vrot.slane %v88, %v115
  %v117 = vcombine.high %v95, %v95
  %v118 = vcombine.high %v102, %v102
  %v119 = vcombine.high %v109, %v109
  %v120 = vcombine.high %v116, %v116
  %v121 = vcombine.high %v13, %v13
  %v123 = vunpack.c.l.s4 1966171168
  %v124 = vunpack.c.0.s8 %v123
  %v125 = vlaneseq
  %v126 = vshrl.u32 %v125, 7
  %v127 = vsub.s32 %v124, %v126
  %v128 = vrot.slane %v13, %v127
  %v130 = vunpack.c.l.s4 1966171168
  %v131 = vunpack.c.0.s8 %v130
  %v132 = vlaneseq
  %v133 = vshrl.u32 %v132, 7
  %v134 = vsub.s32 %v131, %v133
  %v135 = vrot.slane %v121, %v134
  %v136 = vcombine.high %v128, %v128
  %v137 = vcombine.high %v135, %v135
  %v139 = vunpack.c.l.s4 1966171168
  %v140 = vunpack.c.0.s8 %v139
  %v141 = vlaneseq
  %v142 = vshrl.u32 %v141, 7
  %v143 = vsub.s32 %v140, %v142
  %v144 = vrot.slane %v128, %v143
  %v146 = vunpack.c.l.s4 1966171168
  %v147 = vunpack.c.0.s8 %v146
  %v148 = vlaneseq
  %v149 = vshrl.u32 %v148, 7
  %v150 = vsub.s32 %v147, %v149
  %v151 = vrot.slane %v135, %v150
  %v153 = vunpack.c.l.s4 1966171168
  %v154 = vunpack.c.0.s8 %v153
  %v155 = vlaneseq
  %v156 = vshrl.u32 %v155, 7
  %v157 = vsub.s32 %v154, %v156
  %v158 = vrot.slane %v136, %v157
  %v160 = vunpack.c.l.s4 1966171168
  %v161 = vunpack.c.0.s8 %v160
  %v162 = vlaneseq
  %v163 = vshrl.u32 %v162, 7
  %v164 = vsub.s32 %v161, %v163
  %v165 = vrot.slane %v137, %v164
  %v166 = vcombine.high %v144, %v144
  %v167 = vcombine.high %v151, %v151
  %v168 = vcombine.high %v158, %v158
  %v169 = vcombine.high %v165, %v165
  %v170 = vcombine.high %v14, %v14
  %v172 = vunpack.c.l.s4 1966171168
  %v173 = vunpack.c.0.s8 %v172
  %v174 = vlaneseq
  %v175 = vshrl.u32 %v174, 7
  %v176 = vsub.s32 %v173, %v175
  %v177 = vrot.slane %v14, %v176
  %v179 = vunpack.c.l.s4 1966171168
  %v180 = vunpack.c.0.s8 %v179
  %v181 = vlaneseq
  %v182 = vshrl.u32 %v181, 7
  %v183 = vsub.s32 %v180, %v182
  %v184 = vrot.slane %v170, %v183
  %v185 = vcombine.high %v177, %v177
  %v186 = vcombine.high %v184, %v184
  %v188 = vunpack.c.l.s4 1966171168
  %v189 = vunpack.c.0.s8 %v188
  %v190 = vlaneseq
  %v191 = vshrl.u32 %v190, 7
  %v192 = vsub.s32 %v189, %v191
  %v193 = vrot.slane %v177, %v192
  %v195 = vunpack.c.l.s4 1966171168
  %v196 = vunpack.c.0.s8 %v195
  %v197 = vlaneseq
  %v198 = vshrl.u32 %v197, 7
  %v199 = vsub.s32 %v196, %v198
  %v200 = vrot.slane %v184, %v199
  %v202 = vunpack.c.l.s4 1966171168
  %v203 = vunpack.c.0.s8 %v202
  %v204 = vlaneseq
  %v205 = vshrl.u32 %v204, 7
  %v206 = vsub.s32 %v203, %v205
  %v207 = vrot.slane %v185, %v206
  %v209 = vunpack.c.l.s4 1966171168
  %v210 = vunpack.c.0.s8 %v209
  %v211 = vlaneseq
  %v212 = vshrl.u32 %v211, 7
  %v213 = vsub.s32 %v210, %v212
  %v214 = vrot.slane %v186, %v213
  %v215 = vcombine.high %v193, %v193
  %v216 = vcombine.high %v200, %v200
  %v217 = vcombine.high %v207, %v207
  %v218 = vcombine.high %v214, %v214
  %v219 = vlaneseq
  %v220 = vshrl.u32 %v219, 7
  %v221 = vsub.s32 0, %v220
  %v222 = vrot.slane %v46, %v221
  %v223 = vlaneseq
  %v224 = vshrl.u32 %v223, 7
  %v225 = vsub.s32 0, %v224
  %v226 = vrot.slane %v60, %v225
  %v227 = vlaneseq
  %v228 = vshrl.u32 %v227, 7
  %v229 = vsub.s32 0, %v228
  %v230 = vrot.slane %v68, %v229
  %v231 = vlaneseq
  %v232 = vshrl.u32 %v231, 7
  %v233 = vsub.s32 0, %v232
  %v234 = vrot.slane %v70, %v233
  %v235 = vlaneseq
  %v236 = vshrl.u32 %v235, 7
  %v237 = vsub.s32 0, %v236
  %v238 = vrot.slane %v53, %v237
  %v239 = vlaneseq
  %v240 = vshrl.u32 %v239, 7
  %v241 = vsub.s32 0, %v240
  %v242 = vrot.slane %v67, %v241
  %v243 = vlaneseq
  %v244 = vshrl.u32 %v243, 7
  %v245 = vsub.s32 0, %v244
  %v246 = vrot.slane %v69, %v245
  %v247 = vlaneseq
  %v248 = vshrl.u32 %v247, 7
  %v249 = vsub.s32 0, %v248
  %v250 = vrot.slane %v71, %v249
  %v251 = vlaneseq
  %v252 = vshrl.u32 %v251, 7
  %v253 = vsub.s32 0, %v252
  %v254 = vrot.slane %v95, %v253
  %v255 = vlaneseq
  %v256 = vshrl.u32 %v255, 7
  %v257 = vsub.s32 0, %v256
  %v258 = vrot.slane %v109, %v257
  %v259 = vlaneseq
  %v260 = vshrl.u32 %v259, 7
  %v261 = vsub.s32 0, %v260
  %v262 = vrot.slane %v117, %v261
  %v263 = vlaneseq
  %v264 = vshrl.u32 %v263, 7
  %v265 = vsub.s32 0, %v264
  %v266 = vrot.slane %v119, %v265
  %v267 = vlaneseq
  %v268 = vshrl.u32 %v267, 7
  %v269 = vsub.s32 0, %v268
  %v270 = vrot.slane %v102, %v269
  %v271 = vlaneseq
  %v272 = vshrl.u32 %v271, 7
  %v273 = vsub.s32 0, %v272
  %v274 = vrot.slane %v116, %v273
  %v275 = vlaneseq
  %v276 = vshrl.u32 %v275, 7
  %v277 = vsub.s32 0, %v276
  %v278 = vrot.slane %v118, %v277
  %v279 = vlaneseq
  %v280 = vshrl.u32 %v279, 7
  %v281 = vsub.s32 0, %v280
  %v282 = vrot.slane %v120, %v281
  %v283 = vlaneseq
  %v284 = vshrl.u32 %v283, 7
  %v285 = vsub.s32 0, %v284
  %v286 = vrot.slane %v144, %v285
  %v287 = vlaneseq
  %v288 = vshrl.u32 %v287, 7
  %v289 = vsub.s32 0, %v288
  %v290 = vrot.slane %v158, %v289
  %v291 = vlaneseq
  %v292 = vshrl.u32 %v291, 7
  %v293 = vsub.s32 0, %v292
  %v294 = vrot.slane %v166, %v293
  %v295 = vlaneseq
  %v296 = vshrl.u32 %v295, 7
  %v297 = vsub.s32 0, %v296
  %v298 = vrot.slane %v168, %v297
  %v299 = vlaneseq
  %v300 = vshrl.u32 %v299, 7
  %v301 = vsub.s32 0, %v300
  %v302 = vrot.slane %v151, %v301
  %v303 = vlaneseq
  %v304 = vshrl.u32 %v303, 7
  %v305 = vsub.s32 0, %v304
  %v306 = vrot.slane %v165, %v305
  %v307 = vlaneseq
  %v308 = vshrl.u32 %v307, 7
  %v309 = vsub.s32 0, %v308
  %v310 = vrot.slane %v167, %v309
  %v311 = vlaneseq
  %v312 = vshrl.u32 %v311, 7
  %v313 = vsub.s32 0, %v312
  %v314 = vrot.slane %v169, %v313
  %v315 = vlaneseq
  %v316 = vshrl.u32 %v315, 7
  %v317 = vsub.s32 0, %v316
  %v318 = vrot.slane %v193, %v317
  %v319 = vlaneseq
  %v320 = vshrl.u32 %v319, 7
  %v321 = vsub.s32 0, %v320
  %v322 = vrot.slane %v207, %v321
  %v323 = vlaneseq
  %v324 = vshrl.u32 %v323, 7
  %v325 = vsub.s32 0, %v324
  %v326 = vrot.slane %v215, %v325
  %v327 = vlaneseq
  %v328 = vshrl.u32 %v327, 7
  %v329 = vsub.s32 0, %v328
  %v330 = vrot.slane %v217, %v329
  %v331 = vlaneseq
  %v332 = vshrl.u32 %v331, 7
  %v333 = vsub.s32 0, %v332
  %v334 = vrot.slane %v200, %v333
  %v335 = vlaneseq
  %v336 = vshrl.u32 %v335, 7
  %v337 = vsub.s32 0, %v336
  %v338 = vrot.slane %v214, %v337
  %v339 = vlaneseq
  %v340 = vshrl.u32 %v339, 7
  %v341 = vsub.s32 0, %v340
  %v342 = vrot.slane %v216, %v341
  %v343 = vlaneseq
  %v344 = vshrl.u32 %v343, 7
  %v345 = vsub.s32 0, %v344
  %v346 = vrot.slane %v218, %v345
  %v379 = vmul.f32 %v222, %v15
  %v380 = vmul.f32 %v222, %v16
  %v381 = vmul.f32 %v222, %v17
  %v382 = vmul.f32 %v222, %v18
  %v383 = vmul.f32 %v226, %v15
  %v384 = vmul.f32 %v226, %v16
  %v385 = vmul.f32 %v226, %v17
  %v386 = vmul.f32 %v226, %v18
  %v387 = vmul.f32 %v230, %v15
  %v388 = vmul.f32 %v230, %v16
  %v389 = vmul.f32 %v230, %v17
  %v390 = vmul.f32 %v230, %v18
  %v391 = vmul.f32 %v234, %v15
  %v392 = vmul.f32 %v234, %v16
  %v393 = vmul.f32 %v234, %v17
  %v394 = vmul.f32 %v234, %v18
  %v395 = vmul.f32 %v238, %v15
  %v396 = vmul.f32 %v238, %v16
  %v397 = vmul.f32 %v238, %v17
  %v398 = vmul.f32 %v238, %v18
  %v399 = vmul.f32 %v242, %v15
  %v400 = vmul.f32 %v242, %v16
  %v401 = vmul.f32 %v242, %v17
  %v402 = vmul.f32 %v242, %v18
  %v403 = vmul.f32 %v246, %v15
  %v404 = vmul.f32 %v246, %v16
  %v405 = vmul.f32 %v246, %v17
  %v406 = vmul.f32 %v246, %v18
  %v407 = vmul.f32 %v250, %v15
  %v408 = vmul.f32 %v250, %v16
  %v409 = vmul.f32 %v250, %v17
  %v410 = vmul.f32 %v250, %v18
  %v411 = vmul.f32 %v254, %v15
  %v412 = vmul.f32 %v254, %v16
  %v413 = vmul.f32 %v254, %v17
  %v414 = vmul.f32 %v254, %v18
  %v415 = vmul.f32 %v258, %v15
  %v416 = vmul.f32 %v258, %v16
  %v417 = vmul.f32 %v258, %v17
  %v418 = vmul.f32 %v258, %v18
  %v419 = vmul.f32 %v262, %v15
  %v420 = vmul.f32 %v262, %v16
  %v421 = vmul.f32 %v262, %v17
  %v422 = vmul.f32 %v262, %v18
  %v423 = vmul.f32 %v266, %v15
  %v424 = vmul.f32 %v266, %v16
  %v425 = vmul.f32 %v266, %v17
  %v426 = vmul.f32 %v266, %v18
  %v427 = vmul.f32 %v270, %v15
  %v428 = vmul.f32 %v270, %v16
  %v429 = vmul.f32 %v270, %v17
  %v430 = vmul.f32 %v270, %v18
  %v431 = vmul.f32 %v274, %v15
  %v432 = vmul.f32 %v274, %v16
  %v433 = vmul.f32 %v274, %v17
  %v434 = vmul.f32 %v274, %v18
  %v435 = vmul.f32 %v278, %v15
  %v436 = vmul.f32 %v278, %v16
  %v437 = vmul.f32 %v278, %v17
  %v438 = vmul.f32 %v278, %v18
  %v439 = vmul.f32 %v282, %v15
  %v440 = vmul.f32 %v282, %v16
  %v441 = vmul.f32 %v282, %v17
  %v442 = vmul.f32 %v282, %v18
  %v443 = vmul.f32 %v286, %v15
  %v444 = vmul.f32 %v286, %v16
  %v445 = vmul.f32 %v286, %v17
  %v446 = vmul.f32 %v286, %v18
  %v447 = vmul.f32 %v290, %v15
  %v448 = vmul.f32 %v290, %v16
  %v449 = vmul.f32 %v290, %v17
  %v450 = vmul.f32 %v290, %v18
  %v451 = vmul.f32 %v294, %v15
  %v452 = vmul.f32 %v294, %v16
  %v453 = vmul.f32 %v294, %v17
  %v454 = vmul.f32 %v294, %v18
  %v455 = vmul.f32 %v298, %v15
  %v456 = vmul.f32 %v298, %v16
  %v457 = vmul.f32 %v298, %v17
  %v458 = vmul.f32 %v298, %v18
  %v459 = vmul.f32 %v302, %v15
  %v460 = vmul.f32 %v302, %v16
  %v461 = vmul.f32 %v302, %v17
  %v462 = vmul.f32 %v302, %v18
  %v463 = vmul.f32 %v306, %v15
  %v464 = vmul.f32 %v306, %v16
  %v465 = vmul.f32 %v306, %v17
  %v466 = vmul.f32 %v306, %v18
  %v467 = vmul.f32 %v310, %v15
  %v468 = vmul.f32 %v310, %v16
  %v469 = vmul.f32 %v310, %v17
  %v470 = vmul.f32 %v310, %v18
  %v471 = vmul.f32 %v314, %v15
  %v472 = vmul.f32 %v314, %v16
  %v473 = vmul.f32 %v314, %v17
  %v474 = vmul.f32 %v314, %v18
  %v475 = vmul.f32 %v318, %v15
  %v476 = vmul.f32 %v318, %v16
  %v477 = vmul.f32 %v318, %v17
  %v478 = vmul.f32 %v318, %v18
  %v479 = vmul.f32 %v322, %v15
  %v480 = vmul.f32 %v322, %v16
  %v481 = vmul.f32 %v322, %v17
  %v482 = vmul.f32 %v322, %v18
  %v483 = vmul.f32 %v326, %v15
  %v484 = vmul.f32 %v326, %v16
  %v485 = vmul.f32 %v326, %v17
  %v486 = vmul.f32 %v326, %v18
  %v487 = vmul.f32 %v330, %v15
  %v488 = vmul.f32 %v330, %v16
  %v489 = vmul.f32 %v330, %v17
  %v490 = vmul.f32 %v330, %v18
  %v491 = vmul.f32 %v334, %v15
  %v492 = vmul.f32 %v334, %v16
  %v493 = vmul.f32 %v334, %v17
  %v494 = vmul.f32 %v334, %v18
  %v495 = vmul.f32 %v338, %v15
  %v496 = vmul.f32 %v338, %v16
  %v497 = vmul.f32 %v338, %v17
  %v498 = vmul.f32 %v338, %v18
  %v499 = vmul.f32 %v342, %v15
  %v500 = vmul.f32 %v342, %v16
  %v501 = vmul.f32 %v342, %v17
  %v502 = vmul.f32 %v342, %v18
  %v503 = vmul.f32 %v346, %v15
  %v504 = vmul.f32 %v346, %v16
  %v505 = vmul.f32 %v346, %v17
  %v506 = vmul.f32 %v346, %v18
  %v507 = vlaneseq
  %v508 = vshrl.u32 %v507, 7
  %v509 = vadd.s32 %v508, 8
  %v510 = vadd.s32 %v508, 16
  %v511 = vadd.s32 %v508, 24
  %v512 = vadd.s32 %v508, 32
  %v513 = vadd.s32 %v508, 40
  %v514 = vadd.s32 %v508, 48
  %v515 = vadd.s32 %v508, 56
  %vm516 = vcmp.eq.s32.totalorder %v508, 0
  %vm517 = vcmp.eq.s32.totalorder %v509, 0
  %vm518 = vcmp.eq.s32.totalorder %v510, 0
  %vm519 = vcmp.eq.s32.totalorder %v511, 0
  %vm520 = vcmp.eq.s32.totalorder %v512, 0
  %vm521 = vcmp.eq.s32.totalorder %v513, 0
  %vm522 = vcmp.eq.s32.totalorder %v514, 0
  %vm523 = vcmp.eq.s32.totalorder %v515, 0
  %v524 = vsel %vm516, 1, 0
  %v525 = vsel %vm517, 1, 0
  %v526 = vsel %vm518, 1, 0
  %v527 = vsel %vm519, 1, 0
  %v528 = vsel %vm520, 1, 0
  %v529 = vsel %vm521, 1, 0
  %v530 = vsel %vm522, 1, 0
  %v531 = vsel %vm523, 1, 0
  %v532 = vcvt.s32.f32 %v524
  %v533 = vcvt.s32.f32 %v525
  %v534 = vcvt.s32.f32 %v526
  %v535 = vcvt.s32.f32 %v527
  %v536 = vcvt.s32.f32 %v528
  %v537 = vcvt.s32.f32 %v529
  %v538 = vcvt.s32.f32 %v530
  %v539 = vcvt.s32.f32 %v531
  %v540 = vld [vmem:[%s1] sm:$0xff]
  %v541 = vld [vmem:[%s1 + $0x8] sm:$0xff]
  %v542 = vld [vmem:[%s1 + $0x10] sm:$0xff]
  %v543 = vld [vmem:[%s1 + $0x18] sm:$0xff]
  %v544 = vld [vmem:[%s1 + $0x20] sm:$0xff]
  %v545 = vld [vmem:[%s1 + $0x28] sm:$0xff]
  %v546 = vld [vmem:[%s1 + $0x30] sm:$0xff]
  %v547 = vld [vmem:[%s1 + $0x38] sm:$0xff]
  %v548 = vld [vmem:[%s0] sm:$0xff]
  %v549 = vld [vmem:[%s0 + $0x8] sm:$0xff]
  %v550 = vld [vmem:[%s0 + $0x10] sm:$0xff]
  %v551 = vld [vmem:[%s0 + $0x18] sm:$0xff]
  %v552 = vld [vmem:[%s0 + $0x20] sm:$0xff]
  %v553 = vld [vmem:[%s0 + $0x28] sm:$0xff]
  %v554 = vld [vmem:[%s0 + $0x30] sm:$0xff]
  %v555 = vld [vmem:[%s0 + $0x38] sm:$0xff]
  %v556 = vld [vmem:[%s0 + $0x40] sm:$0xff]
  %v557 = vld [vmem:[%s0 + $0x48] sm:$0xff]
  %v558 = vld [vmem:[%s0 + $0x50] sm:$0xff]
  %v559 = vld [vmem:[%s0 + $0x58] sm:$0xff]
  %v560 = vld [vmem:[%s0 + $0x60] sm:$0xff]
  %v561 = vld [vmem:[%s0 + $0x68] sm:$0xff]
  %v562 = vld [vmem:[%s0 + $0x70] sm:$0xff]
  %v563 = vld [vmem:[%s0 + $0x78] sm:$0xff]
  %v564 = vld [vmem:[%s0 + $0x80] sm:$0xff]
  %v565 = vld [vmem:[%s0 + $0x88] sm:$0xff]
  %566 = vmatprep.subr.mxu0 0.0
  %v567 = vand.u32 %v379, 4294901760
  %568 = vmatpush1.msra.mxu0 %v567
  %569 = vmatprep.subr.mxu0 0.0
  %v570 = vand.u32 %v380, 4294901760
  %571 = vmatpush1.msra.mxu0 %v570
  %572 = vmatprep.subr.mxu0 0.0
  %v573 = vand.u32 %v381, 4294901760
  %574 = vmatpush1.msra.mxu0 %v573
  %575 = vmatprep.subr.mxu0 0.0
  %v576 = vand.u32 %v382, 4294901760
  %577 = vmatpush1.msra.mxu0 %v576
  %578 = vmatprep.subr.mxu0 0.0
  %v579 = vand.u32 %v383, 4294901760
  %580 = vmatpush1.msra.mxu0 %v579
  %581 = vmatprep.subr.mxu0 0.0
  %v582 = vand.u32 %v384, 4294901760
  %583 = vmatpush1.msra.mxu0 %v582
  %584 = vmatprep.subr.mxu0 0.0
  %v585 = vand.u32 %v385, 4294901760
  %586 = vmatpush1.msra.mxu0 %v585
  %587 = vmatprep.subr.mxu0 0.0
  %v588 = vand.u32 %v386, 4294901760
  %589 = vmatpush1.msra.mxu0 %v588
  %590 = vmatprep.subr.mxu0 0.0
  %v591 = vand.u32 %v387, 4294901760
  %592 = vmatpush1.msra.mxu0 %v591
  %593 = vmatprep.subr.mxu0 0.0
  %v594 = vand.u32 %v388, 4294901760
  %595 = vmatpush1.msra.mxu0 %v594
  %596 = vmatprep.subr.mxu0 0.0
  %v597 = vand.u32 %v389, 4294901760
  %598 = vmatpush1.msra.mxu0 %v597
  %599 = vmatprep.subr.mxu0 0.0
  %v600 = vand.u32 %v390, 4294901760
  %601 = vmatpush1.msra.mxu0 %v600
  %602 = vmatprep.subr.mxu0 0.0
  %v603 = vand.u32 %v391, 4294901760
  %604 = vmatpush1.msra.mxu0 %v603
  %605 = vmatprep.subr.mxu0 0.0
  %v606 = vand.u32 %v392, 4294901760
  %607 = vmatpush1.msra.mxu0 %v606
  %608 = vmatprep.subr.mxu0 0.0
  %v609 = vand.u32 %v393, 4294901760
  %610 = vmatpush1.msra.mxu0 %v609
  %611 = vmatprep.subr.mxu0 0.0
  %v612 = vand.u32 %v394, 4294901760
  %613 = vmatpush1.msra.mxu0 %v612
  %614 = vmatprep.subr.mxu0 0.0
  %v615 = vand.u32 %v395, 4294901760
  %616 = vmatpush1.msra.mxu0 %v615
  %617 = vmatprep.subr.mxu0 0.0
  %v618 = vand.u32 %v396, 4294901760
  %619 = vmatpush1.msra.mxu0 %v618
  %620 = vmatprep.subr.mxu0 0.0
  %v621 = vand.u32 %v397, 4294901760
  %622 = vmatpush1.msra.mxu0 %v621
  %623 = vmatprep.subr.mxu0 0.0
  %v624 = vand.u32 %v398, 4294901760
  %625 = vmatpush1.msra.mxu0 %v624
  %626 = vmatprep.subr.mxu0 0.0
  %v627 = vand.u32 %v399, 4294901760
  %628 = vmatpush1.msra.mxu0 %v627
  %629 = vmatprep.subr.mxu0 0.0
  %v630 = vand.u32 %v400, 4294901760
  %631 = vmatpush1.msra.mxu0 %v630
  %632 = vmatprep.subr.mxu0 0.0
  %v633 = vand.u32 %v401, 4294901760
  %634 = vmatpush1.msra.mxu0 %v633
  %635 = vmatprep.subr.mxu0 0.0
  %v636 = vand.u32 %v402, 4294901760
  %637 = vmatpush1.msra.mxu0 %v636
  %638 = vmatprep.subr.mxu0 0.0
  %v639 = vand.u32 %v403, 4294901760
  %640 = vmatpush1.msra.mxu0 %v639
  %641 = vmatprep.subr.mxu0 0.0
  %v642 = vand.u32 %v404, 4294901760
  %643 = vmatpush1.msra.mxu0 %v642
  %644 = vmatprep.subr.mxu0 0.0
  %v645 = vand.u32 %v405, 4294901760
  %646 = vmatpush1.msra.mxu0 %v645
  %647 = vmatprep.subr.mxu0 0.0
  %v648 = vand.u32 %v406, 4294901760
  %649 = vmatpush1.msra.mxu0 %v648
  %650 = vmatprep.subr.mxu0 0.0
  %v651 = vand.u32 %v407, 4294901760
  %652 = vmatpush1.msra.mxu0 %v651
  %653 = vmatprep.subr.mxu0 0.0
  %v654 = vand.u32 %v408, 4294901760
  %655 = vmatpush1.msra.mxu0 %v654
  %656 = vmatprep.subr.mxu0 0.0
  %v657 = vand.u32 %v409, 4294901760
  %658 = vmatpush1.msra.mxu0 %v657
  %659 = vmatprep.subr.mxu0 0.0
  %v660 = vand.u32 %v410, 4294901760
  %661 = vmatpush1.msra.mxu0 %v660
  %v662 = vand.u32 %v549, 4294901760
  %v663 = vsub.f32 %v549, %v662
  %v664 = vand.u32 %v663, 4294901760
  %v665 = vsub.f32 %v663, %v664
  %v666 = vand.u32 %v665, 4294901760
  %667 = vmatprep.mubr.f32.mxu0 %v666
  %v668 = vand.u32 %v548, 4294901760
  %v669 = vsub.f32 %v548, %v668
  %v670 = vand.u32 %v669, 4294901760
  %v671 = vsub.f32 %v669, %v670
  %v672 = vand.u32 %v671, 4294901760
  %673 = vmatmul.mubr.f32.gmra.mrb[0].mxu0 %v672
  %v674 = vpop.f32.mrb[0].mxu0
  %v675 = vadd.f32 0.0, %v674
  %v676 = vpop.f32.mrb[0].mxu0
  %v677 = vand.u32 %v558, 4294901760
  %v678 = vsub.f32 %v558, %v677
  %v679 = vand.u32 %v678, 4294901760
  %v680 = vsub.f32 %v678, %v679
  %v681 = vand.u32 %v680, 4294901760
  %682 = vmatprep.mubr.f32.mxu0 %v681
  %v683 = vand.u32 %v557, 4294901760
  %v684 = vsub.f32 %v557, %v683
  %v685 = vand.u32 %v684, 4294901760
  %v686 = vsub.f32 %v684, %v685
  %v687 = vand.u32 %v686, 4294901760
  %688 = vmatmul.mubr.f32.gmra.mrb[0].mxu0 %v687
  %v689 = vpop.f32.mrb[0].mxu0
  %v690 = vadd.f32 0.0, %v689
  %v691 = vpop.f32.mrb[0].mxu0
  %692 = vdwg.mxu0
  %693 = vmatprep.subr.mxu0 0.0
  %v694 = vand.u32 %v379, 4294901760
  %v695 = vsub.f32 %v379, %v694
  %v696 = vand.u32 %v695, 4294901760
  %v697 = vsub.f32 %v695, %v696
  %v698 = vand.u32 %v697, 4294901760
  %699 = vmatpush1.msra.mxu0 %v698
  %700 = vmatprep.subr.mxu0 0.0
  %v701 = vand.u32 %v380, 4294901760
  %v702 = vsub.f32 %v380, %v701
  %v703 = vand.u32 %v702, 4294901760
  %v704 = vsub.f32 %v702, %v703
  %v705 = vand.u32 %v704, 4294901760
  %706 = vmatpush1.msra.mxu0 %v705
  %707 = vmatprep.subr.mxu0 0.0
  %v708 = vand.u32 %v381, 4294901760
  %v709 = vsub.f32 %v381, %v708
  %v710 = vand.u32 %v709, 4294901760
  %v711 = vsub.f32 %v709, %v710
  %v712 = vand.u32 %v711, 4294901760
  %713 = vmatpush1.msra.mxu0 %v712
  %714 = vmatprep.subr.mxu0 0.0
  %v715 = vand.u32 %v382, 4294901760
  %v716 = vsub.f32 %v382, %v715
  %v717 = vand.u32 %v716, 4294901760
  %v718 = vsub.f32 %v716, %v717
  %v719 = vand.u32 %v718, 4294901760
  %720 = vmatpush1.msra.mxu0 %v719
  %721 = vmatprep.subr.mxu0 0.0
  %v722 = vand.u32 %v383, 4294901760
  %v723 = vsub.f32 %v383, %v722
  %v724 = vand.u32 %v723, 4294901760
  %v725 = vsub.f32 %v723, %v724
  %v726 = vand.u32 %v725, 4294901760
  %727 = vmatpush1.msra.mxu0 %v726
  %728 = vmatprep.subr.mxu0 0.0
  %v729 = vand.u32 %v384, 4294901760
  %v730 = vsub.f32 %v384, %v729
  %v731 = vand.u32 %v730, 4294901760
  %v732 = vsub.f32 %v730, %v731
  %v733 = vand.u32 %v732, 4294901760
  %734 = vmatpush1.msra.mxu0 %v733
  %735 = vmatprep.subr.mxu0 0.0
  %v736 = vand.u32 %v385, 4294901760
  %v737 = vsub.f32 %v385, %v736
  %v738 = vand.u32 %v737, 4294901760
  %v739 = vsub.f32 %v737, %v738
  %v740 = vand.u32 %v739, 4294901760
  %741 = vmatpush1.msra.mxu0 %v740
  %742 = vmatprep.subr.mxu0 0.0
  %v743 = vand.u32 %v386, 4294901760
  %v744 = vsub.f32 %v386, %v743
  %v745 = vand.u32 %v744, 4294901760
  %v746 = vsub.f32 %v744, %v745
  %v747 = vand.u32 %v746, 4294901760
  %748 = vmatpush1.msra.mxu0 %v747
  %749 = vmatprep.subr.mxu0 0.0
  %v750 = vand.u32 %v387, 4294901760
  %v751 = vsub.f32 %v387, %v750
  %v752 = vand.u32 %v751, 4294901760
  %v753 = vsub.f32 %v751, %v752
  %v754 = vand.u32 %v753, 4294901760
  %755 = vmatpush1.msra.mxu0 %v754
  %756 = vmatprep.subr.mxu0 0.0
  %v757 = vand.u32 %v388, 4294901760
  %v758 = vsub.f32 %v388, %v757
  %v759 = vand.u32 %v758, 4294901760
  %v760 = vsub.f32 %v758, %v759
  %v761 = vand.u32 %v760, 4294901760
  %762 = vmatpush1.msra.mxu0 %v761
  %763 = vmatprep.subr.mxu0 0.0
  %v764 = vand.u32 %v389, 4294901760
  %v765 = vsub.f32 %v389, %v764
  %v766 = vand.u32 %v765, 4294901760
  %v767 = vsub.f32 %v765, %v766
  %v768 = vand.u32 %v767, 4294901760
  %769 = vmatpush1.msra.mxu0 %v768
  %770 = vmatprep.subr.mxu0 0.0
  %v771 = vand.u32 %v390, 4294901760
  %v772 = vsub.f32 %v390, %v771
  %v773 = vand.u32 %v772, 4294901760
  %v774 = vsub.f32 %v772, %v773
  %v775 = vand.u32 %v774, 4294901760
  %776 = vmatpush1.msra.mxu0 %v775
  %777 = vmatprep.subr.mxu0 0.0
  %v778 = vand.u32 %v391, 4294901760
  %v779 = vsub.f32 %v391, %v778
  %v780 = vand.u32 %v779, 4294901760
  %v781 = vsub.f32 %v779, %v780
  %v782 = vand.u32 %v781, 4294901760
  %783 = vmatpush1.msra.mxu0 %v782
  %784 = vmatprep.subr.mxu0 0.0
  %v785 = vand.u32 %v392, 4294901760
  %v786 = vsub.f32 %v392, %v785
  %v787 = vand.u32 %v786, 4294901760
  %v788 = vsub.f32 %v786, %v787
  %v789 = vand.u32 %v788, 4294901760
  %790 = vmatpush1.msra.mxu0 %v789
  %791 = vmatprep.subr.mxu0 0.0
  %v792 = vand.u32 %v393, 4294901760
  %v793 = vsub.f32 %v393, %v792
  %v794 = vand.u32 %v793, 4294901760
  %v795 = vsub.f32 %v793, %v794
  %v796 = vand.u32 %v795, 4294901760
  %797 = vmatpush1.msra.mxu0 %v796
  %798 = vmatprep.subr.mxu0 0.0
  %v799 = vand.u32 %v394, 4294901760
  %v800 = vsub.f32 %v394, %v799
  %v801 = vand.u32 %v800, 4294901760
  %v802 = vsub.f32 %v800, %v801
  %v803 = vand.u32 %v802, 4294901760
  %804 = vmatpush1.msra.mxu0 %v803
  %805 = vmatprep.subr.mxu0 0.0
  %v806 = vand.u32 %v395, 4294901760
  %v807 = vsub.f32 %v395, %v806
  %v808 = vand.u32 %v807, 4294901760
  %v809 = vsub.f32 %v807, %v808
  %v810 = vand.u32 %v809, 4294901760
  %811 = vmatpush1.msra.mxu0 %v810
  %812 = vmatprep.subr.mxu0 0.0
  %v813 = vand.u32 %v396, 4294901760
  %v814 = vsub.f32 %v396, %v813
  %v815 = vand.u32 %v814, 4294901760
  %v816 = vsub.f32 %v814, %v815
  %v817 = vand.u32 %v816, 4294901760
  %818 = vmatpush1.msra.mxu0 %v817
  %819 = vmatprep.subr.mxu0 0.0
  %v820 = vand.u32 %v397, 4294901760
  %v821 = vsub.f32 %v397, %v820
  %v822 = vand.u32 %v821, 4294901760
  %v823 = vsub.f32 %v821, %v822
  %v824 = vand.u32 %v823, 4294901760
  %825 = vmatpush1.msra.mxu0 %v824
  %826 = vmatprep.subr.mxu0 0.0
  %v827 = vand.u32 %v398, 4294901760
  %v828 = vsub.f32 %v398, %v827
  %v829 = vand.u32 %v828, 4294901760
  %v830 = vsub.f32 %v828, %v829
  %v831 = vand.u32 %v830, 4294901760
  %832 = vmatpush1.msra.mxu0 %v831
  %833 = vmatprep.subr.mxu0 0.0
  %v834 = vand.u32 %v399, 4294901760
  %v835 = vsub.f32 %v399, %v834
  %v836 = vand.u32 %v835, 4294901760
  %v837 = vsub.f32 %v835, %v836
  %v838 = vand.u32 %v837, 4294901760
  %839 = vmatpush1.msra.mxu0 %v838
  %840 = vmatprep.subr.mxu0 0.0
  %v841 = vand.u32 %v400, 4294901760
  %v842 = vsub.f32 %v400, %v841
  %v843 = vand.u32 %v842, 4294901760
  %v844 = vsub.f32 %v842, %v843
  %v845 = vand.u32 %v844, 4294901760
  %846 = vmatpush1.msra.mxu0 %v845
  %847 = vmatprep.subr.mxu0 0.0
  %v848 = vand.u32 %v401, 4294901760
  %v849 = vsub.f32 %v401, %v848
  %v850 = vand.u32 %v849, 4294901760
  %v851 = vsub.f32 %v849, %v850
  %v852 = vand.u32 %v851, 4294901760
  %853 = vmatpush1.msra.mxu0 %v852
  %854 = vmatprep.subr.mxu0 0.0
  %v855 = vand.u32 %v402, 4294901760
  %v856 = vsub.f32 %v402, %v855
  %v857 = vand.u32 %v856, 4294901760
  %v858 = vsub.f32 %v856, %v857
  %v859 = vand.u32 %v858, 4294901760
  %860 = vmatpush1.msra.mxu0 %v859
  %861 = vmatprep.subr.mxu0 0.0
  %v862 = vand.u32 %v403, 4294901760
  %v863 = vsub.f32 %v403, %v862
  %v864 = vand.u32 %v863, 4294901760
  %v865 = vsub.f32 %v863, %v864
  %v866 = vand.u32 %v865, 4294901760
  %867 = vmatpush1.msra.mxu0 %v866
  %868 = vmatprep.subr.mxu0 0.0
  %v869 = vand.u32 %v404, 4294901760
  %v870 = vsub.f32 %v404, %v869
  %v871 = vand.u32 %v870, 4294901760
  %v872 = vsub.f32 %v870, %v871
  %v873 = vand.u32 %v872, 4294901760
  %874 = vmatpush1.msra.mxu0 %v873
  %875 = vmatprep.subr.mxu0 0.0
  %v876 = vand.u32 %v405, 4294901760
  %v877 = vsub.f32 %v405, %v876
  %v878 = vand.u32 %v877, 4294901760
  %v879 = vsub.f32 %v877, %v878
  %v880 = vand.u32 %v879, 4294901760
  %881 = vmatpush1.msra.mxu0 %v880
  %882 = vmatprep.subr.mxu0 0.0
  %v883 = vand.u32 %v406, 4294901760
  %v884 = vsub.f32 %v406, %v883
  %v885 = vand.u32 %v884, 4294901760
  %v886 = vsub.f32 %v884, %v885
  %v887 = vand.u32 %v886, 4294901760
  %888 = vmatpush1.msra.mxu0 %v887
  %889 = vmatprep.subr.mxu0 0.0
  %v890 = vand.u32 %v407, 4294901760
  %v891 = vsub.f32 %v407, %v890
  %v892 = vand.u32 %v891, 4294901760
  %v893 = vsub.f32 %v891, %v892
  %v894 = vand.u32 %v893, 4294901760
  %895 = vmatpush1.msra.mxu0 %v894
  %896 = vmatprep.subr.mxu0 0.0
  %v897 = vand.u32 %v408, 4294901760
  %v898 = vsub.f32 %v408, %v897
  %v899 = vand.u32 %v898, 4294901760
  %v900 = vsub.f32 %v898, %v899
  %v901 = vand.u32 %v900, 4294901760
  %902 = vmatpush1.msra.mxu0 %v901
  %903 = vmatprep.subr.mxu0 0.0
  %v904 = vand.u32 %v409, 4294901760
  %v905 = vsub.f32 %v409, %v904
  %v906 = vand.u32 %v905, 4294901760
  %v907 = vsub.f32 %v905, %v906
  %v908 = vand.u32 %v907, 4294901760
  %909 = vmatpush1.msra.mxu0 %v908
  %910 = vmatprep.subr.mxu0 0.0
  %v911 = vand.u32 %v410, 4294901760
  %v912 = vsub.f32 %v410, %v911
  %v913 = vand.u32 %v912, 4294901760
  %v914 = vsub.f32 %v912, %v913
  %v915 = vand.u32 %v914, 4294901760
  %916 = vmatpush1.msra.mxu0 %v915
  %v917 = vand.u32 %v549, 4294901760
  %918 = vmatprep.mubr.f32.mxu0 %v917
  %v919 = vand.u32 %v548, 4294901760
  %920 = vmatmul.mubr.f32.gmra.mrb[0].mxu0 %v919
  %v921 = vpop.f32.mrb[0].mxu0
  %v922 = vadd.f32 %v675, %v921
  %v923 = vpop.f32.mrb[0].mxu0
  %v924 = vand.u32 %v558, 4294901760
  %925 = vmatprep.mubr.f32.mxu0 %v924
  %v926 = vand.u32 %v557, 4294901760
  %927 = vmatmul.mubr.f32.gmra.mrb[0].mxu0 %v926
  %v928 = vpop.f32.mrb[0].mxu0
  %v929 = vadd.f32 %v690, %v928
  %v930 = vpop.f32.mrb[0].mxu0
  %931 = vdwg.mxu0
  %932 = vmatprep.subr.mxu0 0.0
  %v933 = vand.u32 %v379, 4294901760
  %v934 = vsub.f32 %v379, %v933
  %935 = vmatpush1.msra.mxu0 %v934
  %936 = vmatprep.subr.mxu0 0.0
  %v937 = vand.u32 %v380, 4294901760
  %v938 = vsub.f32 %v380, %v937
  %939 = vmatpush1.msra.mxu0 %v938
  %940 = vmatprep.subr.mxu0 0.0
  %v941 = vand.u32 %v381, 4294901760
  %v942 = vsub.f32 %v381, %v941
  %943 = vmatpush1.msra.mxu0 %v942
  %944 = vmatprep.subr.mxu0 0.0
  %v945 = vand.u32 %v382, 4294901760
  %v946 = vsub.f32 %v382, %v945
  %947 = vmatpush1.msra.mxu0 %v946
  %948 = vmatprep.subr.mxu0 0.0
  %v949 = vand.u32 %v383, 4294901760
  %v950 = vsub.f32 %v383, %v949
  %951 = vmatpush1.msra.mxu0 %v950
  %952 = vmatprep.subr.mxu0 0.0
  %v953 = vand.u32 %v384, 4294901760
  %v954 = vsub.f32 %v384, %v953
  %955 = vmatpush1.msra.mxu0 %v954
  %956 = vmatprep.subr.mxu0 0.0
  %v957 = vand.u32 %v385, 4294901760
  %v958 = vsub.f32 %v385, %v957
  %959 = vmatpush1.msra.mxu0 %v958
  %960 = vmatprep.subr.mxu0 0.0
  %v961 = vand.u32 %v386, 4294901760
  %v962 = vsub.f32 %v386, %v961
  %963 = vmatpush1.msra.mxu0 %v962
  %964 = vmatprep.subr.mxu0 0.0
  %v965 = vand.u32 %v387, 4294901760
  %v966 = vsub.f32 %v387, %v965
  %967 = vmatpush1.msra.mxu0 %v966
  %968 = vmatprep.subr.mxu0 0.0
  %v969 = vand.u32 %v388, 4294901760
  %v970 = vsub.f32 %v388, %v969
  %971 = vmatpush1.msra.mxu0 %v970
  %972 = vmatprep.subr.mxu0 0.0
  %v973 = vand.u32 %v389, 4294901760
  %v974 = vsub.f32 %v389, %v973
  %975 = vmatpush1.msra.mxu0 %v974
  %976 = vmatprep.subr.mxu0 0.0
  %v977 = vand.u32 %v390, 4294901760
  %v978 = vsub.f32 %v390, %v977
  %979 = vmatpush1.msra.mxu0 %v978
  %980 = vmatprep.subr.mxu0 0.0
  %v981 = vand.u32 %v391, 4294901760
  %v982 = vsub.f32 %v391, %v981
  %983 = vmatpush1.msra.mxu0 %v982
  %984 = vmatprep.subr.mxu0 0.0
  %v985 = vand.u32 %v392, 4294901760
  %v986 = vsub.f32 %v392, %v985
  %987 = vmatpush1.msra.mxu0 %v986
  %988 = vmatprep.subr.mxu0 0.0
  %v989 = vand.u32 %v393, 4294901760
  %v990 = vsub.f32 %v393, %v989
  %991 = vmatpush1.msra.mxu0 %v990
  %992 = vmatprep.subr.mxu0 0.0
  %v993 = vand.u32 %v394, 4294901760
  %v994 = vsub.f32 %v394, %v993
  %995 = vmatpush1.msra.mxu0 %v994
  %996 = vmatprep.subr.mxu0 0.0
  %v997 = vand.u32 %v395, 4294901760
  %v998 = vsub.f32 %v395, %v997
  %999 = vmatpush1.msra.mxu0 %v998
  %1000 = vmatprep.subr.mxu0 0.0
  %v1001 = vand.u32 %v396, 4294901760
  %v1002 = vsub.f32 %v396, %v1001
  %1003 = vmatpush1.msra.mxu0 %v1002
  %1004 = vmatprep.subr.mxu0 0.0
  %v1005 = vand.u32 %v397, 4294901760
  %v1006 = vsub.f32 %v397, %v1005
  %1007 = vmatpush1.msra.mxu0 %v1006
  %1008 = vmatprep.subr.mxu0 0.0
  %v1009 = vand.u32 %v398, 4294901760
  %v1010 = vsub.f32 %v398, %v1009
  %1011 = vmatpush1.msra.mxu0 %v1010
  %1012 = vmatprep.subr.mxu0 0.0
  %v1013 = vand.u32 %v399, 4294901760
  %v1014 = vsub.f32 %v399, %v1013
  %1015 = vmatpush1.msra.mxu0 %v1014
  %1016 = vmatprep.subr.mxu0 0.0
  %v1017 = vand.u32 %v400, 4294901760
  %v1018 = vsub.f32 %v400, %v1017
  %1019 = vmatpush1.msra.mxu0 %v1018
  %1020 = vmatprep.subr.mxu0 0.0
  %v1021 = vand.u32 %v401, 4294901760
  %v1022 = vsub.f32 %v401, %v1021
  %1023 = vmatpush1.msra.mxu0 %v1022
  %1024 = vmatprep.subr.mxu0 0.0
  %v1025 = vand.u32 %v402, 4294901760
  %v1026 = vsub.f32 %v402, %v1025
  %1027 = vmatpush1.msra.mxu0 %v1026
  %1028 = vmatprep.subr.mxu0 0.0
  %v1029 = vand.u32 %v403, 4294901760
  %v1030 = vsub.f32 %v403, %v1029
  %1031 = vmatpush1.msra.mxu0 %v1030
  %1032 = vmatprep.subr.mxu0 0.0
  %v1033 = vand.u32 %v404, 4294901760
  %v1034 = vsub.f32 %v404, %v1033
  %1035 = vmatpush1.msra.mxu0 %v1034
  %1036 = vmatprep.subr.mxu0 0.0
  %v1037 = vand.u32 %v405, 4294901760
  %v1038 = vsub.f32 %v405, %v1037
  %1039 = vmatpush1.msra.mxu0 %v1038
  %1040 = vmatprep.subr.mxu0 0.0
  %v1041 = vand.u32 %v406, 4294901760
  %v1042 = vsub.f32 %v406, %v1041
  %1043 = vmatpush1.msra.mxu0 %v1042
  %1044 = vmatprep.subr.mxu0 0.0
  %v1045 = vand.u32 %v407, 4294901760
  %v1046 = vsub.f32 %v407, %v1045
  %1047 = vmatpush1.msra.mxu0 %v1046
  %1048 = vmatprep.subr.mxu0 0.0
  %v1049 = vand.u32 %v408, 4294901760
  %v1050 = vsub.f32 %v408, %v1049
  %1051 = vmatpush1.msra.mxu0 %v1050
  %1052 = vmatprep.subr.mxu0 0.0
  %v1053 = vand.u32 %v409, 4294901760
  %v1054 = vsub.f32 %v409, %v1053
  %1055 = vmatpush1.msra.mxu0 %v1054
  %1056 = vmatprep.subr.mxu0 0.0
  %v1057 = vand.u32 %v410, 4294901760
  %v1058 = vsub.f32 %v410, %v1057
  %1059 = vmatpush1.msra.mxu0 %v1058
  %v1060 = vand.u32 %v549, 4294901760
  %v1061 = vsub.f32 %v549, %v1060
  %1062 = vmatprep.mubr.f32.mxu0 %v1061
  %v1063 = vand.u32 %v548, 4294901760
  %v1064 = vsub.f32 %v548, %v1063
  %1065 = vmatmul.mubr.f32.gmra.mrb[0].mxu0 %v1064
  %v1066 = vpop.f32.mrb[0].mxu0
  %v1067 = vadd.f32 %v922, %v1066
  %v1068 = vpop.f32.mrb[0].mxu0
  %v1069 = vand.u32 %v558, 4294901760
  %v1070 = vsub.f32 %v558, %v1069
  %1071 = vmatprep.mubr.f32.mxu0 %v1070
  %v1072 = vand.u32 %v557, 4294901760
  %v1073 = vsub.f32 %v557, %v1072
  %1074 = vmatmul.mubr.f32.gmra.mrb[0].mxu0 %v1073
  %v1075 = vpop.f32.mrb[0].mxu0
  %v1076 = vadd.f32 %v929, %v1075
  %v1077 = vpop.f32.mrb[0].mxu0
  %1078 = vdwg.mxu0
  %1079 = vmatprep.subr.mxu0 0.0
  %v1080 = vand.u32 %v379, 4294901760
  %1081 = vmatpush1.msra.mxu0 %v1080
  %1082 = vmatprep.subr.mxu0 0.0
  %v1083 = vand.u32 %v380, 4294901760
  %1084 = vmatpush1.msra.mxu0 %v1083
  %1085 = vmatprep.subr.mxu0 0.0
  %v1086 = vand.u32 %v381, 4294901760
  %1087 = vmatpush1.msra.mxu0 %v1086
  %1088 = vmatprep.subr.mxu0 0.0
  %v1089 = vand.u32 %v382, 4294901760
  %1090 = vmatpush1.msra.mxu0 %v1089
  %1091 = vmatprep.subr.mxu0 0.0
  %v1092 = vand.u32 %v383, 4294901760
  %1093 = vmatpush1.msra.mxu0 %v1092
  %1094 = vmatprep.subr.mxu0 0.0
  %v1095 = vand.u32 %v384, 4294901760
  %1096 = vmatpush1.msra.mxu0 %v1095
  %1097 = vmatprep.subr.mxu0 0.0
  %v1098 = vand.u32 %v385, 4294901760
  %1099 = vmatpush1.msra.mxu0 %v1098
  %1100 = vmatprep.subr.mxu0 0.0
  %v1101 = vand.u32 %v386, 4294901760
  %1102 = vmatpush1.msra.mxu0 %v1101
  %1103 = vmatprep.subr.mxu0 0.0
  %v1104 = vand.u32 %v387, 4294901760
  %1105 = vmatpush1.msra.mxu0 %v1104
  %1106 = vmatprep.subr.mxu0 0.0
  %v1107 = vand.u32 %v388, 4294901760
  %1108 = vmatpush1.msra.mxu0 %v1107
  %1109 = vmatprep.subr.mxu0 0.0
  %v1110 = vand.u32 %v389, 4294901760
  %1111 = vmatpush1.msra.mxu0 %v1110
  %1112 = vmatprep.subr.mxu0 0.0
  %v1113 = vand.u32 %v390, 4294901760
  %1114 = vmatpush1.msra.mxu0 %v1113
  %1115 = vmatprep.subr.mxu0 0.0
  %v1116 = vand.u32 %v391, 4294901760
  %1117 = vmatpush1.msra.mxu0 %v1116
  %1118 = vmatprep.subr.mxu0 0.0
  %v1119 = vand.u32 %v392, 4294901760
  %1120 = vmatpush1.msra.mxu0 %v1119
  %1121 = vmatprep.subr.mxu0 0.0
  %v1122 = vand.u32 %v393, 4294901760
  %1123 = vmatpush1.msra.mxu0 %v1122
  %1124 = vmatprep.subr.mxu0 0.0
  %v1125 = vand.u32 %v394, 4294901760
  %1126 = vmatpush1.msra.mxu0 %v1125
  %1127 = vmatprep.subr.mxu0 0.0
  %v1128 = vand.u32 %v395, 4294901760
  %1129 = vmatpush1.msra.mxu0 %v1128
  %1130 = vmatprep.subr.mxu0 0.0
  %v1131 = vand.u32 %v396, 4294901760
  %1132 = vmatpush1.msra.mxu0 %v1131
  %1133 = vmatprep.subr.mxu0 0.0
  %v1134 = vand.u32 %v397, 4294901760
  %1135 = vmatpush1.msra.mxu0 %v1134
  %1136 = vmatprep.subr.mxu0 0.0
  %v1137 = vand.u32 %v398, 4294901760
  %1138 = vmatpush1.msra.mxu0 %v1137
  %1139 = vmatprep.subr.mxu0 0.0
  %v1140 = vand.u32 %v399, 4294901760
  %1141 = vmatpush1.msra.mxu0 %v1140
  %1142 = vmatprep.subr.mxu0 0.0
  %v1143 = vand.u32 %v400, 4294901760
  %1144 = vmatpush1.msra.mxu0 %v1143
  %1145 = vmatprep.subr.mxu0 0.0
  %v1146 = vand.u32 %v401, 4294901760
  %1147 = vmatpush1.msra.mxu0 %v1146
  %1148 = vmatprep.subr.mxu0 0.0
  %v1149 = vand.u32 %v402, 4294901760
  %1150 = vmatpush1.msra.mxu0 %v1149
  %1151 = vmatprep.subr.mxu0 0.0
  %v1152 = vand.u32 %v403, 4294901760
  %1153 = vmatpush1.msra.mxu0 %v1152
  %1154 = vmatprep.subr.mxu0 0.0
  %v1155 = vand.u32 %v404, 4294901760
  %1156 = vmatpush1.msra.mxu0 %v1155
  %1157 = vmatprep.subr.mxu0 0.0
  %v1158 = vand.u32 %v405, 4294901760
  %1159 = vmatpush1.msra.mxu0 %v1158
  %1160 = vmatprep.subr.mxu0 0.0
  %v1161 = vand.u32 %v406, 4294901760
  %1162 = vmatpush1.msra.mxu0 %v1161
  %1163 = vmatprep.subr.mxu0 0.0
  %v1164 = vand.u32 %v407, 4294901760
  %1165 = vmatpush1.msra.mxu0 %v1164
  %1166 = vmatprep.subr.mxu0 0.0
  %v1167 = vand.u32 %v408, 4294901760
  %1168 = vmatpush1.msra.mxu0 %v1167
  %1169 = vmatprep.subr.mxu0 0.0
  %v1170 = vand.u32 %v409, 4294901760
  %1171 = vmatpush1.msra.mxu0 %v1170
  %1172 = vmatprep.subr.mxu0 0.0
  %v1173 = vand.u32 %v410, 4294901760
  %1174 = vmatpush1.msra.mxu0 %v1173
  %v1175 = vand.u32 %v549, 4294901760
  %v1176 = vsub.f32 %v549, %v1175
  %v1177 = vand.u32 %v1176, 4294901760
  %1178 = vmatprep.mubr.f32.mxu0 %v1177
  %v1179 = vand.u32 %v548, 4294901760
  %v1180 = vsub.f32 %v548, %v1179
  %v1181 = vand.u32 %v1180, 4294901760
  %1182 = vmatmul.mubr.f32.gmra.mrb[0].mxu0 %v1181
  %v1183 = vpop.f32.mrb[0].mxu0
  %v1184 = vadd.f32 %v1067, %v1183
  %v1185 = vpop.f32.mrb[0].mxu0
  %v1186 = vand.u32 %v558, 4294901760
  %v1187 = vsub.f32 %v558, %v1186
  %v1188 = vand.u32 %v1187, 4294901760
  %1189 = vmatprep.mubr.f32.mxu0 %v1188
  %v1190 = vand.u32 %v557, 4294901760
  %v1191 = vsub.f32 %v557, %v1190
  %v1192 = vand.u32 %v1191, 4294901760
  %1193 = vmatmul.mubr.f32.gmra.mrb[0].mxu0 %v1192
  %v1194 = vpop.f32.mrb[0].mxu0
  %v1195 = vadd.f32 %v1076, %v1194
  %v1196 = vpop.f32.mrb[0].mxu0
  %1197 = vdwg.mxu0
  %1198 = vmatprep.subr.mxu0 0.0
  %v1199 = vand.u32 %v379, 4294901760
  %v1200 = vsub.f32 %v379, %v1199
  %v1201 = vand.u32 %v1200, 4294901760
  %1202 = vmatpush1.msra.mxu0 %v1201
  %1203 = vmatprep.subr.mxu0 0.0
  %v1204 = vand.u32 %v380, 4294901760
  %v1205 = vsub.f32 %v380, %v1204
  %v1206 = vand.u32 %v1205, 4294901760
  %1207 = vmatpush1.msra.mxu0 %v1206
  %1208 = vmatprep.subr.mxu0 0.0
  %v1209 = vand.u32 %v381, 4294901760
  %v1210 = vsub.f32 %v381, %v1209
  %v1211 = vand.u32 %v1210, 4294901760
  %1212 = vmatpush1.msra.mxu0 %v1211
  %1213 = vmatprep.subr.mxu0 0.0
  %v1214 = vand.u32 %v382, 4294901760
  %v1215 = vsub.f32 %v382, %v1214
  %v1216 = vand.u32 %v1215, 4294901760
  %1217 = vmatpush1.msra.mxu0 %v1216
  %1218 = vmatprep.subr.mxu0 0.0
  %v1219 = vand.u32 %v383, 4294901760
  %v1220 = vsub.f32 %v383, %v1219
  %v1221 = vand.u32 %v1220, 4294901760
  %1222 = vmatpush1.msra.mxu0 %v1221
  %1223 = vmatprep.subr.mxu0 0.0
  %v1224 = vand.u32 %v384, 4294901760
  %v1225 = vsub.f32 %v384, %v1224
  %v1226 = vand.u32 %v1225, 4294901760
  %1227 = vmatpush1.msra.mxu0 %v1226
  %1228 = vmatprep.subr.mxu0 0.0
  %v1229 = vand.u32 %v385, 4294901760
  %v1230 = vsub.f32 %v385, %v1229
  %v1231 = vand.u32 %v1230, 4294901760
  %1232 = vmatpush1.msra.mxu0 %v1231
  %1233 = vmatprep.subr.mxu0 0.0
  %v1234 = vand.u32 %v386, 4294901760
  %v1235 = vsub.f32 %v386, %v1234
  %v1236 = vand.u32 %v1235, 4294901760
  %1237 = vmatpush1.msra.mxu0 %v1236
  %1238 = vmatprep.subr.mxu0 0.0
  %v1239 = vand.u32 %v387, 4294901760
  %v1240 = vsub.f32 %v387, %v1239
  %v1241 = vand.u32 %v1240, 4294901760
  %1242 = vmatpush1.msra.mxu0 %v1241
  %1243 = vmatprep.subr.mxu0 0.0
  %v1244 = vand.u32 %v388, 4294901760
  %v1245 = vsub.f32 %v388, %v1244
  %v1246 = vand.u32 %v1245, 4294901760
  %1247 = vmatpush1.msra.mxu0 %v1246
  %1248 = vmatprep.subr.mxu0 0.0
  %v1249 = vand.u32 %v389, 4294901760
  %v1250 = vsub.f32 %v389, %v1249
  %v1251 = vand.u32 %v1250, 4294901760
  %1252 = vmatpush1.msra.mxu0 %v1251
  %1253 = vmatprep.subr.mxu0 0.0
  %v1254 = vand.u32 %v390, 4294901760
  %v1255 = vsub.f32 %v390, %v1254
  %v1256 = vand.u32 %v1255, 4294901760
  %1257 = vmatpush1.msra.mxu0 %v1256
  %1258 = vmatprep.subr.mxu0 0.0
  %v1259 = vand.u32 %v391, 4294901760
  %v1260 = vsub.f32 %v391, %v1259
  %v1261 = vand.u32 %v1260, 4294901760
  %1262 = vmatpush1.msra.mxu0 %v1261
  %1263 = vmatprep.subr.mxu0 0.0
  %v1264 = vand.u32 %v392, 4294901760
  %v1265 = vsub.f32 %v392, %v1264
  %v1266 = vand.u32 %v1265, 4294901760
  %1267 = vmatpush1.msra.mxu0 %v1266
  %1268 = vmatprep.subr.mxu0 0.0
  %v1269 = vand.u32 %v393, 4294901760
  %v1270 = vsub.f32 %v393, %v1269
  %v1271 = vand.u32 %v1270, 4294901760
  %1272 = vmatpush1.msra.mxu0 %v1271
  %1273 = vmatprep.subr.mxu0 0.0
  %v1274 = vand.u32 %v394, 4294901760
  %v1275 = vsub.f32 %v394, %v1274
  %v1276 = vand.u32 %v1275, 4294901760
  %1277 = vmatpush1.msra.mxu0 %v1276
  %1278 = vmatprep.subr.mxu0 0.0
  %v1279 = vand.u32 %v395, 4294901760
  %v1280 = vsub.f32 %v395, %v1279
  %v1281 = vand.u32 %v1280, 4294901760
  %1282 = vmatpush1.msra.mxu0 %v1281
  %1283 = vmatprep.subr.mxu0 0.0
  %v1284 = vand.u32 %v396, 4294901760
  %v1285 = vsub.f32 %v396, %v1284
  %v1286 = vand.u32 %v1285, 4294901760
  %1287 = vmatpush1.msra.mxu0 %v1286
  %1288 = vmatprep.subr.mxu0 0.0
  %v1289 = vand.u32 %v397, 4294901760
  %v1290 = vsub.f32 %v397, %v1289
  %v1291 = vand.u32 %v1290, 4294901760
  %1292 = vmatpush1.msra.mxu0 %v1291
  %1293 = vmatprep.subr.mxu0 0.0
  %v1294 = vand.u32 %v398, 4294901760
  %v1295 = vsub.f32 %v398, %v1294
  %v1296 = vand.u32 %v1295, 4294901760
  %1297 = vmatpush1.msra.mxu0 %v1296
  %1298 = vmatprep.subr.mxu0 0.0
  %v1299 = vand.u32 %v399, 4294901760
  %v1300 = vsub.f32 %v399, %v1299
  %v1301 = vand.u32 %v1300, 4294901760
  %1302 = vmatpush1.msra.mxu0 %v1301
  %1303 = vmatprep.subr.mxu0 0.0
  %v1304 = vand.u32 %v400, 4294901760
  %v1305 = vsub.f32 %v400, %v1304
  %v1306 = vand.u32 %v1305, 4294901760
  %1307 = vmatpush1.msra.mxu0 %v1306
  %1308 = vmatprep.subr.mxu0 0.0
  %v1309 = vand.u32 %v401, 4294901760
  %v1310 = vsub.f32 %v401, %v1309
  %v1311 = vand.u32 %v1310, 4294901760
  %1312 = vmatpush1.msra.mxu0 %v1311
  %1313 = vmatprep.subr.mxu0 0.0
  %v1314 = vand.u32 %v402, 4294901760
  %v1315 = vsub.f32 %v402, %v1314
  %v1316 = vand.u32 %v1315, 4294901760
  %1317 = vmatpush1.msra.mxu0 %v1316
  %1318 = vmatprep.subr.mxu0 0.0
  %v1319 = vand.u32 %v403, 4294901760
  %v1320 = vsub.f32 %v403, %v1319
  %v1321 = vand.u32 %v1320, 4294901760
  %1322 = vmatpush1.msra.mxu0 %v1321
  %1323 = vmatprep.subr.mxu0 0.0
  %v1324 = vand.u32 %v404, 4294901760
  %v1325 = vsub.f32 %v404, %v1324
  %v1326 = vand.u32 %v1325, 4294901760
  %1327 = vmatpush1.msra.mxu0 %v1326
  %1328 = vmatprep.subr.mxu0 0.0
  %v1329 = vand.u32 %v405, 4294901760
  %v1330 = vsub.f32 %v405, %v1329
  %v1331 = vand.u32 %v1330, 4294901760
  %1332 = vmatpush1.msra.mxu0 %v1331
  %1333 = vmatprep.subr.mxu0 0.0
  %v1334 = vand.u32 %v406, 4294901760
  %v1335 = vsub.f32 %v406, %v1334
  %v1336 = vand.u32 %v1335, 4294901760
  %1337 = vmatpush1.msra.mxu0 %v1336
  %1338 = vmatprep.subr.mxu0 0.0
  %v1339 = vand.u32 %v407, 4294901760
  %v1340 = vsub.f32 %v407, %v1339
  %v1341 = vand.u32 %v1340, 4294901760
  %1342 = vmatpush1.msra.mxu0 %v1341
  %1343 = vmatprep.subr.mxu0 0.0
  %v1344 = vand.u32 %v408, 4294901760
  %v1345 = vsub.f32 %v408, %v1344
  %v1346 = vand.u32 %v1345, 4294901760
  %1347 = vmatpush1.msra.mxu0 %v1346
  %1348 = vmatprep.subr.mxu0 0.0
  %v1349 = vand.u32 %v409, 4294901760
  %v1350 = vsub.f32 %v409, %v1349
  %v1351 = vand.u32 %v1350, 4294901760
  %1352 = vmatpush1.msra.mxu0 %v1351
  %1353 = vmatprep.subr.mxu0 0.0
  %v1354 = vand.u32 %v410, 4294901760
  %v1355 = vsub.f32 %v410, %v1354
  %v1356 = vand.u32 %v1355, 4294901760
  %1357 = vmatpush1.msra.mxu0 %v1356
  %v1358 = vand.u32 %v549, 4294901760
  %1359 = vmatprep.mubr.f32.mxu0 %v1358
  %v1360 = vand.u32 %v548, 4294901760
  %1361 = vmatmul.mubr.f32.gmra.mrb[0].mxu0 %v1360
  %v1362 = vpop.f32.mrb[0].mxu0
  %v1363 = vadd.f32 %v1184, %v1362
  %v1364 = vpop.f32.mrb[0].mxu0
  %v1365 = vand.u32 %v558, 4294901760
  %1366 = vmatprep.mubr.f32.mxu0 %v1365
  %v1367 = vand.u32 %v557, 4294901760
  %1368 = vmatmul.mubr.f32.gmra.mrb[0].mxu0 %v1367
  %v1369 = vpop.f32.mrb[0].mxu0
  %v1370 = vadd.f32 %v1195, %v1369
  %v1371 = vpop.f32.mrb[0].mxu0
  %1372 = vdwg.mxu0
  %1373 = vmatprep.subr.mxu0 0.0
  %v1374 = vand.u32 %v379, 4294901760
  %1375 = vmatpush1.msra.mxu0 %v1374
  %1376 = vmatprep.subr.mxu0 0.0
  %v1377 = vand.u32 %v380, 4294901760
  %1378 = vmatpush1.msra.mxu0 %v1377
  %1379 = vmatprep.subr.mxu0 0.0
  %v1380 = vand.u32 %v381, 4294901760
  %1381 = vmatpush1.msra.mxu0 %v1380
  %1382 = vmatprep.subr.mxu0 0.0
  %v1383 = vand.u32 %v382, 4294901760
  %1384 = vmatpush1.msra.mxu0 %v1383
  %1385 = vmatprep.subr.mxu0 0.0
  %v1386 = vand.u32 %v383, 4294901760
  %1387 = vmatpush1.msra.mxu0 %v1386
  %1388 = vmatprep.subr.mxu0 0.0
  %v1389 = vand.u32 %v384, 4294901760
  %1390 = vmatpush1.msra.mxu0 %v1389
  %1391 = vmatprep.subr.mxu0 0.0
  %v1392 = vand.u32 %v385, 4294901760
  %1393 = vmatpush1.msra.mxu0 %v1392
  %1394 = vmatprep.subr.mxu0 0.0
  %v1395 = vand.u32 %v386, 4294901760
  %1396 = vmatpush1.msra.mxu0 %v1395
  %1397 = vmatprep.subr.mxu0 0.0
  %v1398 = vand.u32 %v387, 4294901760
  %1399 = vmatpush1.msra.mxu0 %v1398
  %1400 = vmatprep.subr.mxu0 0.0
  %v1401 = vand.u32 %v388, 4294901760
  %1402 = vmatpush1.msra.mxu0 %v1401
  %1403 = vmatprep.subr.mxu0 0.0
  %v1404 = vand.u32 %v389, 4294901760
  %1405 = vmatpush1.msra.mxu0 %v1404
  %1406 = vmatprep.subr.mxu0 0.0
  %v1407 = vand.u32 %v390, 4294901760
  %1408 = vmatpush1.msra.mxu0 %v1407
  %1409 = vmatprep.subr.mxu0 0.0
  %v1410 = vand.u32 %v391, 4294901760
  %1411 = vmatpush1.msra.mxu0 %v1410
  %1412 = vmatprep.subr.mxu0 0.0
  %v1413 = vand.u32 %v392, 4294901760
  %1414 = vmatpush1.msra.mxu0 %v1413
  %1415 = vmatprep.subr.mxu0 0.0
  %v1416 = vand.u32 %v393, 4294901760
  %1417 = vmatpush1.msra.mxu0 %v1416
  %1418 = vmatprep.subr.mxu0 0.0
  %v1419 = vand.u32 %v394, 4294901760
  %1420 = vmatpush1.msra.mxu0 %v1419
  %1421 = vmatprep.subr.mxu0 0.0
  %v1422 = vand.u32 %v395, 4294901760
  %1423 = vmatpush1.msra.mxu0 %v1422
  %1424 = vmatprep.subr.mxu0 0.0
  %v1425 = vand.u32 %v396, 4294901760
  %1426 = vmatpush1.msra.mxu0 %v1425
  %1427 = vmatprep.subr.mxu0 0.0
  %v1428 = vand.u32 %v397, 4294901760
  %1429 = vmatpush1.msra.mxu0 %v1428
  %1430 = vmatprep.subr.mxu0 0.0
  %v1431 = vand.u32 %v398, 4294901760
  %1432 = vmatpush1.msra.mxu0 %v1431
  %1433 = vmatprep.subr.mxu0 0.0
  %v1434 = vand.u32 %v399, 4294901760
  %1435 = vmatpush1.msra.mxu0 %v1434
  %1436 = vmatprep.subr.mxu0 0.0
  %v1437 = vand.u32 %v400, 4294901760
  %1438 = vmatpush1.msra.mxu0 %v1437
  %1439 = vmatprep.subr.mxu0 0.0
  %v1440 = vand.u32 %v401, 4294901760
  %1441 = vmatpush1.msra.mxu0 %v1440
  %1442 = vmatprep.subr.mxu0 0.0
  %v1443 = vand.u32 %v402, 4294901760
  %1444 = vmatpush1.msra.mxu0 %v1443
  %1445 = vmatprep.subr.mxu0 0.0
  %v1446 = vand.u32 %v403, 4294901760
  %1447 = vmatpush1.msra.mxu0 %v1446
  %1448 = vmatprep.subr.mxu0 0.0
  %v1449 = vand.u32 %v404, 4294901760
  %1450 = vmatpush1.msra.mxu0 %v1449
  %1451 = vmatprep.subr.mxu0 0.0
  %v1452 = vand.u32 %v405, 4294901760
  %1453 = vmatpush1.msra.mxu0 %v1452
  %1454 = vmatprep.subr.mxu0 0.0
  %v1455 = vand.u32 %v406, 4294901760
  %1456 = vmatpush1.msra.mxu0 %v1455
  %1457 = vmatprep.subr.mxu0 0.0
  %v1458 = vand.u32 %v407, 4294901760
  %1459 = vmatpush1.msra.mxu0 %v1458
  %1460 = vmatprep.subr.mxu0 0.0
  %v1461 = vand.u32 %v408, 4294901760
  %1462 = vmatpush1.msra.mxu0 %v1461
  %1463 = vmatprep.subr.mxu0 0.0
  %v1464 = vand.u32 %v409, 4294901760
  %1465 = vmatpush1.msra.mxu0 %v1464
  %1466 = vmatprep.subr.mxu0 0.0
  %v1467 = vand.u32 %v410, 4294901760
  %1468 = vmatpush1.msra.mxu0 %v1467
  %v1469 = vand.u32 %v549, 4294901760
  %1470 = vmatprep.mubr.f32.mxu0 %v1469
  %v1471 = vand.u32 %v548, 4294901760
  %1472 = vmatmul.mubr.f32.gmra.mrb[0].mxu0 %v1471
  %v1473 = vpop.f32.mrb[0].mxu0
  %v1474 = vadd.f32 %v1363, %v1473
  %v1475 = vpop.f32.mrb[0].mxu0
  %v1476 = vand.u32 %v558, 4294901760
  %1477 = vmatprep.mubr.f32.mxu0 %v1476
  %v1478 = vand.u32 %v557, 4294901760
  %1479 = vmatmul.mubr.f32.gmra.mrb[0].mxu0 %v1478
  %v1480 = vpop.f32.mrb[0].mxu0
  %v1481 = vadd.f32 %v1370, %v1480
  %v1482 = vpop.f32.mrb[0].mxu0
  %1483 = vdwg.mxu0
  %1484 = vmatprep.subr.mxu0 0.0
  %v1485 = vand.u32 %v411, 4294901760
  %1486 = vmatpush1.msra.mxu0 %v1485
  %1487 = vmatprep.subr.mxu0 0.0
  %v1488 = vand.u32 %v412, 4294901760
  %1489 = vmatpush1.msra.mxu0 %v1488
  %1490 = vmatprep.subr.mxu0 0.0
  %v1491 = vand.u32 %v413, 4294901760
  %1492 = vmatpush1.msra.mxu0 %v1491
  %1493 = vmatprep.subr.mxu0 0.0
  %v1494 = vand.u32 %v414, 4294901760
  %1495 = vmatpush1.msra.mxu0 %v1494
  %1496 = vmatprep.subr.mxu0 0.0
  %v1497 = vand.u32 %v415, 4294901760
  %1498 = vmatpush1.msra.mxu0 %v1497
  %1499 = vmatprep.subr.mxu0 0.0
  %v1500 = vand.u32 %v416, 4294901760
  %1501 = vmatpush1.msra.mxu0 %v1500
  %1502 = vmatprep.subr.mxu0 0.0
  %v1503 = vand.u32 %v417, 4294901760
  %1504 = vmatpush1.msra.mxu0 %v1503
  %1505 = vmatprep.subr.mxu0 0.0
  %v1506 = vand.u32 %v418, 4294901760
  %1507 = vmatpush1.msra.mxu0 %v1506
  %1508 = vmatprep.subr.mxu0 0.0
  %v1509 = vand.u32 %v419, 4294901760
  %1510 = vmatpush1.msra.mxu0 %v1509
  %1511 = vmatprep.subr.mxu0 0.0
  %v1512 = vand.u32 %v420, 4294901760
  %1513 = vmatpush1.msra.mxu0 %v1512
  %1514 = vmatprep.subr.mxu0 0.0
  %v1515 = vand.u32 %v421, 4294901760
  %1516 = vmatpush1.msra.mxu0 %v1515
  %1517 = vmatprep.subr.mxu0 0.0
  %v1518 = vand.u32 %v422, 4294901760
  %1519 = vmatpush1.msra.mxu0 %v1518
  %1520 = vmatprep.subr.mxu0 0.0
  %v1521 = vand.u32 %v423, 4294901760
  %1522 = vmatpush1.msra.mxu0 %v1521
  %1523 = vmatprep.subr.mxu0 0.0
  %v1524 = vand.u32 %v424, 4294901760
  %1525 = vmatpush1.msra.mxu0 %v1524
  %1526 = vmatprep.subr.mxu0 0.0
  %v1527 = vand.u32 %v425, 4294901760
  %1528 = vmatpush1.msra.mxu0 %v1527
  %1529 = vmatprep.subr.mxu0 0.0
  %v1530 = vand.u32 %v426, 4294901760
  %1531 = vmatpush1.msra.mxu0 %v1530
  %1532 = vmatprep.subr.mxu0 0.0
  %v1533 = vand.u32 %v427, 4294901760
  %1534 = vmatpush1.msra.mxu0 %v1533
  %1535 = vmatprep.subr.mxu0 0.0
  %v1536 = vand.u32 %v428, 4294901760
  %1537 = vmatpush1.msra.mxu0 %v1536
  %1538 = vmatprep.subr.mxu0 0.0
  %v1539 = vand.u32 %v429, 4294901760
  %1540 = vmatpush1.msra.mxu0 %v1539
  %1541 = vmatprep.subr.mxu0 0.0
  %v1542 = vand.u32 %v430, 4294901760
  %1543 = vmatpush1.msra.mxu0 %v1542
  %1544 = vmatprep.subr.mxu0 0.0
  %v1545 = vand.u32 %v431, 4294901760
  %1546 = vmatpush1.msra.mxu0 %v1545
  %1547 = vmatprep.subr.mxu0 0.0
  %v1548 = vand.u32 %v432, 4294901760
  %1549 = vmatpush1.msra.mxu0 %v1548
  %1550 = vmatprep.subr.mxu0 0.0
  %v1551 = vand.u32 %v433, 4294901760
  %1552 = vmatpush1.msra.mxu0 %v1551
  %1553 = vmatprep.subr.mxu0 0.0
  %v1554 = vand.u32 %v434, 4294901760
  %1555 = vmatpush1.msra.mxu0 %v1554
  %1556 = vmatprep.subr.mxu0 0.0
  %v1557 = vand.u32 %v435, 4294901760
  %1558 = vmatpush1.msra.mxu0 %v1557
  %1559 = vmatprep.subr.mxu0 0.0
  %v1560 = vand.u32 %v436, 4294901760
  %1561 = vmatpush1.msra.mxu0 %v1560
  %1562 = vmatprep.subr.mxu0 0.0
  %v1563 = vand.u32 %v437, 4294901760
  %1564 = vmatpush1.msra.mxu0 %v1563
  %1565 = vmatprep.subr.mxu0 0.0
  %v1566 = vand.u32 %v438, 4294901760
  %1567 = vmatpush1.msra.mxu0 %v1566
  %1568 = vmatprep.subr.mxu0 0.0
  %v1569 = vand.u32 %v439, 4294901760
  %1570 = vmatpush1.msra.mxu0 %v1569
  %1571 = vmatprep.subr.mxu0 0.0
  %v1572 = vand.u32 %v440, 4294901760
  %1573 = vmatpush1.msra.mxu0 %v1572
  %1574 = vmatprep.subr.mxu0 0.0
  %v1575 = vand.u32 %v441, 4294901760
  %1576 = vmatpush1.msra.mxu0 %v1575
  %1577 = vmatprep.subr.mxu0 0.0
  %v1578 = vand.u32 %v442, 4294901760
  %1579 = vmatpush1.msra.mxu0 %v1578
  %v1580 = vand.u32 %v551, 4294901760
  %v1581 = vsub.f32 %v551, %v1580
  %v1582 = vand.u32 %v1581, 4294901760
  %v1583 = vsub.f32 %v1581, %v1582
  %v1584 = vand.u32 %v1583, 4294901760
  %1585 = vmatprep.mubr.f32.mxu0 %v1584
  %v1586 = vand.u32 %v550, 4294901760
  %v1587 = vsub.f32 %v550, %v1586
  %v1588 = vand.u32 %v1587, 4294901760
  %v1589 = vsub.f32 %v1587, %v1588
  %v1590 = vand.u32 %v1589, 4294901760
  %1591 = vmatmul.mubr.f32.gmra.mrb[0].mxu0 %v1590
  %v1592 = vpop.f32.mrb[0].mxu0
  %v1593 = vadd.f32 %v1474, %v1592
  %v1594 = vpop.f32.mrb[0].mxu0
  %v1595 = vand.u32 %v560, 4294901760
  %v1596 = vsub.f32 %v560, %v1595
  %v1597 = vand.u32 %v1596, 4294901760
  %v1598 = vsub.f32 %v1596, %v1597
  %v1599 = vand.u32 %v1598, 4294901760
  %1600 = vmatprep.mubr.f32.mxu0 %v1599
  %v1601 = vand.u32 %v559, 4294901760
  %v1602 = vsub.f32 %v559, %v1601
  %v1603 = vand.u32 %v1602, 4294901760
  %v1604 = vsub.f32 %v1602, %v1603
  %v1605 = vand.u32 %v1604, 4294901760
  %1606 = vmatmul.mubr.f32.gmra.mrb[0].mxu0 %v1605
  %v1607 = vpop.f32.mrb[0].mxu0
  %v1608 = vadd.f32 %v1481, %v1607
  %v1609 = vpop.f32.mrb[0].mxu0
  %1610 = vdwg.mxu0
  %1611 = vmatprep.subr.mxu0 0.0
  %v1612 = vand.u32 %v411, 4294901760
  %v1613 = vsub.f32 %v411, %v1612
  %v1614 = vand.u32 %v1613, 4294901760
  %v1615 = vsub.f32 %v1613, %v1614
  %v1616 = vand.u32 %v1615, 4294901760
  %1617 = vmatpush1.msra.mxu0 %v1616
  %1618 = vmatprep.subr.mxu0 0.0
  %v1619 = vand.u32 %v412, 4294901760
  %v1620 = vsub.f32 %v412, %v1619
  %v1621 = vand.u32 %v1620, 4294901760
  %v1622 = vsub.f32 %v1620, %v1621
  %v1623 = vand.u32 %v1622, 4294901760
  %1624 = vmatpush1.msra.mxu0 %v1623
  %1625 = vmatprep.subr.mxu0 0.0
  %v1626 = vand.u32 %v413, 4294901760
  %v1627 = vsub.f32 %v413, %v1626
  %v1628 = vand.u32 %v1627, 4294901760
  %v1629 = vsub.f32 %v1627, %v1628
  %v1630 = vand.u32 %v1629, 4294901760
  %1631 = vmatpush1.msra.mxu0 %v1630
  %1632 = vmatprep.subr.mxu0 0.0
  %v1633 = vand.u32 %v414, 4294901760
  %v1634 = vsub.f32 %v414, %v1633
  %v1635 = vand.u32 %v1634, 4294901760
  %v1636 = vsub.f32 %v1634, %v1635
  %v1637 = vand.u32 %v1636, 4294901760
  %1638 = vmatpush1.msra.mxu0 %v1637
  %1639 = vmatprep.subr.mxu0 0.0
  %v1640 = vand.u32 %v415, 4294901760
  %v1641 = vsub.f32 %v415, %v1640
  %v1642 = vand.u32 %v1641, 4294901760
  %v1643 = vsub.f32 %v1641, %v1642
  %v1644 = vand.u32 %v1643, 4294901760
  %1645 = vmatpush1.msra.mxu0 %v1644
  %1646 = vmatprep.subr.mxu0 0.0
  %v1647 = vand.u32 %v416, 4294901760
  %v1648 = vsub.f32 %v416, %v1647
  %v1649 = vand.u32 %v1648, 4294901760
  %v1650 = vsub.f32 %v1648, %v1649
  %v1651 = vand.u32 %v1650, 4294901760
  %1652 = vmatpush1.msra.mxu0 %v1651
  %1653 = vmatprep.subr.mxu0 0.0
  %v1654 = vand.u32 %v417, 4294901760
  %v1655 = vsub.f32 %v417, %v1654
  %v1656 = vand.u32 %v1655, 4294901760
  %v1657 = vsub.f32 %v1655, %v1656
  %v1658 = vand.u32 %v1657, 4294901760
  %1659 = vmatpush1.msra.mxu0 %v1658
  %1660 = vmatprep.subr.mxu0 0.0
  %v1661 = vand.u32 %v418, 4294901760
  %v1662 = vsub.f32 %v418, %v1661
  %v1663 = vand.u32 %v1662, 4294901760
  %v1664 = vsub.f32 %v1662, %v1663
  %v1665 = vand.u32 %v1664, 4294901760
  %1666 = vmatpush1.msra.mxu0 %v1665
  %1667 = vmatprep.subr.mxu0 0.0
  %v1668 = vand.u32 %v419, 4294901760
  %v1669 = vsub.f32 %v419, %v1668
  %v1670 = vand.u32 %v1669, 4294901760
  %v1671 = vsub.f32 %v1669, %v1670
  %v1672 = vand.u32 %v1671, 4294901760
  %1673 = vmatpush1.msra.mxu0 %v1672
  %1674 = vmatprep.subr.mxu0 0.0
  %v1675 = vand.u32 %v420, 4294901760
  %v1676 = vsub.f32 %v420, %v1675
  %v1677 = vand.u32 %v1676, 4294901760
  %v1678 = vsub.f32 %v1676, %v1677
  %v1679 = vand.u32 %v1678, 4294901760
  %1680 = vmatpush1.msra.mxu0 %v1679
  %1681 = vmatprep.subr.mxu0 0.0
  %v1682 = vand.u32 %v421, 4294901760
  %v1683 = vsub.f32 %v421, %v1682
  %v1684 = vand.u32 %v1683, 4294901760
  %v1685 = vsub.f32 %v1683, %v1684
  %v1686 = vand.u32 %v1685, 4294901760
  %1687 = vmatpush1.msra.mxu0 %v1686
  %1688 = vmatprep.subr.mxu0 0.0
  %v1689 = vand.u32 %v422, 4294901760
  %v1690 = vsub.f32 %v422, %v1689
  %v1691 = vand.u32 %v1690, 4294901760
  %v1692 = vsub.f32 %v1690, %v1691
  %v1693 = vand.u32 %v1692, 4294901760
  %1694 = vmatpush1.msra.mxu0 %v1693
  %1695 = vmatprep.subr.mxu0 0.0
  %v1696 = vand.u32 %v423, 4294901760
  %v1697 = vsub.f32 %v423, %v1696
  %v1698 = vand.u32 %v1697, 4294901760
  %v1699 = vsub.f32 %v1697, %v1698
  %v1700 = vand.u32 %v1699, 4294901760
  %1701 = vmatpush1.msra.mxu0 %v1700
  %1702 = vmatprep.subr.mxu0 0.0
  %v1703 = vand.u32 %v424, 4294901760
  %v1704 = vsub.f32 %v424, %v1703
  %v1705 = vand.u32 %v1704, 4294901760
  %v1706 = vsub.f32 %v1704, %v1705
  %v1707 = vand.u32 %v1706, 4294901760
  %1708 = vmatpush1.msra.mxu0 %v1707
  %1709 = vmatprep.subr.mxu0 0.0
  %v1710 = vand.u32 %v425, 4294901760
  %v1711 = vsub.f32 %v425, %v1710
  %v1712 = vand.u32 %v1711, 4294901760
  %v1713 = vsub.f32 %v1711, %v1712
  %v1714 = vand.u32 %v1713, 4294901760
  %1715 = vmatpush1.msra.mxu0 %v1714
  %1716 = vmatprep.subr.mxu0 0.0
  %v1717 = vand.u32 %v426, 4294901760
  %v1718 = vsub.f32 %v426, %v1717
  %v1719 = vand.u32 %v1718, 4294901760
  %v1720 = vsub.f32 %v1718, %v1719
  %v1721 = vand.u32 %v1720, 4294901760
  %1722 = vmatpush1.msra.mxu0 %v1721
  %1723 = vmatprep.subr.mxu0 0.0
  %v1724 = vand.u32 %v427, 4294901760
  %v1725 = vsub.f32 %v427, %v1724
  %v1726 = vand.u32 %v1725, 4294901760
  %v1727 = vsub.f32 %v1725, %v1726
  %v1728 = vand.u32 %v1727, 4294901760
  %1729 = vmatpush1.msra.mxu0 %v1728
  %1730 = vmatprep.subr.mxu0 0.0
  %v1731 = vand.u32 %v428, 4294901760
  %v1732 = vsub.f32 %v428, %v1731
  %v1733 = vand.u32 %v1732, 4294901760
  %v1734 = vsub.f32 %v1732, %v1733
  %v1735 = vand.u32 %v1734, 4294901760
  %1736 = vmatpush1.msra.mxu0 %v1735
  %1737 = vmatprep.subr.mxu0 0.0
  %v1738 = vand.u32 %v429, 4294901760
  %v1739 = vsub.f32 %v429, %v1738
  %v1740 = vand.u32 %v1739, 4294901760
  %v1741 = vsub.f32 %v1739, %v1740
  %v1742 = vand.u32 %v1741, 4294901760
  %1743 = vmatpush1.msra.mxu0 %v1742
  %1744 = vmatprep.subr.mxu0 0.0
  %v1745 = vand.u32 %v430, 4294901760
  %v1746 = vsub.f32 %v430, %v1745
  %v1747 = vand.u32 %v1746, 4294901760
  %v1748 = vsub.f32 %v1746, %v1747
  %v1749 = vand.u32 %v1748, 4294901760
  %1750 = vmatpush1.msra.mxu0 %v1749
  %1751 = vmatprep.subr.mxu0 0.0
  %v1752 = vand.u32 %v431, 4294901760
  %v1753 = vsub.f32 %v431, %v1752
  %v1754 = vand.u32 %v1753, 4294901760
  %v1755 = vsub.f32 %v1753, %v1754
  %v1756 = vand.u32 %v1755, 4294901760
  %1757 = vmatpush1.msra.mxu0 %v1756
  %1758 = vmatprep.subr.mxu0 0.0
  %v1759 = vand.u32 %v432, 4294901760
  %v1760 = vsub.f32 %v432, %v1759
  %v1761 = vand.u32 %v1760, 4294901760
  %v1762 = vsub.f32 %v1760, %v1761
  %v1763 = vand.u32 %v1762, 4294901760
  %1764 = vmatpush1.msra.mxu0 %v1763
  %1765 = vmatprep.subr.mxu0 0.0
  %v1766 = vand.u32 %v433, 4294901760
  %v1767 = vsub.f32 %v433, %v1766
  %v1768 = vand.u32 %v1767, 4294901760
  %v1769 = vsub.f32 %v1767, %v1768
  %v1770 = vand.u32 %v1769, 4294901760
  %1771 = vmatpush1.msra.mxu0 %v1770
  %1772 = vmatprep.subr.mxu0 0.0
  %v1773 = vand.u32 %v434, 4294901760
  %v1774 = vsub.f32 %v434, %v1773
  %v1775 = vand.u32 %v1774, 4294901760
  %v1776 = vsub.f32 %v1774, %v1775
  %v1777 = vand.u32 %v1776, 4294901760
  %1778 = vmatpush1.msra.mxu0 %v1777
  %1779 = vmatprep.subr.mxu0 0.0
  %v1780 = vand.u32 %v435, 4294901760
  %v1781 = vsub.f32 %v435, %v1780
  %v1782 = vand.u32 %v1781, 4294901760
  %v1783 = vsub.f32 %v1781, %v1782
  %v1784 = vand.u32 %v1783, 4294901760
  %1785 = vmatpush1.msra.mxu0 %v1784
  %1786 = vmatprep.subr.mxu0 0.0
  %v1787 = vand.u32 %v436, 4294901760
  %v1788 = vsub.f32 %v436, %v1787
  %v1789 = vand.u32 %v1788, 4294901760
  %v1790 = vsub.f32 %v1788, %v1789
  %v1791 = vand.u32 %v1790, 4294901760
  %1792 = vmatpush1.msra.mxu0 %v1791
  %1793 = vmatprep.subr.mxu0 0.0
  %v1794 = vand.u32 %v437, 4294901760
  %v1795 = vsub.f32 %v437, %v1794
  %v1796 = vand.u32 %v1795, 4294901760
  %v1797 = vsub.f32 %v1795, %v1796
  %v1798 = vand.u32 %v1797, 4294901760
  %1799 = vmatpush1.msra.mxu0 %v1798
  %1800 = vmatprep.subr.mxu0 0.0
  %v1801 = vand.u32 %v438, 4294901760
  %v1802 = vsub.f32 %v438, %v1801
  %v1803 = vand.u32 %v1802, 4294901760
  %v1804 = vsub.f32 %v1802, %v1803
  %v1805 = vand.u32 %v1804, 4294901760
  %1806 = vmatpush1.msra.mxu0 %v1805
  %1807 = vmatprep.subr.mxu0 0.0
  %v1808 = vand.u32 %v439, 4294901760
  %v1809 = vsub.f32 %v439, %v1808
  %v1810 = vand.u32 %v1809, 4294901760
  %v1811 = vsub.f32 %v1809, %v1810
  %v1812 = vand.u32 %v1811, 4294901760
  %1813 = vmatpush1.msra.mxu0 %v1812
  %1814 = vmatprep.subr.mxu0 0.0
  %v1815 = vand.u32 %v440, 4294901760
  %v1816 = vsub.f32 %v440, %v1815
  %v1817 = vand.u32 %v1816, 4294901760
  %v1818 = vsub.f32 %v1816, %v1817
  %v1819 = vand.u32 %v1818, 4294901760
  %1820 = vmatpush1.msra.mxu0 %v1819
  %1821 = vmatprep.subr.mxu0 0.0
  %v1822 = vand.u32 %v441, 4294901760
  %v1823 = vsub.f32 %v441, %v1822
  %v1824 = vand.u32 %v1823, 4294901760
  %v1825 = vsub.f32 %v1823, %v1824
  %v1826 = vand.u32 %v1825, 4294901760
  %1827 = vmatpush1.msra.mxu0 %v1826
  %1828 = vmatprep.subr.mxu0 0.0
  %v1829 = vand.u32 %v442, 4294901760
  %v1830 = vsub.f32 %v442, %v1829
  %v1831 = vand.u32 %v1830, 4294901760
  %v1832 = vsub.f32 %v1830, %v1831
  %v1833 = vand.u32 %v1832, 4294901760
  %1834 = vmatpush1.msra.mxu0 %v1833
  %v1835 = vand.u32 %v551, 4294901760
  %1836 = vmatprep.mubr.f32.mxu0 %v1835
  %v1837 = vand.u32 %v550, 4294901760
  %1838 = vmatmul.mubr.f32.gmra.mrb[0].mxu0 %v1837
  %v1839 = vpop.f32.mrb[0].mxu0
  %v1840 = vadd.f32 %v1593, %v1839
  %v1841 = vpop.f32.mrb[0].mxu0
  %v1842 = vand.u32 %v560, 4294901760
  %1843 = vmatprep.mubr.f32.mxu0 %v1842
  %v1844 = vand.u32 %v559, 4294901760
  %1845 = vmatmul.mubr.f32.gmra.mrb[0].mxu0 %v1844
  %v1846 = vpop.f32.mrb[0].mxu0
  %v1847 = vadd.f32 %v1608, %v1846
  %v1848 = vpop.f32.mrb[0].mxu0
  %1849 = vdwg.mxu0
  %1850 = vmatprep.subr.mxu0 0.0
  %v1851 = vand.u32 %v411, 4294901760
  %v1852 = vsub.f32 %v411, %v1851
  %1853 = vmatpush1.msra.mxu0 %v1852
  %1854 = vmatprep.subr.mxu0 0.0
  %v1855 = vand.u32 %v412, 4294901760
  %v1856 = vsub.f32 %v412, %v1855
  %1857 = vmatpush1.msra.mxu0 %v1856
  %1858 = vmatprep.subr.mxu0 0.0
  %v1859 = vand.u32 %v413, 4294901760
  %v1860 = vsub.f32 %v413, %v1859
  %1861 = vmatpush1.msra.mxu0 %v1860
  %1862 = vmatprep.subr.mxu0 0.0
  %v1863 = vand.u32 %v414, 4294901760
  %v1864 = vsub.f32 %v414, %v1863
  %1865 = vmatpush1.msra.mxu0 %v1864
  %1866 = vmatprep.subr.mxu0 0.0
  %v1867 = vand.u32 %v415, 4294901760
  %v1868 = vsub.f32 %v415, %v1867
  %1869 = vmatpush1.msra.mxu0 %v1868
  %1870 = vmatprep.subr.mxu0 0.0
  %v1871 = vand.u32 %v416, 4294901760
  %v1872 = vsub.f32 %v416, %v1871
  %1873 = vmatpush1.msra.mxu0 %v1872
  %1874 = vmatprep.subr.mxu0 0.0
  %v1875 = vand.u32 %v417, 4294901760
  %v1876 = vsub.f32 %v417, %v1875
  %1877 = vmatpush1.msra.mxu0 %v1876
  %1878 = vmatprep.subr.mxu0 0.0
  %v1879 = vand.u32 %v418, 4294901760
  %v1880 = vsub.f32 %v418, %v1879
  %1881 = vmatpush1.msra.mxu0 %v1880
  %1882 = vmatprep.subr.mxu0 0.0
  %v1883 = vand.u32 %v419, 4294901760
  %v1884 = vsub.f32 %v419, %v1883
  %1885 = vmatpush1.msra.mxu0 %v1884
  %1886 = vmatprep.subr.mxu0 0.0
  %v1887 = vand.u32 %v420, 4294901760
  %v1888 = vsub.f32 %v420, %v1887
  %1889 = vmatpush1.msra.mxu0 %v1888
  %1890 = vmatprep.subr.mxu0 0.0
  %v1891 = vand.u32 %v421, 4294901760
  %v1892 = vsub.f32 %v421, %v1891
  %1893 = vmatpush1.msra.mxu0 %v1892
  %1894 = vmatprep.subr.mxu0 0.0
  %v1895 = vand.u32 %v422, 4294901760
  %v1896 = vsub.f32 %v422, %v1895
  %1897 = vmatpush1.msra.mxu0 %v1896
  %1898 = vmatprep.subr.mxu0 0.0
  %v1899 = vand.u32 %v423, 4294901760
  %v1900 = vsub.f32 %v423, %v1899
  %1901 = vmatpush1.msra.mxu0 %v1900
  %1902 = vmatprep.subr.mxu0 0.0
  %v1903 = vand.u32 %v424, 4294901760
  %v1904 = vsub.f32 %v424, %v1903
  %1905 = vmatpush1.msra.mxu0 %v1904
  %1906 = vmatprep.subr.mxu0 0.0
  %v1907 = vand.u32 %v425, 4294901760
  %v1908 = vsub.f32 %v425, %v1907
  %1909 = vmatpush1.msra.mxu0 %v1908
  %1910 = vmatprep.subr.mxu0 0.0
  %v1911 = vand.u32 %v426, 4294901760
  %v1912 = vsub.f32 %v426, %v1911
  %1913 = vmatpush1.msra.mxu0 %v1912
  %1914 = vmatprep.subr.mxu0 0.0
  %v1915 = vand.u32 %v427, 4294901760
  %v1916 = vsub.f32 %v427, %v1915
  %1917 = vmatpush1.msra.mxu0 %v1916
  %1918 = vmatprep.subr.mxu0 0.0
  %v1919 = vand.u32 %v428, 4294901760
  %v1920 = vsub.f32 %v428, %v1919
  %1921 = vmatpush1.msra.mxu0 %v1920
  %1922 = vmatprep.subr.mxu0 0.0
  %v1923 = vand.u32 %v429, 4294901760
  %v1924 = vsub.f32 %v429, %v1923
  %1925 = vmatpush1.msra.mxu0 %v1924
  %1926 = vmatprep.subr.mxu0 0.0
  %v1927 = vand.u32 %v430, 4294901760
  %v1928 = vsub.f32 %v430, %v1927
  %1929 = vmatpush1.msra.mxu0 %v1928
  %1930 = vmatprep.subr.mxu0 0.0
  %v1931 = vand.u32 %v431, 4294901760
  %v1932 = vsub.f32 %v431, %v1931
  %1933 = vmatpush1.msra.mxu0 %v1932
  %1934 = vmatprep.subr.mxu0 0.0
  %v1935 = vand.u32 %v432, 4294901760
  %v1936 = vsub.f32 %v432, %v1935
  %1937 = vmatpush1.msra.mxu0 %v1936
  %1938 = vmatprep.subr.mxu0 0.0
  %v1939 = vand.u32 %v433, 4294901760
  %v1940 = vsub.f32 %v433, %v1939
  %1941 = vmatpush1.msra.mxu0 %v1940
  %1942 = vmatprep.subr.mxu0 0.0
  %v1943 = vand.u32 %v434, 4294901760
  %v1944 = vsub.f32 %v434, %v1943
  %1945 = vmatpush1.msra.mxu0 %v1944
  %1946 = vmatprep.subr.mxu0 0.0
  %v1947 = vand.u32 %v435, 4294901760
  %v1948 = vsub.f32 %v435, %v1947
  %1949 = vmatpush1.msra.mxu0 %v1948
  %1950 = vmatprep.subr.mxu0 0.0
  %v1951 = vand.u32 %v436, 4294901760
  %v1952 = vsub.f32 %v436, %v1951
  %1953 = vmatpush1.msra.mxu0 %v1952
  %1954 = vmatprep.subr.mxu0 0.0
  %v1955 = vand.u32 %v437, 4294901760
  %v1956 = vsub.f32 %v437, %v1955
  %1957 = vmatpush1.msra.mxu0 %v1956
  %1958 = vmatprep.subr.mxu0 0.0
  %v1959 = vand.u32 %v438, 4294901760
  %v1960 = vsub.f32 %v438, %v1959
  %1961 = vmatpush1.msra.mxu0 %v1960
  %1962 = vmatprep.subr.mxu0 0.0
  %v1963 = vand.u32 %v439, 4294901760
  %v1964 = vsub.f32 %v439, %v1963
  %1965 = vmatpush1.msra.mxu0 %v1964
  %1966 = vmatprep.subr.mxu0 0.0
  %v1967 = vand.u32 %v440, 4294901760
  %v1968 = vsub.f32 %v440, %v1967
  %1969 = vmatpush1.msra.mxu0 %v1968
  %1970 = vmatprep.subr.mxu0 0.0
  %v1971 = vand.u32 %v441, 4294901760
  %v1972 = vsub.f32 %v441, %v1971
  %1973 = vmatpush1.msra.mxu0 %v1972
  %1974 = vmatprep.subr.mxu0 0.0
  %v1975 = vand.u32 %v442, 4294901760
  %v1976 = vsub.f32 %v442, %v1975
  %1977 = vmatpush1.msra.mxu0 %v1976
  %v1978 = vand.u32 %v551, 4294901760
  %v1979 = vsub.f32 %v551, %v1978
  %1980 = vmatprep.mubr.f32.mxu0 %v1979
  %v1981 = vand.u32 %v550, 4294901760
  %v1982 = vsub.f32 %v550, %v1981
  %1983 = vmatmul.mubr.f32.gmra.mrb[0].mxu0 %v1982
  %v1984 = vpop.f32.mrb[0].mxu0
  %v1985 = vadd.f32 %v1840, %v1984
  %v1986 = vpop.f32.mrb[0].mxu0
  %v1987 = vand.u32 %v560, 4294901760
  %v1988 = vsub.f32 %v560, %v1987
  %1989 = vmatprep.mubr.f32.mxu0 %v1988
  %v1990 = vand.u32 %v559, 4294901760
  %v1991 = vsub.f32 %v559, %v1990
  %1992 = vmatmul.mubr.f32.gmra.mrb[0].mxu0 %v1991
  %v1993 = vpop.f32.mrb[0].mxu0
  %v1994 = vadd.f32 %v1847, %v1993
  %v1995 = vpop.f32.mrb[0].mxu0
  %1996 = vdwg.mxu0
  %1997 = vmatprep.subr.mxu0 0.0
  %v1998 = vand.u32 %v411, 4294901760
  %1999 = vmatpush1.msra.mxu0 %v1998
  %2000 = vmatprep.subr.mxu0 0.0
  %v2001 = vand.u32 %v412, 4294901760
  %2002 = vmatpush1.msra.mxu0 %v2001
  %2003 = vmatprep.subr.mxu0 0.0
  %v2004 = vand.u32 %v413, 4294901760
  %2005 = vmatpush1.msra.mxu0 %v2004
  %2006 = vmatprep.subr.mxu0 0.0
  %v2007 = vand.u32 %v414, 4294901760
  %2008 = vmatpush1.msra.mxu0 %v2007
  %2009 = vmatprep.subr.mxu0 0.0
  %v2010 = vand.u32 %v415, 4294901760
  %2011 = vmatpush1.msra.mxu0 %v2010
  %2012 = vmatprep.subr.mxu0 0.0
  %v2013 = vand.u32 %v416, 4294901760
  %2014 = vmatpush1.msra.mxu0 %v2013
  %2015 = vmatprep.subr.mxu0 0.0
  %v2016 = vand.u32 %v417, 4294901760
  %2017 = vmatpush1.msra.mxu0 %v2016
  %2018 = vmatprep.subr.mxu0 0.0
  %v2019 = vand.u32 %v418, 4294901760
  %2020 = vmatpush1.msra.mxu0 %v2019
  %2021 = vmatprep.subr.mxu0 0.0
  %v2022 = vand.u32 %v419, 4294901760
  %2023 = vmatpush1.msra.mxu0 %v2022
  %2024 = vmatprep.subr.mxu0 0.0
  %v2025 = vand.u32 %v420, 4294901760
  %2026 = vmatpush1.msra.mxu0 %v2025
  %2027 = vmatprep.subr.mxu0 0.0
  %v2028 = vand.u32 %v421, 4294901760
  %2029 = vmatpush1.msra.mxu0 %v2028
  %2030 = vmatprep.subr.mxu0 0.0
  %v2031 = vand.u32 %v422, 4294901760
  %2032 = vmatpush1.msra.mxu0 %v2031
  %2033 = vmatprep.subr.mxu0 0.0
  %v2034 = vand.u32 %v423, 4294901760
  %2035 = vmatpush1.msra.mxu0 %v2034
  %2036 = vmatprep.subr.mxu0 0.0
  %v2037 = vand.u32 %v424, 4294901760
  %2038 = vmatpush1.msra.mxu0 %v2037
  %2039 = vmatprep.subr.mxu0 0.0
  %v2040 = vand.u32 %v425, 4294901760
  %2041 = vmatpush1.msra.mxu0 %v2040
  %2042 = vmatprep.subr.mxu0 0.0
  %v2043 = vand.u32 %v426, 4294901760
  %2044 = vmatpush1.msra.mxu0 %v2043
  %2045 = vmatprep.subr.mxu0 0.0
  %v2046 = vand.u32 %v427, 4294901760
  %2047 = vmatpush1.msra.mxu0 %v2046
  %2048 = vmatprep.subr.mxu0 0.0
  %v2049 = vand.u32 %v428, 4294901760
  %2050 = vmatpush1.msra.mxu0 %v2049
  %2051 = vmatprep.subr.mxu0 0.0
  %v2052 = vand.u32 %v429, 4294901760
  %2053 = vmatpush1.msra.mxu0 %v2052
  %2054 = vmatprep.subr.mxu0 0.0
  %v2055 = vand.u32 %v430, 4294901760
  %2056 = vmatpush1.msra.mxu0 %v2055
  %2057 = vmatprep.subr.mxu0 0.0
  %v2058 = vand.u32 %v431, 4294901760
  %2059 = vmatpush1.msra.mxu0 %v2058
  %2060 = vmatprep.subr.mxu0 0.0
  %v2061 = vand.u32 %v432, 4294901760
  %2062 = vmatpush1.msra.mxu0 %v2061
  %2063 = vmatprep.subr.mxu0 0.0
  %v2064 = vand.u32 %v433, 4294901760
  %2065 = vmatpush1.msra.mxu0 %v2064
  %2066 = vmatprep.subr.mxu0 0.0
  %v2067 = vand.u32 %v434, 4294901760
  %2068 = vmatpush1.msra.mxu0 %v2067
  %2069 = vmatprep.subr.mxu0 0.0
  %v2070 = vand.u32 %v435, 4294901760
  %2071 = vmatpush1.msra.mxu0 %v2070
  %2072 = vmatprep.subr.mxu0 0.0
  %v2073 = vand.u32 %v436, 4294901760
  %2074 = vmatpush1.msra.mxu0 %v2073
  %2075 = vmatprep.subr.mxu0 0.0
  %v2076 = vand.u32 %v437, 4294901760
  %2077 = vmatpush1.msra.mxu0 %v2076
  %2078 = vmatprep.subr.mxu0 0.0
  %v2079 = vand.u32 %v438, 4294901760
  %2080 = vmatpush1.msra.mxu0 %v2079
  %2081 = vmatprep.subr.mxu0 0.0
  %v2082 = vand.u32 %v439, 4294901760
  %2083 = vmatpush1.msra.mxu0 %v2082
  %2084 = vmatprep.subr.mxu0 0.0
  %v2085 = vand.u32 %v440, 4294901760
  %2086 = vmatpush1.msra.mxu0 %v2085
  %2087 = vmatprep.subr.mxu0 0.0
  %v2088 = vand.u32 %v441, 4294901760
  %2089 = vmatpush1.msra.mxu0 %v2088
  %2090 = vmatprep.subr.mxu0 0.0
  %v2091 = vand.u32 %v442, 4294901760
  %2092 = vmatpush1.msra.mxu0 %v2091
  %v2093 = vand.u32 %v551, 4294901760
  %v2094 = vsub.f32 %v551, %v2093
  %v2095 = vand.u32 %v2094, 4294901760
  %2096 = vmatprep.mubr.f32.mxu0 %v2095
  %v2097 = vand.u32 %v550, 4294901760
  %v2098 = vsub.f32 %v550, %v2097
  %v2099 = vand.u32 %v2098, 4294901760
  %2100 = vmatmul.mubr.f32.gmra.mrb[0].mxu0 %v2099
  %v2101 = vpop.f32.mrb[0].mxu0
  %v2102 = vadd.f32 %v1985, %v2101
  %v2103 = vpop.f32.mrb[0].mxu0
  %v2104 = vand.u32 %v560, 4294901760
  %v2105 = vsub.f32 %v560, %v2104
  %v2106 = vand.u32 %v2105, 4294901760
  %2107 = vmatprep.mubr.f32.mxu0 %v2106
  %v2108 = vand.u32 %v559, 4294901760
  %v2109 = vsub.f32 %v559, %v2108
  %v2110 = vand.u32 %v2109, 4294901760
  %2111 = vmatmul.mubr.f32.gmra.mrb[0].mxu0 %v2110
  %v2112 = vpop.f32.mrb[0].mxu0
  %v2113 = vadd.f32 %v1994, %v2112
  %v2114 = vpop.f32.mrb[0].mxu0
  %2115 = vdwg.mxu0
  %2116 = vmatprep.subr.mxu0 0.0
  %v2117 = vand.u32 %v411, 4294901760
  %v2118 = vsub.f32 %v411, %v2117
  %v2119 = vand.u32 %v2118, 4294901760
  %2120 = vmatpush1.msra.mxu0 %v2119
  %2121 = vmatprep.subr.mxu0 0.0
  %v2122 = vand.u32 %v412, 4294901760
  %v2123 = vsub.f32 %v412, %v2122
  %v2124 = vand.u32 %v2123, 4294901760
  %2125 = vmatpush1.msra.mxu0 %v2124
  %2126 = vmatprep.subr.mxu0 0.0
  %v2127 = vand.u32 %v413, 4294901760
  %v2128 = vsub.f32 %v413, %v2127
  %v2129 = vand.u32 %v2128, 4294901760
  %2130 = vmatpush1.msra.mxu0 %v2129
  %2131 = vmatprep.subr.mxu0 0.0
  %v2132 = vand.u32 %v414, 4294901760
  %v2133 = vsub.f32 %v414, %v2132
  %v2134 = vand.u32 %v2133, 4294901760
  %2135 = vmatpush1.msra.mxu0 %v2134
  %2136 = vmatprep.subr.mxu0 0.0
  %v2137 = vand.u32 %v415, 4294901760
  %v2138 = vsub.f32 %v415, %v2137
  %v2139 = vand.u32 %v2138, 4294901760
  %2140 = vmatpush1.msra.mxu0 %v2139
  %2141 = vmatprep.subr.mxu0 0.0
  %v2142 = vand.u32 %v416, 4294901760
  %v2143 = vsub.f32 %v416, %v2142
  %v2144 = vand.u32 %v2143, 4294901760
  %2145 = vmatpush1.msra.mxu0 %v2144
  %2146 = vmatprep.subr.mxu0 0.0
  %v2147 = vand.u32 %v417, 4294901760
  %v2148 = vsub.f32 %v417, %v2147
  %v2149 = vand.u32 %v2148, 4294901760
  %2150 = vmatpush1.msra.mxu0 %v2149
  %2151 = vmatprep.subr.mxu0 0.0
  %v2152 = vand.u32 %v418, 4294901760
  %v2153 = vsub.f32 %v418, %v2152
  %v2154 = vand.u32 %v2153, 4294901760
  %2155 = vmatpush1.msra.mxu0 %v2154
  %2156 = vmatprep.subr.mxu0 0.0
  %v2157 = vand.u32 %v419, 4294901760
  %v2158 = vsub.f32 %v419, %v2157
  %v2159 = vand.u32 %v2158, 4294901760
  %2160 = vmatpush1.msra.mxu0 %v2159
  %2161 = vmatprep.subr.mxu0 0.0
  %v2162 = vand.u32 %v420, 4294901760
  %v2163 = vsub.f32 %v420, %v2162
  %v2164 = vand.u32 %v2163, 4294901760
  %2165 = vmatpush1.msra.mxu0 %v2164
  %2166 = vmatprep.subr.mxu0 0.0
  %v2167 = vand.u32 %v421, 4294901760
  %v2168 = vsub.f32 %v421, %v2167
  %v2169 = vand.u32 %v2168, 4294901760
  %2170 = vmatpush1.msra.mxu0 %v2169
  %2171 = vmatprep.subr.mxu0 0.0
  %v2172 = vand.u32 %v422, 4294901760
  %v2173 = vsub.f32 %v422, %v2172
  %v2174 = vand.u32 %v2173, 4294901760
  %2175 = vmatpush1.msra.mxu0 %v2174
  %2176 = vmatprep.subr.mxu0 0.0
  %v2177 = vand.u32 %v423, 4294901760
  %v2178 = vsub.f32 %v423, %v2177
  %v2179 = vand.u32 %v2178, 4294901760
  %2180 = vmatpush1.msra.mxu0 %v2179
  %2181 = vmatprep.subr.mxu0 0.0
  %v2182 = vand.u32 %v424, 4294901760
  %v2183 = vsub.f32 %v424, %v2182
  %v2184 = vand.u32 %v2183, 4294901760
  %2185 = vmatpush1.msra.mxu0 %v2184
  %2186 = vmatprep.subr.mxu0 0.0
  %v2187 = vand.u32 %v425, 4294901760
  %v2188 = vsub.f32 %v425, %v2187
  %v2189 = vand.u32 %v2188, 4294901760
  %2190 = vmatpush1.msra.mxu0 %v2189
  %2191 = vmatprep.subr.mxu0 0.0
  %v2192 = vand.u32 %v426, 4294901760
  %v2193 = vsub.f32 %v426, %v2192
  %v2194 = vand.u32 %v2193, 4294901760
  %2195 = vmatpush1.msra.mxu0 %v2194
  %2196 = vmatprep.subr.mxu0 0.0
  %v2197 = vand.u32 %v427, 4294901760
  %v2198 = vsub.f32 %v427, %v2197
  %v2199 = vand.u32 %v2198, 4294901760
  %2200 = vmatpush1.msra.mxu0 %v2199
  %2201 = vmatprep.subr.mxu0 0.0
  %v2202 = vand.u32 %v428, 4294901760
  %v2203 = vsub.f32 %v428, %v2202
  %v2204 = vand.u32 %v2203, 4294901760
  %2205 = vmatpush1.msra.mxu0 %v2204
  %2206 = vmatprep.subr.mxu0 0.0
  %v2207 = vand.u32 %v429, 4294901760
  %v2208 = vsub.f32 %v429, %v2207
  %v2209 = vand.u32 %v2208, 4294901760
  %2210 = vmatpush1.msra.mxu0 %v2209
  %2211 = vmatprep.subr.mxu0 0.0
  %v2212 = vand.u32 %v430, 4294901760
  %v2213 = vsub.f32 %v430, %v2212
  %v2214 = vand.u32 %v2213, 4294901760
  %2215 = vmatpush1.msra.mxu0 %v2214
  %2216 = vmatprep.subr.mxu0 0.0
  %v2217 = vand.u32 %v431, 4294901760
  %v2218 = vsub.f32 %v431, %v2217
  %v2219 = vand.u32 %v2218, 4294901760
  %2220 = vmatpush1.msra.mxu0 %v2219
  %2221 = vmatprep.subr.mxu0 0.0
  %v2222 = vand.u32 %v432, 4294901760
  %v2223 = vsub.f32 %v432, %v2222
  %v2224 = vand.u32 %v2223, 4294901760
  %2225 = vmatpush1.msra.mxu0 %v2224
  %2226 = vmatprep.subr.mxu0 0.0
  %v2227 = vand.u32 %v433, 4294901760
  %v2228 = vsub.f32 %v433, %v2227
  %v2229 = vand.u32 %v2228, 4294901760
  %2230 = vmatpush1.msra.mxu0 %v2229
  %2231 = vmatprep.subr.mxu0 0.0
  %v2232 = vand.u32 %v434, 4294901760
  %v2233 = vsub.f32 %v434, %v2232
  %v2234 = vand.u32 %v2233, 4294901760
  %2235 = vmatpush1.msra.mxu0 %v2234
  %2236 = vmatprep.subr.mxu0 0.0
  %v2237 = vand.u32 %v435, 4294901760
  %v2238 = vsub.f32 %v435, %v2237
  %v2239 = vand.u32 %v2238, 4294901760
  %2240 = vmatpush1.msra.mxu0 %v2239
  %2241 = vmatprep.subr.mxu0 0.0
  %v2242 = vand.u32 %v436, 4294901760
  %v2243 = vsub.f32 %v436, %v2242
  %v2244 = vand.u32 %v2243, 4294901760
  %2245 = vmatpush1.msra.mxu0 %v2244
  %2246 = vmatprep.subr.mxu0 0.0
  %v2247 = vand.u32 %v437, 4294901760
  %v2248 = vsub.f32 %v437, %v2247
  %v2249 = vand.u32 %v2248, 4294901760
  %2250 = vmatpush1.msra.mxu0 %v2249
  %2251 = vmatprep.subr.mxu0 0.0
  %v2252 = vand.u32 %v438, 4294901760
  %v2253 = vsub.f32 %v438, %v2252
  %v2254 = vand.u32 %v2253, 4294901760
  %2255 = vmatpush1.msra.mxu0 %v2254
  %2256 = vmatprep.subr.mxu0 0.0
  %v2257 = vand.u32 %v439, 4294901760
  %v2258 = vsub.f32 %v439, %v2257
  %v2259 = vand.u32 %v2258, 4294901760
  %2260 = vmatpush1.msra.mxu0 %v2259
  %2261 = vmatprep.subr.mxu0 0.0
  %v2262 = vand.u32 %v440, 4294901760
  %v2263 = vsub.f32 %v440, %v2262
  %v2264 = vand.u32 %v2263, 4294901760
  %2265 = vmatpush1.msra.mxu0 %v2264
  %2266 = vmatprep.subr.mxu0 0.0
  %v2267 = vand.u32 %v441, 4294901760
  %v2268 = vsub.f32 %v441, %v2267
  %v2269 = vand.u32 %v2268, 4294901760
  %2270 = vmatpush1.msra.mxu0 %v2269
  %2271 = vmatprep.subr.mxu0 0.0
  %v2272 = vand.u32 %v442, 4294901760
  %v2273 = vsub.f32 %v442, %v2272
  %v2274 = vand.u32 %v2273, 4294901760
  %2275 = vmatpush1.msra.mxu0 %v2274
  %v2276 = vand.u32 %v551, 4294901760
  %2277 = vmatprep.mubr.f32.mxu0 %v2276
  %v2278 = vand.u32 %v550, 4294901760
  %2279 = vmatmul.mubr.f32.gmra.mrb[0].mxu0 %v2278
  %v2280 = vpop.f32.mrb[0].mxu0
  %v2281 = vadd.f32 %v2102, %v2280
  %v2282 = vpop.f32.mrb[0].mxu0
  %v2283 = vand.u32 %v560, 4294901760
  %2284 = vmatprep.mubr.f32.mxu0 %v2283
  %v2285 = vand.u32 %v559, 4294901760
  %2286 = vmatmul.mubr.f32.gmra.mrb[0].mxu0 %v2285
  %v2287 = vpop.f32.mrb[0].mxu0
  %v2288 = vadd.f32 %v2113, %v2287
  %v2289 = vpop.f32.mrb[0].mxu0
  %2290 = vdwg.mxu0
  %2291 = vmatprep.subr.mxu0 0.0
  %v2292 = vand.u32 %v411, 4294901760
  %2293 = vmatpush1.msra.mxu0 %v2292
  %2294 = vmatprep.subr.mxu0 0.0
  %v2295 = vand.u32 %v412, 4294901760
  %2296 = vmatpush1.msra.mxu0 %v2295
  %2297 = vmatprep.subr.mxu0 0.0
  %v2298 = vand.u32 %v413, 4294901760
  %2299 = vmatpush1.msra.mxu0 %v2298
  %2300 = vmatprep.subr.mxu0 0.0
  %v2301 = vand.u32 %v414, 4294901760
  %2302 = vmatpush1.msra.mxu0 %v2301
  %2303 = vmatprep.subr.mxu0 0.0
  %v2304 = vand.u32 %v415, 4294901760
  %2305 = vmatpush1.msra.mxu0 %v2304
  %2306 = vmatprep.subr.mxu0 0.0
  %v2307 = vand.u32 %v416, 4294901760
  %2308 = vmatpush1.msra.mxu0 %v2307
  %2309 = vmatprep.subr.mxu0 0.0
  %v2310 = vand.u32 %v417, 4294901760
  %2311 = vmatpush1.msra.mxu0 %v2310
  %2312 = vmatprep.subr.mxu0 0.0
  %v2313 = vand.u32 %v418, 4294901760
  %2314 = vmatpush1.msra.mxu0 %v2313
  %2315 = vmatprep.subr.mxu0 0.0
  %v2316 = vand.u32 %v419, 4294901760
  %2317 = vmatpush1.msra.mxu0 %v2316
  %2318 = vmatprep.subr.mxu0 0.0
  %v2319 = vand.u32 %v420, 4294901760
  %2320 = vmatpush1.msra.mxu0 %v2319
  %2321 = vmatprep.subr.mxu0 0.0
  %v2322 = vand.u32 %v421, 4294901760
  %2323 = vmatpush1.msra.mxu0 %v2322
  %2324 = vmatprep.subr.mxu0 0.0
  %v2325 = vand.u32 %v422, 4294901760
  %2326 = vmatpush1.msra.mxu0 %v2325
  %2327 = vmatprep.subr.mxu0 0.0
  %v2328 = vand.u32 %v423, 4294901760
  %2329 = vmatpush1.msra.mxu0 %v2328
  %2330 = vmatprep.subr.mxu0 0.0
  %v2331 = vand.u32 %v424, 4294901760
  %2332 = vmatpush1.msra.mxu0 %v2331
  %2333 = vmatprep.subr.mxu0 0.0
  %v2334 = vand.u32 %v425, 4294901760
  %2335 = vmatpush1.msra.mxu0 %v2334
  %2336 = vmatprep.subr.mxu0 0.0
  %v2337 = vand.u32 %v426, 4294901760
  %2338 = vmatpush1.msra.mxu0 %v2337
  %2339 = vmatprep.subr.mxu0 0.0
  %v2340 = vand.u32 %v427, 4294901760
  %2341 = vmatpush1.msra.mxu0 %v2340
  %2342 = vmatprep.subr.mxu0 0.0
  %v2343 = vand.u32 %v428, 4294901760
  %2344 = vmatpush1.msra.mxu0 %v2343
  %2345 = vmatprep.subr.mxu0 0.0
  %v2346 = vand.u32 %v429, 4294901760
  %2347 = vmatpush1.msra.mxu0 %v2346
  %2348 = vmatprep.subr.mxu0 0.0
  %v2349 = vand.u32 %v430, 4294901760
  %2350 = vmatpush1.msra.mxu0 %v2349
  %2351 = vmatprep.subr.mxu0 0.0
  %v2352 = vand.u32 %v431, 4294901760
  %2353 = vmatpush1.msra.mxu0 %v2352
  %2354 = vmatprep.subr.mxu0 0.0
  %v2355 = vand.u32 %v432, 4294901760
  %2356 = vmatpush1.msra.mxu0 %v2355
  %2357 = vmatprep.subr.mxu0 0.0
  %v2358 = vand.u32 %v433, 4294901760
  %2359 = vmatpush1.msra.mxu0 %v2358
  %2360 = vmatprep.subr.mxu0 0.0
  %v2361 = vand.u32 %v434, 4294901760
  %2362 = vmatpush1.msra.mxu0 %v2361
  %2363 = vmatprep.subr.mxu0 0.0
  %v2364 = vand.u32 %v435, 4294901760
  %2365 = vmatpush1.msra.mxu0 %v2364
  %2366 = vmatprep.subr.mxu0 0.0
  %v2367 = vand.u32 %v436, 4294901760
  %2368 = vmatpush1.msra.mxu0 %v2367
  %2369 = vmatprep.subr.mxu0 0.0
  %v2370 = vand.u32 %v437, 4294901760
  %2371 = vmatpush1.msra.mxu0 %v2370
  %2372 = vmatprep.subr.mxu0 0.0
  %v2373 = vand.u32 %v438, 4294901760
  %2374 = vmatpush1.msra.mxu0 %v2373
  %2375 = vmatprep.subr.mxu0 0.0
  %v2376 = vand.u32 %v439, 4294901760
  %2377 = vmatpush1.msra.mxu0 %v2376
  %2378 = vmatprep.subr.mxu0 0.0
  %v2379 = vand.u32 %v440, 4294901760
  %2380 = vmatpush1.msra.mxu0 %v2379
  %2381 = vmatprep.subr.mxu0 0.0
  %v2382 = vand.u32 %v441, 4294901760
  %2383 = vmatpush1.msra.mxu0 %v2382
  %2384 = vmatprep.subr.mxu0 0.0
  %v2385 = vand.u32 %v442, 4294901760
  %2386 = vmatpush1.msra.mxu0 %v2385
  %v2387 = vand.u32 %v551, 4294901760
  %2388 = vmatprep.mubr.f32.mxu0 %v2387
  %v2389 = vand.u32 %v550, 4294901760
  %2390 = vmatmul.mubr.f32.gmra.mrb[0].mxu0 %v2389
  %v2391 = vpop.f32.mrb[0].mxu0
  %v2392 = vadd.f32 %v2281, %v2391
  %v2393 = vpop.f32.mrb[0].mxu0
  %v2394 = vand.u32 %v560, 4294901760
  %2395 = vmatprep.mubr.f32.mxu0 %v2394
  %v2396 = vand.u32 %v559, 4294901760
  %2397 = vmatmul.mubr.f32.gmra.mrb[0].mxu0 %v2396
  %v2398 = vpop.f32.mrb[0].mxu0
  %v2399 = vadd.f32 %v2288, %v2398
  %v2400 = vpop.f32.mrb[0].mxu0
  %2401 = vdwg.mxu0
  %2402 = vmatprep.subr.mxu0 0.0
  %v2403 = vand.u32 %v443, 4294901760
  %2404 = vmatpush1.msra.mxu0 %v2403
  %2405 = vmatprep.subr.mxu0 0.0
  %v2406 = vand.u32 %v444, 4294901760
  %2407 = vmatpush1.msra.mxu0 %v2406
  %2408 = vmatprep.subr.mxu0 0.0
  %v2409 = vand.u32 %v445, 4294901760
  %2410 = vmatpush1.msra.mxu0 %v2409
  %2411 = vmatprep.subr.mxu0 0.0
  %v2412 = vand.u32 %v446, 4294901760
  %2413 = vmatpush1.msra.mxu0 %v2412
  %2414 = vmatprep.subr.mxu0 0.0
  %v2415 = vand.u32 %v447, 4294901760
  %2416 = vmatpush1.msra.mxu0 %v2415
  %2417 = vmatprep.subr.mxu0 0.0
  %v2418 = vand.u32 %v448, 4294901760
  %2419 = vmatpush1.msra.mxu0 %v2418
  %2420 = vmatprep.subr.mxu0 0.0
  %v2421 = vand.u32 %v449, 4294901760
  %2422 = vmatpush1.msra.mxu0 %v2421
  %2423 = vmatprep.subr.mxu0 0.0
  %v2424 = vand.u32 %v450, 4294901760
  %2425 = vmatpush1.msra.mxu0 %v2424
  %2426 = vmatprep.subr.mxu0 0.0
  %v2427 = vand.u32 %v451, 4294901760
  %2428 = vmatpush1.msra.mxu0 %v2427
  %2429 = vmatprep.subr.mxu0 0.0
  %v2430 = vand.u32 %v452, 4294901760
  %2431 = vmatpush1.msra.mxu0 %v2430
  %2432 = vmatprep.subr.mxu0 0.0
  %v2433 = vand.u32 %v453, 4294901760
  %2434 = vmatpush1.msra.mxu0 %v2433
  %2435 = vmatprep.subr.mxu0 0.0
  %v2436 = vand.u32 %v454, 4294901760
  %2437 = vmatpush1.msra.mxu0 %v2436
  %2438 = vmatprep.subr.mxu0 0.0
  %v2439 = vand.u32 %v455, 4294901760
  %2440 = vmatpush1.msra.mxu0 %v2439
  %2441 = vmatprep.subr.mxu0 0.0
  %v2442 = vand.u32 %v456, 4294901760
  %2443 = vmatpush1.msra.mxu0 %v2442
  %2444 = vmatprep.subr.mxu0 0.0
  %v2445 = vand.u32 %v457, 4294901760
  %2446 = vmatpush1.msra.mxu0 %v2445
  %2447 = vmatprep.subr.mxu0 0.0
  %v2448 = vand.u32 %v458, 4294901760
  %2449 = vmatpush1.msra.mxu0 %v2448
  %2450 = vmatprep.subr.mxu0 0.0
  %v2451 = vand.u32 %v459, 4294901760
  %2452 = vmatpush1.msra.mxu0 %v2451
  %2453 = vmatprep.subr.mxu0 0.0
  %v2454 = vand.u32 %v460, 4294901760
  %2455 = vmatpush1.msra.mxu0 %v2454
  %2456 = vmatprep.subr.mxu0 0.0
  %v2457 = vand.u32 %v461, 4294901760
  %2458 = vmatpush1.msra.mxu0 %v2457
  %2459 = vmatprep.subr.mxu0 0.0
  %v2460 = vand.u32 %v462, 4294901760
  %2461 = vmatpush1.msra.mxu0 %v2460
  %2462 = vmatprep.subr.mxu0 0.0
  %v2463 = vand.u32 %v463, 4294901760
  %2464 = vmatpush1.msra.mxu0 %v2463
  %2465 = vmatprep.subr.mxu0 0.0
  %v2466 = vand.u32 %v464, 4294901760
  %2467 = vmatpush1.msra.mxu0 %v2466
  %2468 = vmatprep.subr.mxu0 0.0
  %v2469 = vand.u32 %v465, 4294901760
  %2470 = vmatpush1.msra.mxu0 %v2469
  %2471 = vmatprep.subr.mxu0 0.0
  %v2472 = vand.u32 %v466, 4294901760
  %2473 = vmatpush1.msra.mxu0 %v2472
  %2474 = vmatprep.subr.mxu0 0.0
  %v2475 = vand.u32 %v467, 4294901760
  %2476 = vmatpush1.msra.mxu0 %v2475
  %2477 = vmatprep.subr.mxu0 0.0
  %v2478 = vand.u32 %v468, 4294901760
  %2479 = vmatpush1.msra.mxu0 %v2478
  %2480 = vmatprep.subr.mxu0 0.0
  %v2481 = vand.u32 %v469, 4294901760
  %2482 = vmatpush1.msra.mxu0 %v2481
  %2483 = vmatprep.subr.mxu0 0.0
  %v2484 = vand.u32 %v470, 4294901760
  %2485 = vmatpush1.msra.mxu0 %v2484
  %2486 = vmatprep.subr.mxu0 0.0
  %v2487 = vand.u32 %v471, 4294901760
  %2488 = vmatpush1.msra.mxu0 %v2487
  %2489 = vmatprep.subr.mxu0 0.0
  %v2490 = vand.u32 %v472, 4294901760
  %2491 = vmatpush1.msra.mxu0 %v2490
  %2492 = vmatprep.subr.mxu0 0.0
  %v2493 = vand.u32 %v473, 4294901760
  %2494 = vmatpush1.msra.mxu0 %v2493
  %2495 = vmatprep.subr.mxu0 0.0
  %v2496 = vand.u32 %v474, 4294901760
  %2497 = vmatpush1.msra.mxu0 %v2496
  %v2498 = vand.u32 %v553, 4294901760
  %v2499 = vsub.f32 %v553, %v2498
  %v2500 = vand.u32 %v2499, 4294901760
  %v2501 = vsub.f32 %v2499, %v2500
  %v2502 = vand.u32 %v2501, 4294901760
  %2503 = vmatprep.mubr.f32.mxu0 %v2502
  %v2504 = vand.u32 %v552, 4294901760
  %v2505 = vsub.f32 %v552, %v2504
  %v2506 = vand.u32 %v2505, 4294901760
  %v2507 = vsub.f32 %v2505, %v2506
  %v2508 = vand.u32 %v2507, 4294901760
  %2509 = vmatmul.mubr.f32.gmra.mrb[0].mxu0 %v2508
  %v2510 = vpop.f32.mrb[0].mxu0
  %v2511 = vadd.f32 %v2392, %v2510
  %v2512 = vpop.f32.mrb[0].mxu0
  %v2513 = vand.u32 %v562, 4294901760
  %v2514 = vsub.f32 %v562, %v2513
  %v2515 = vand.u32 %v2514, 4294901760
  %v2516 = vsub.f32 %v2514, %v2515
  %v2517 = vand.u32 %v2516, 4294901760
  %2518 = vmatprep.mubr.f32.mxu0 %v2517
  %v2519 = vand.u32 %v561, 4294901760
  %v2520 = vsub.f32 %v561, %v2519
  %v2521 = vand.u32 %v2520, 4294901760
  %v2522 = vsub.f32 %v2520, %v2521
  %v2523 = vand.u32 %v2522, 4294901760
  %2524 = vmatmul.mubr.f32.gmra.mrb[0].mxu0 %v2523
  %v2525 = vpop.f32.mrb[0].mxu0
  %v2526 = vadd.f32 %v2399, %v2525
  %v2527 = vpop.f32.mrb[0].mxu0
  %2528 = vdwg.mxu0
  %2529 = vmatprep.subr.mxu0 0.0
  %v2530 = vand.u32 %v443, 4294901760
  %v2531 = vsub.f32 %v443, %v2530
  %v2532 = vand.u32 %v2531, 4294901760
  %v2533 = vsub.f32 %v2531, %v2532
  %v2534 = vand.u32 %v2533, 4294901760
  %2535 = vmatpush1.msra.mxu0 %v2534
  %2536 = vmatprep.subr.mxu0 0.0
  %v2537 = vand.u32 %v444, 4294901760
  %v2538 = vsub.f32 %v444, %v2537
  %v2539 = vand.u32 %v2538, 4294901760
  %v2540 = vsub.f32 %v2538, %v2539
  %v2541 = vand.u32 %v2540, 4294901760
  %2542 = vmatpush1.msra.mxu0 %v2541
  %2543 = vmatprep.subr.mxu0 0.0
  %v2544 = vand.u32 %v445, 4294901760
  %v2545 = vsub.f32 %v445, %v2544
  %v2546 = vand.u32 %v2545, 4294901760
  %v2547 = vsub.f32 %v2545, %v2546
  %v2548 = vand.u32 %v2547, 4294901760
  %2549 = vmatpush1.msra.mxu0 %v2548
  %2550 = vmatprep.subr.mxu0 0.0
  %v2551 = vand.u32 %v446, 4294901760
  %v2552 = vsub.f32 %v446, %v2551
  %v2553 = vand.u32 %v2552, 4294901760
  %v2554 = vsub.f32 %v2552, %v2553
  %v2555 = vand.u32 %v2554, 4294901760
  %2556 = vmatpush1.msra.mxu0 %v2555
  %2557 = vmatprep.subr.mxu0 0.0
  %v2558 = vand.u32 %v447, 4294901760
  %v2559 = vsub.f32 %v447, %v2558
  %v2560 = vand.u32 %v2559, 4294901760
  %v2561 = vsub.f32 %v2559, %v2560
  %v2562 = vand.u32 %v2561, 4294901760
  %2563 = vmatpush1.msra.mxu0 %v2562
  %2564 = vmatprep.subr.mxu0 0.0
  %v2565 = vand.u32 %v448, 4294901760
  %v2566 = vsub.f32 %v448, %v2565
  %v2567 = vand.u32 %v2566, 4294901760
  %v2568 = vsub.f32 %v2566, %v2567
  %v2569 = vand.u32 %v2568, 4294901760
  %2570 = vmatpush1.msra.mxu0 %v2569
  %2571 = vmatprep.subr.mxu0 0.0
  %v2572 = vand.u32 %v449, 4294901760
  %v2573 = vsub.f32 %v449, %v2572
  %v2574 = vand.u32 %v2573, 4294901760
  %v2575 = vsub.f32 %v2573, %v2574
  %v2576 = vand.u32 %v2575, 4294901760
  %2577 = vmatpush1.msra.mxu0 %v2576
  %2578 = vmatprep.subr.mxu0 0.0
  %v2579 = vand.u32 %v450, 4294901760
  %v2580 = vsub.f32 %v450, %v2579
  %v2581 = vand.u32 %v2580, 4294901760
  %v2582 = vsub.f32 %v2580, %v2581
  %v2583 = vand.u32 %v2582, 4294901760
  %2584 = vmatpush1.msra.mxu0 %v2583
  %2585 = vmatprep.subr.mxu0 0.0
  %v2586 = vand.u32 %v451, 4294901760
  %v2587 = vsub.f32 %v451, %v2586
  %v2588 = vand.u32 %v2587, 4294901760
  %v2589 = vsub.f32 %v2587, %v2588
  %v2590 = vand.u32 %v2589, 4294901760
  %2591 = vmatpush1.msra.mxu0 %v2590
  %2592 = vmatprep.subr.mxu0 0.0
  %v2593 = vand.u32 %v452, 4294901760
  %v2594 = vsub.f32 %v452, %v2593
  %v2595 = vand.u32 %v2594, 4294901760
  %v2596 = vsub.f32 %v2594, %v2595
  %v2597 = vand.u32 %v2596, 4294901760
  %2598 = vmatpush1.msra.mxu0 %v2597
  %2599 = vmatprep.subr.mxu0 0.0
  %v2600 = vand.u32 %v453, 4294901760
  %v2601 = vsub.f32 %v453, %v2600
  %v2602 = vand.u32 %v2601, 4294901760
  %v2603 = vsub.f32 %v2601, %v2602
  %v2604 = vand.u32 %v2603, 4294901760
  %2605 = vmatpush1.msra.mxu0 %v2604
  %2606 = vmatprep.subr.mxu0 0.0
  %v2607 = vand.u32 %v454, 4294901760
  %v2608 = vsub.f32 %v454, %v2607
  %v2609 = vand.u32 %v2608, 4294901760
  %v2610 = vsub.f32 %v2608, %v2609
  %v2611 = vand.u32 %v2610, 4294901760
  %2612 = vmatpush1.msra.mxu0 %v2611
  %2613 = vmatprep.subr.mxu0 0.0
  %v2614 = vand.u32 %v455, 4294901760
  %v2615 = vsub.f32 %v455, %v2614
  %v2616 = vand.u32 %v2615, 4294901760
  %v2617 = vsub.f32 %v2615, %v2616
  %v2618 = vand.u32 %v2617, 4294901760
  %2619 = vmatpush1.msra.mxu0 %v2618
  %2620 = vmatprep.subr.mxu0 0.0
  %v2621 = vand.u32 %v456, 4294901760
  %v2622 = vsub.f32 %v456, %v2621
  %v2623 = vand.u32 %v2622, 4294901760
  %v2624 = vsub.f32 %v2622, %v2623
  %v2625 = vand.u32 %v2624, 4294901760
  %2626 = vmatpush1.msra.mxu0 %v2625
  %2627 = vmatprep.subr.mxu0 0.0
  %v2628 = vand.u32 %v457, 4294901760
  %v2629 = vsub.f32 %v457, %v2628
  %v2630 = vand.u32 %v2629, 4294901760
  %v2631 = vsub.f32 %v2629, %v2630
  %v2632 = vand.u32 %v2631, 4294901760
  %2633 = vmatpush1.msra.mxu0 %v2632
  %2634 = vmatprep.subr.mxu0 0.0
  %v2635 = vand.u32 %v458, 4294901760
  %v2636 = vsub.f32 %v458, %v2635
  %v2637 = vand.u32 %v2636, 4294901760
  %v2638 = vsub.f32 %v2636, %v2637
  %v2639 = vand.u32 %v2638, 4294901760
  %2640 = vmatpush1.msra.mxu0 %v2639
  %2641 = vmatprep.subr.mxu0 0.0
  %v2642 = vand.u32 %v459, 4294901760
  %v2643 = vsub.f32 %v459, %v2642
  %v2644 = vand.u32 %v2643, 4294901760
  %v2645 = vsub.f32 %v2643, %v2644
  %v2646 = vand.u32 %v2645, 4294901760
  %2647 = vmatpush1.msra.mxu0 %v2646
  %2648 = vmatprep.subr.mxu0 0.0
  %v2649 = vand.u32 %v460, 4294901760
  %v2650 = vsub.f32 %v460, %v2649
  %v2651 = vand.u32 %v2650, 4294901760
  %v2652 = vsub.f32 %v2650, %v2651
  %v2653 = vand.u32 %v2652, 4294901760
  %2654 = vmatpush1.msra.mxu0 %v2653
  %2655 = vmatprep.subr.mxu0 0.0
  %v2656 = vand.u32 %v461, 4294901760
  %v2657 = vsub.f32 %v461, %v2656
  %v2658 = vand.u32 %v2657, 4294901760
  %v2659 = vsub.f32 %v2657, %v2658
  %v2660 = vand.u32 %v2659, 4294901760
  %2661 = vmatpush1.msra.mxu0 %v2660
  %2662 = vmatprep.subr.mxu0 0.0
  %v2663 = vand.u32 %v462, 4294901760
  %v2664 = vsub.f32 %v462, %v2663
  %v2665 = vand.u32 %v2664, 4294901760
  %v2666 = vsub.f32 %v2664, %v2665
  %v2667 = vand.u32 %v2666, 4294901760
  %2668 = vmatpush1.msra.mxu0 %v2667
  %2669 = vmatprep.subr.mxu0 0.0
  %v2670 = vand.u32 %v463, 4294901760
  %v2671 = vsub.f32 %v463, %v2670
  %v2672 = vand.u32 %v2671, 4294901760
  %v2673 = vsub.f32 %v2671, %v2672
  %v2674 = vand.u32 %v2673, 4294901760
  %2675 = vmatpush1.msra.mxu0 %v2674
  %2676 = vmatprep.subr.mxu0 0.0
  %v2677 = vand.u32 %v464, 4294901760
  %v2678 = vsub.f32 %v464, %v2677
  %v2679 = vand.u32 %v2678, 4294901760
  %v2680 = vsub.f32 %v2678, %v2679
  %v2681 = vand.u32 %v2680, 4294901760
  %2682 = vmatpush1.msra.mxu0 %v2681
  %2683 = vmatprep.subr.mxu0 0.0
  %v2684 = vand.u32 %v465, 4294901760
  %v2685 = vsub.f32 %v465, %v2684
  %v2686 = vand.u32 %v2685, 4294901760
  %v2687 = vsub.f32 %v2685, %v2686
  %v2688 = vand.u32 %v2687, 4294901760
  %2689 = vmatpush1.msra.mxu0 %v2688
  %2690 = vmatprep.subr.mxu0 0.0
  %v2691 = vand.u32 %v466, 4294901760
  %v2692 = vsub.f32 %v466, %v2691
  %v2693 = vand.u32 %v2692, 4294901760
  %v2694 = vsub.f32 %v2692, %v2693
  %v2695 = vand.u32 %v2694, 4294901760
  %2696 = vmatpush1.msra.mxu0 %v2695
  %2697 = vmatprep.subr.mxu0 0.0
  %v2698 = vand.u32 %v467, 4294901760
  %v2699 = vsub.f32 %v467, %v2698
  %v2700 = vand.u32 %v2699, 4294901760
  %v2701 = vsub.f32 %v2699, %v2700
  %v2702 = vand.u32 %v2701, 4294901760
  %2703 = vmatpush1.msra.mxu0 %v2702
  %2704 = vmatprep.subr.mxu0 0.0
  %v2705 = vand.u32 %v468, 4294901760
  %v2706 = vsub.f32 %v468, %v2705
  %v2707 = vand.u32 %v2706, 4294901760
  %v2708 = vsub.f32 %v2706, %v2707
  %v2709 = vand.u32 %v2708, 4294901760
  %2710 = vmatpush1.msra.mxu0 %v2709
  %2711 = vmatprep.subr.mxu0 0.0
  %v2712 = vand.u32 %v469, 4294901760
  %v2713 = vsub.f32 %v469, %v2712
  %v2714 = vand.u32 %v2713, 4294901760
  %v2715 = vsub.f32 %v2713, %v2714
  %v2716 = vand.u32 %v2715, 4294901760
  %2717 = vmatpush1.msra.mxu0 %v2716
  %2718 = vmatprep.subr.mxu0 0.0
  %v2719 = vand.u32 %v470, 4294901760
  %v2720 = vsub.f32 %v470, %v2719
  %v2721 = vand.u32 %v2720, 4294901760
  %v2722 = vsub.f32 %v2720, %v2721
  %v2723 = vand.u32 %v2722, 4294901760
  %2724 = vmatpush1.msra.mxu0 %v2723
  %2725 = vmatprep.subr.mxu0 0.0
  %v2726 = vand.u32 %v471, 4294901760
  %v2727 = vsub.f32 %v471, %v2726
  %v2728 = vand.u32 %v2727, 4294901760
  %v2729 = vsub.f32 %v2727, %v2728
  %v2730 = vand.u32 %v2729, 4294901760
  %2731 = vmatpush1.msra.mxu0 %v2730
  %2732 = vmatprep.subr.mxu0 0.0
  %v2733 = vand.u32 %v472, 4294901760
  %v2734 = vsub.f32 %v472, %v2733
  %v2735 = vand.u32 %v2734, 4294901760
  %v2736 = vsub.f32 %v2734, %v2735
  %v2737 = vand.u32 %v2736, 4294901760
  %2738 = vmatpush1.msra.mxu0 %v2737
  %2739 = vmatprep.subr.mxu0 0.0
  %v2740 = vand.u32 %v473, 4294901760
  %v2741 = vsub.f32 %v473, %v2740
  %v2742 = vand.u32 %v2741, 4294901760
  %v2743 = vsub.f32 %v2741, %v2742
  %v2744 = vand.u32 %v2743, 4294901760
  %2745 = vmatpush1.msra.mxu0 %v2744
  %2746 = vmatprep.subr.mxu0 0.0
  %v2747 = vand.u32 %v474, 4294901760
  %v2748 = vsub.f32 %v474, %v2747
  %v2749 = vand.u32 %v2748, 4294901760
  %v2750 = vsub.f32 %v2748, %v2749
  %v2751 = vand.u32 %v2750, 4294901760
  %2752 = vmatpush1.msra.mxu0 %v2751
  %v2753 = vand.u32 %v553, 4294901760
  %2754 = vmatprep.mubr.f32.mxu0 %v2753
  %v2755 = vand.u32 %v552, 4294901760
  %2756 = vmatmul.mubr.f32.gmra.mrb[0].mxu0 %v2755
  %v2757 = vpop.f32.mrb[0].mxu0
  %v2758 = vadd.f32 %v2511, %v2757
  %v2759 = vpop.f32.mrb[0].mxu0
  %v2760 = vand.u32 %v562, 4294901760
  %2761 = vmatprep.mubr.f32.mxu0 %v2760
  %v2762 = vand.u32 %v561, 4294901760
  %2763 = vmatmul.mubr.f32.gmra.mrb[0].mxu0 %v2762
  %v2764 = vpop.f32.mrb[0].mxu0
  %v2765 = vadd.f32 %v2526, %v2764
  %v2766 = vpop.f32.mrb[0].mxu0
  %2767 = vdwg.mxu0
  %2768 = vmatprep.subr.mxu0 0.0
  %v2769 = vand.u32 %v443, 4294901760
  %v2770 = vsub.f32 %v443, %v2769
  %2771 = vmatpush1.msra.mxu0 %v2770
  %2772 = vmatprep.subr.mxu0 0.0
  %v2773 = vand.u32 %v444, 4294901760
  %v2774 = vsub.f32 %v444, %v2773
  %2775 = vmatpush1.msra.mxu0 %v2774
  %2776 = vmatprep.subr.mxu0 0.0
  %v2777 = vand.u32 %v445, 4294901760
  %v2778 = vsub.f32 %v445, %v2777
  %2779 = vmatpush1.msra.mxu0 %v2778
  %2780 = vmatprep.subr.mxu0 0.0
  %v2781 = vand.u32 %v446, 4294901760
  %v2782 = vsub.f32 %v446, %v2781
  %2783 = vmatpush1.msra.mxu0 %v2782
  %2784 = vmatprep.subr.mxu0 0.0
  %v2785 = vand.u32 %v447, 4294901760
  %v2786 = vsub.f32 %v447, %v2785
  %2787 = vmatpush1.msra.mxu0 %v2786
  %2788 = vmatprep.subr.mxu0 0.0
  %v2789 = vand.u32 %v448, 4294901760
  %v2790 = vsub.f32 %v448, %v2789
  %2791 = vmatpush1.msra.mxu0 %v2790
  %2792 = vmatprep.subr.mxu0 0.0
  %v2793 = vand.u32 %v449, 4294901760
  %v2794 = vsub.f32 %v449, %v2793
  %2795 = vmatpush1.msra.mxu0 %v2794
  %2796 = vmatprep.subr.mxu0 0.0
  %v2797 = vand.u32 %v450, 4294901760
  %v2798 = vsub.f32 %v450, %v2797
  %2799 = vmatpush1.msra.mxu0 %v2798
  %2800 = vmatprep.subr.mxu0 0.0
  %v2801 = vand.u32 %v451, 4294901760
  %v2802 = vsub.f32 %v451, %v2801
  %2803 = vmatpush1.msra.mxu0 %v2802
  %2804 = vmatprep.subr.mxu0 0.0
  %v2805 = vand.u32 %v452, 4294901760
  %v2806 = vsub.f32 %v452, %v2805
  %2807 = vmatpush1.msra.mxu0 %v2806
  %2808 = vmatprep.subr.mxu0 0.0
  %v2809 = vand.u32 %v453, 4294901760
  %v2810 = vsub.f32 %v453, %v2809
  %2811 = vmatpush1.msra.mxu0 %v2810
  %2812 = vmatprep.subr.mxu0 0.0
  %v2813 = vand.u32 %v454, 4294901760
  %v2814 = vsub.f32 %v454, %v2813
  %2815 = vmatpush1.msra.mxu0 %v2814
  %2816 = vmatprep.subr.mxu0 0.0
  %v2817 = vand.u32 %v455, 4294901760
  %v2818 = vsub.f32 %v455, %v2817
  %2819 = vmatpush1.msra.mxu0 %v2818
  %2820 = vmatprep.subr.mxu0 0.0
  %v2821 = vand.u32 %v456, 4294901760
  %v2822 = vsub.f32 %v456, %v2821
  %2823 = vmatpush1.msra.mxu0 %v2822
  %2824 = vmatprep.subr.mxu0 0.0
  %v2825 = vand.u32 %v457, 4294901760
  %v2826 = vsub.f32 %v457, %v2825
  %2827 = vmatpush1.msra.mxu0 %v2826
  %2828 = vmatprep.subr.mxu0 0.0
  %v2829 = vand.u32 %v458, 4294901760
  %v2830 = vsub.f32 %v458, %v2829
  %2831 = vmatpush1.msra.mxu0 %v2830
  %2832 = vmatprep.subr.mxu0 0.0
  %v2833 = vand.u32 %v459, 4294901760
  %v2834 = vsub.f32 %v459, %v2833
  %2835 = vmatpush1.msra.mxu0 %v2834
  %2836 = vmatprep.subr.mxu0 0.0
  %v2837 = vand.u32 %v460, 4294901760
  %v2838 = vsub.f32 %v460, %v2837
  %2839 = vmatpush1.msra.mxu0 %v2838
  %2840 = vmatprep.subr.mxu0 0.0
  %v2841 = vand.u32 %v461, 4294901760
  %v2842 = vsub.f32 %v461, %v2841
  %2843 = vmatpush1.msra.mxu0 %v2842
  %2844 = vmatprep.subr.mxu0 0.0
  %v2845 = vand.u32 %v462, 4294901760
  %v2846 = vsub.f32 %v462, %v2845
  %2847 = vmatpush1.msra.mxu0 %v2846
  %2848 = vmatprep.subr.mxu0 0.0
  %v2849 = vand.u32 %v463, 4294901760
  %v2850 = vsub.f32 %v463, %v2849
  %2851 = vmatpush1.msra.mxu0 %v2850
  %2852 = vmatprep.subr.mxu0 0.0
  %v2853 = vand.u32 %v464, 4294901760
  %v2854 = vsub.f32 %v464, %v2853
  %2855 = vmatpush1.msra.mxu0 %v2854
  %2856 = vmatprep.subr.mxu0 0.0
  %v2857 = vand.u32 %v465, 4294901760
  %v2858 = vsub.f32 %v465, %v2857
  %2859 = vmatpush1.msra.mxu0 %v2858
  %2860 = vmatprep.subr.mxu0 0.0
  %v2861 = vand.u32 %v466, 4294901760
  %v2862 = vsub.f32 %v466, %v2861
  %2863 = vmatpush1.msra.mxu0 %v2862
  %2864 = vmatprep.subr.mxu0 0.0
  %v2865 = vand.u32 %v467, 4294901760
  %v2866 = vsub.f32 %v467, %v2865
  %2867 = vmatpush1.msra.mxu0 %v2866
  %2868 = vmatprep.subr.mxu0 0.0
  %v2869 = vand.u32 %v468, 4294901760
  %v2870 = vsub.f32 %v468, %v2869
  %2871 = vmatpush1.msra.mxu0 %v2870
  %2872 = vmatprep.subr.mxu0 0.0
  %v2873 = vand.u32 %v469, 4294901760
  %v2874 = vsub.f32 %v469, %v2873
  %2875 = vmatpush1.msra.mxu0 %v2874
  %2876 = vmatprep.subr.mxu0 0.0
  %v2877 = vand.u32 %v470, 4294901760
  %v2878 = vsub.f32 %v470, %v2877
  %2879 = vmatpush1.msra.mxu0 %v2878
  %2880 = vmatprep.subr.mxu0 0.0
  %v2881 = vand.u32 %v471, 4294901760
  %v2882 = vsub.f32 %v471, %v2881
  %2883 = vmatpush1.msra.mxu0 %v2882
  %2884 = vmatprep.subr.mxu0 0.0
  %v2885 = vand.u32 %v472, 4294901760
  %v2886 = vsub.f32 %v472, %v2885
  %2887 = vmatpush1.msra.mxu0 %v2886
  %2888 = vmatprep.subr.mxu0 0.0
  %v2889 = vand.u32 %v473, 4294901760
  %v2890 = vsub.f32 %v473, %v2889
  %2891 = vmatpush1.msra.mxu0 %v2890
  %2892 = vmatprep.subr.mxu0 0.0
  %v2893 = vand.u32 %v474, 4294901760
  %v2894 = vsub.f32 %v474, %v2893
  %2895 = vmatpush1.msra.mxu0 %v2894
  %v2896 = vand.u32 %v553, 4294901760
  %v2897 = vsub.f32 %v553, %v2896
  %2898 = vmatprep.mubr.f32.mxu0 %v2897
  %v2899 = vand.u32 %v552, 4294901760
  %v2900 = vsub.f32 %v552, %v2899
  %2901 = vmatmul.mubr.f32.gmra.mrb[0].mxu0 %v2900
  %v2902 = vpop.f32.mrb[0].mxu0
  %v2903 = vadd.f32 %v2758, %v2902
  %v2904 = vpop.f32.mrb[0].mxu0
  %v2905 = vand.u32 %v562, 4294901760
  %v2906 = vsub.f32 %v562, %v2905
  %2907 = vmatprep.mubr.f32.mxu0 %v2906
  %v2908 = vand.u32 %v561, 4294901760
  %v2909 = vsub.f32 %v561, %v2908
  %2910 = vmatmul.mubr.f32.gmra.mrb[0].mxu0 %v2909
  %v2911 = vpop.f32.mrb[0].mxu0
  %v2912 = vadd.f32 %v2765, %v2911
  %v2913 = vpop.f32.mrb[0].mxu0
  %2914 = vdwg.mxu0
  %2915 = vmatprep.subr.mxu0 0.0
  %v2916 = vand.u32 %v443, 4294901760
  %2917 = vmatpush1.msra.mxu0 %v2916
  %2918 = vmatprep.subr.mxu0 0.0
  %v2919 = vand.u32 %v444, 4294901760
  %2920 = vmatpush1.msra.mxu0 %v2919
  %2921 = vmatprep.subr.mxu0 0.0
  %v2922 = vand.u32 %v445, 4294901760
  %2923 = vmatpush1.msra.mxu0 %v2922
  %2924 = vmatprep.subr.mxu0 0.0
  %v2925 = vand.u32 %v446, 4294901760
  %2926 = vmatpush1.msra.mxu0 %v2925
  %2927 = vmatprep.subr.mxu0 0.0
  %v2928 = vand.u32 %v447, 4294901760
  %2929 = vmatpush1.msra.mxu0 %v2928
  %2930 = vmatprep.subr.mxu0 0.0
  %v2931 = vand.u32 %v448, 4294901760
  %2932 = vmatpush1.msra.mxu0 %v2931
  %2933 = vmatprep.subr.mxu0 0.0
  %v2934 = vand.u32 %v449, 4294901760
  %2935 = vmatpush1.msra.mxu0 %v2934
  %2936 = vmatprep.subr.mxu0 0.0
  %v2937 = vand.u32 %v450, 4294901760
  %2938 = vmatpush1.msra.mxu0 %v2937
  %2939 = vmatprep.subr.mxu0 0.0
  %v2940 = vand.u32 %v451, 4294901760
  %2941 = vmatpush1.msra.mxu0 %v2940
  %2942 = vmatprep.subr.mxu0 0.0
  %v2943 = vand.u32 %v452, 4294901760
  %2944 = vmatpush1.msra.mxu0 %v2943
  %2945 = vmatprep.subr.mxu0 0.0
  %v2946 = vand.u32 %v453, 4294901760
  %2947 = vmatpush1.msra.mxu0 %v2946
  %2948 = vmatprep.subr.mxu0 0.0
  %v2949 = vand.u32 %v454, 4294901760
  %2950 = vmatpush1.msra.mxu0 %v2949
  %2951 = vmatprep.subr.mxu0 0.0
  %v2952 = vand.u32 %v455, 4294901760
  %2953 = vmatpush1.msra.mxu0 %v2952
  %2954 = vmatprep.subr.mxu0 0.0
  %v2955 = vand.u32 %v456, 4294901760
  %2956 = vmatpush1.msra.mxu0 %v2955
  %2957 = vmatprep.subr.mxu0 0.0
  %v2958 = vand.u32 %v457, 4294901760
  %2959 = vmatpush1.msra.mxu0 %v2958
  %2960 = vmatprep.subr.mxu0 0.0
  %v2961 = vand.u32 %v458, 4294901760
  %2962 = vmatpush1.msra.mxu0 %v2961
  %2963 = vmatprep.subr.mxu0 0.0
  %v2964 = vand.u32 %v459, 4294901760
  %2965 = vmatpush1.msra.mxu0 %v2964
  %2966 = vmatprep.subr.mxu0 0.0
  %v2967 = vand.u32 %v460, 4294901760
  %2968 = vmatpush1.msra.mxu0 %v2967
  %2969 = vmatprep.subr.mxu0 0.0
  %v2970 = vand.u32 %v461, 4294901760
  %2971 = vmatpush1.msra.mxu0 %v2970
  %2972 = vmatprep.subr.mxu0 0.0
  %v2973 = vand.u32 %v462, 4294901760
  %2974 = vmatpush1.msra.mxu0 %v2973
  %2975 = vmatprep.subr.mxu0 0.0
  %v2976 = vand.u32 %v463, 4294901760
  %2977 = vmatpush1.msra.mxu0 %v2976
  %2978 = vmatprep.subr.mxu0 0.0
  %v2979 = vand.u32 %v464, 4294901760
  %2980 = vmatpush1.msra.mxu0 %v2979
  %2981 = vmatprep.subr.mxu0 0.0
  %v2982 = vand.u32 %v465, 4294901760
  %2983 = vmatpush1.msra.mxu0 %v2982
  %2984 = vmatprep.subr.mxu0 0.0
  %v2985 = vand.u32 %v466, 4294901760
  %2986 = vmatpush1.msra.mxu0 %v2985
  %2987 = vmatprep.subr.mxu0 0.0
  %v2988 = vand.u32 %v467, 4294901760
  %2989 = vmatpush1.msra.mxu0 %v2988
  %2990 = vmatprep.subr.mxu0 0.0
  %v2991 = vand.u32 %v468, 4294901760
  %2992 = vmatpush1.msra.mxu0 %v2991
  %2993 = vmatprep.subr.mxu0 0.0
  %v2994 = vand.u32 %v469, 4294901760
  %2995 = vmatpush1.msra.mxu0 %v2994
  %2996 = vmatprep.subr.mxu0 0.0
  %v2997 = vand.u32 %v470, 4294901760
  %2998 = vmatpush1.msra.mxu0 %v2997
  %2999 = vmatprep.subr.mxu0 0.0
  %v3000 = vand.u32 %v471, 4294901760
  %3001 = vmatpush1.msra.mxu0 %v3000
  %3002 = vmatprep.subr.mxu0 0.0
  %v3003 = vand.u32 %v472, 4294901760
  %3004 = vmatpush1.msra.mxu0 %v3003
  %3005 = vmatprep.subr.mxu0 0.0
  %v3006 = vand.u32 %v473, 4294901760
  %3007 = vmatpush1.msra.mxu0 %v3006
  %3008 = vmatprep.subr.mxu0 0.0
  %v3009 = vand.u32 %v474, 4294901760
  %3010 = vmatpush1.msra.mxu0 %v3009
  %v3011 = vand.u32 %v553, 4294901760
  %v3012 = vsub.f32 %v553, %v3011
  %v3013 = vand.u32 %v3012, 4294901760
  %3014 = vmatprep.mubr.f32.mxu0 %v3013
  %v3015 = vand.u32 %v552, 4294901760
  %v3016 = vsub.f32 %v552, %v3015
  %v3017 = vand.u32 %v3016, 4294901760
  %3018 = vmatmul.mubr.f32.gmra.mrb[0].mxu0 %v3017
  %v3019 = vpop.f32.mrb[0].mxu0
  %v3020 = vadd.f32 %v2903, %v3019
  %v3021 = vpop.f32.mrb[0].mxu0
  %v3022 = vand.u32 %v562, 4294901760
  %v3023 = vsub.f32 %v562, %v3022
  %v3024 = vand.u32 %v3023, 4294901760
  %3025 = vmatprep.mubr.f32.mxu0 %v3024
  %v3026 = vand.u32 %v561, 4294901760
  %v3027 = vsub.f32 %v561, %v3026
  %v3028 = vand.u32 %v3027, 4294901760
  %3029 = vmatmul.mubr.f32.gmra.mrb[0].mxu0 %v3028
  %v3030 = vpop.f32.mrb[0].mxu0
  %v3031 = vadd.f32 %v2912, %v3030
  %v3032 = vpop.f32.mrb[0].mxu0
  %3033 = vdwg.mxu0
  %3034 = vmatprep.subr.mxu0 0.0
  %v3035 = vand.u32 %v443, 4294901760
  %v3036 = vsub.f32 %v443, %v3035
  %v3037 = vand.u32 %v3036, 4294901760
  %3038 = vmatpush1.msra.mxu0 %v3037
  %3039 = vmatprep.subr.mxu0 0.0
  %v3040 = vand.u32 %v444, 4294901760
  %v3041 = vsub.f32 %v444, %v3040
  %v3042 = vand.u32 %v3041, 4294901760
  %3043 = vmatpush1.msra.mxu0 %v3042
  %3044 = vmatprep.subr.mxu0 0.0
  %v3045 = vand.u32 %v445, 4294901760
  %v3046 = vsub.f32 %v445, %v3045
  %v3047 = vand.u32 %v3046, 4294901760
  %3048 = vmatpush1.msra.mxu0 %v3047
  %3049 = vmatprep.subr.mxu0 0.0
  %v3050 = vand.u32 %v446, 4294901760
  %v3051 = vsub.f32 %v446, %v3050
  %v3052 = vand.u32 %v3051, 4294901760
  %3053 = vmatpush1.msra.mxu0 %v3052
  %3054 = vmatprep.subr.mxu0 0.0
  %v3055 = vand.u32 %v447, 4294901760
  %v3056 = vsub.f32 %v447, %v3055
  %v3057 = vand.u32 %v3056, 4294901760
  %3058 = vmatpush1.msra.mxu0 %v3057
  %3059 = vmatprep.subr.mxu0 0.0
  %v3060 = vand.u32 %v448, 4294901760
  %v3061 = vsub.f32 %v448, %v3060
  %v3062 = vand.u32 %v3061, 4294901760
  %3063 = vmatpush1.msra.mxu0 %v3062
  %3064 = vmatprep.subr.mxu0 0.0
  %v3065 = vand.u32 %v449, 4294901760
  %v3066 = vsub.f32 %v449, %v3065
  %v3067 = vand.u32 %v3066, 4294901760
  %3068 = vmatpush1.msra.mxu0 %v3067
  %3069 = vmatprep.subr.mxu0 0.0
  %v3070 = vand.u32 %v450, 4294901760
  %v3071 = vsub.f32 %v450, %v3070
  %v3072 = vand.u32 %v3071, 4294901760
  %3073 = vmatpush1.msra.mxu0 %v3072
  %3074 = vmatprep.subr.mxu0 0.0
  %v3075 = vand.u32 %v451, 4294901760
  %v3076 = vsub.f32 %v451, %v3075
  %v3077 = vand.u32 %v3076, 4294901760
  %3078 = vmatpush1.msra.mxu0 %v3077
  %3079 = vmatprep.subr.mxu0 0.0
  %v3080 = vand.u32 %v452, 4294901760
  %v3081 = vsub.f32 %v452, %v3080
  %v3082 = vand.u32 %v3081, 4294901760
  %3083 = vmatpush1.msra.mxu0 %v3082
  %3084 = vmatprep.subr.mxu0 0.0
  %v3085 = vand.u32 %v453, 4294901760
  %v3086 = vsub.f32 %v453, %v3085
  %v3087 = vand.u32 %v3086, 4294901760
  %3088 = vmatpush1.msra.mxu0 %v3087
  %3089 = vmatprep.subr.mxu0 0.0
  %v3090 = vand.u32 %v454, 4294901760
  %v3091 = vsub.f32 %v454, %v3090
  %v3092 = vand.u32 %v3091, 4294901760
  %3093 = vmatpush1.msra.mxu0 %v3092
  %3094 = vmatprep.subr.mxu0 0.0
  %v3095 = vand.u32 %v455, 4294901760
  %v3096 = vsub.f32 %v455, %v3095
  %v3097 = vand.u32 %v3096, 4294901760
  %3098 = vmatpush1.msra.mxu0 %v3097
  %3099 = vmatprep.subr.mxu0 0.0
  %v3100 = vand.u32 %v456, 4294901760
  %v3101 = vsub.f32 %v456, %v3100
  %v3102 = vand.u32 %v3101, 4294901760
  %3103 = vmatpush1.msra.mxu0 %v3102
  %3104 = vmatprep.subr.mxu0 0.0
  %v3105 = vand.u32 %v457, 4294901760
  %v3106 = vsub.f32 %v457, %v3105
  %v3107 = vand.u32 %v3106, 4294901760
  %3108 = vmatpush1.msra.mxu0 %v3107
  %3109 = vmatprep.subr.mxu0 0.0
  %v3110 = vand.u32 %v458, 4294901760
  %v3111 = vsub.f32 %v458, %v3110
  %v3112 = vand.u32 %v3111, 4294901760
  %3113 = vmatpush1.msra.mxu0 %v3112
  %3114 = vmatprep.subr.mxu0 0.0
  %v3115 = vand.u32 %v459, 4294901760
  %v3116 = vsub.f32 %v459, %v3115
  %v3117 = vand.u32 %v3116, 4294901760
  %3118 = vmatpush1.msra.mxu0 %v3117
  %3119 = vmatprep.subr.mxu0 0.0
  %v3120 = vand.u32 %v460, 4294901760
  %v3121 = vsub.f32 %v460, %v3120
  %v3122 = vand.u32 %v3121, 4294901760
  %3123 = vmatpush1.msra.mxu0 %v3122
  %3124 = vmatprep.subr.mxu0 0.0
  %v3125 = vand.u32 %v461, 4294901760
  %v3126 = vsub.f32 %v461, %v3125
  %v3127 = vand.u32 %v3126, 4294901760
  %3128 = vmatpush1.msra.mxu0 %v3127
  %3129 = vmatprep.subr.mxu0 0.0
  %v3130 = vand.u32 %v462, 4294901760
  %v3131 = vsub.f32 %v462, %v3130
  %v3132 = vand.u32 %v3131, 4294901760
  %3133 = vmatpush1.msra.mxu0 %v3132
  %3134 = vmatprep.subr.mxu0 0.0
  %v3135 = vand.u32 %v463, 4294901760
  %v3136 = vsub.f32 %v463, %v3135
  %v3137 = vand.u32 %v3136, 4294901760
  %3138 = vmatpush1.msra.mxu0 %v3137
  %3139 = vmatprep.subr.mxu0 0.0
  %v3140 = vand.u32 %v464, 4294901760
  %v3141 = vsub.f32 %v464, %v3140
  %v3142 = vand.u32 %v3141, 4294901760
  %3143 = vmatpush1.msra.mxu0 %v3142
  %3144 = vmatprep.subr.mxu0 0.0
  %v3145 = vand.u32 %v465, 4294901760
  %v3146 = vsub.f32 %v465, %v3145
  %v3147 = vand.u32 %v3146, 4294901760
  %3148 = vmatpush1.msra.mxu0 %v3147
  %3149 = vmatprep.subr.mxu0 0.0
  %v3150 = vand.u32 %v466, 4294901760
  %v3151 = vsub.f32 %v466, %v3150
  %v3152 = vand.u32 %v3151, 4294901760
  %3153 = vmatpush1.msra.mxu0 %v3152
  %3154 = vmatprep.subr.mxu0 0.0
  %v3155 = vand.u32 %v467, 4294901760
  %v3156 = vsub.f32 %v467, %v3155
  %v3157 = vand.u32 %v3156, 4294901760
  %3158 = vmatpush1.msra.mxu0 %v3157
  %3159 = vmatprep.subr.mxu0 0.0
  %v3160 = vand.u32 %v468, 4294901760
  %v3161 = vsub.f32 %v468, %v3160
  %v3162 = vand.u32 %v3161, 4294901760
  %3163 = vmatpush1.msra.mxu0 %v3162
  %3164 = vmatprep.subr.mxu0 0.0
  %v3165 = vand.u32 %v469, 4294901760
  %v3166 = vsub.f32 %v469, %v3165
  %v3167 = vand.u32 %v3166, 4294901760
  %3168 = vmatpush1.msra.mxu0 %v3167
  %3169 = vmatprep.subr.mxu0 0.0
  %v3170 = vand.u32 %v470, 4294901760
  %v3171 = vsub.f32 %v470, %v3170
  %v3172 = vand.u32 %v3171, 4294901760
  %3173 = vmatpush1.msra.mxu0 %v3172
  %3174 = vmatprep.subr.mxu0 0.0
  %v3175 = vand.u32 %v471, 4294901760
  %v3176 = vsub.f32 %v471, %v3175
  %v3177 = vand.u32 %v3176, 4294901760
  %3178 = vmatpush1.msra.mxu0 %v3177
  %3179 = vmatprep.subr.mxu0 0.0
  %v3180 = vand.u32 %v472, 4294901760
  %v3181 = vsub.f32 %v472, %v3180
  %v3182 = vand.u32 %v3181, 4294901760
  %3183 = vmatpush1.msra.mxu0 %v3182
  %3184 = vmatprep.subr.mxu0 0.0
  %v3185 = vand.u32 %v473, 4294901760
  %v3186 = vsub.f32 %v473, %v3185
  %v3187 = vand.u32 %v3186, 4294901760
  %3188 = vmatpush1.msra.mxu0 %v3187
  %3189 = vmatprep.subr.mxu0 0.0
  %v3190 = vand.u32 %v474, 4294901760
  %v3191 = vsub.f32 %v474, %v3190
  %v3192 = vand.u32 %v3191, 4294901760
  %3193 = vmatpush1.msra.mxu0 %v3192
  %v3194 = vand.u32 %v553, 4294901760
  %3195 = vmatprep.mubr.f32.mxu0 %v3194
  %v3196 = vand.u32 %v552, 4294901760
  %3197 = vmatmul.mubr.f32.gmra.mrb[0].mxu0 %v3196
  %v3198 = vpop.f32.mrb[0].mxu0
  %v3199 = vadd.f32 %v3020, %v3198
  %v3200 = vpop.f32.mrb[0].mxu0
  %v3201 = vand.u32 %v562, 4294901760
  %3202 = vmatprep.mubr.f32.mxu0 %v3201
  %v3203 = vand.u32 %v561, 4294901760
  %3204 = vmatmul.mubr.f32.gmra.mrb[0].mxu0 %v3203
  %v3205 = vpop.f32.mrb[0].mxu0
  %v3206 = vadd.f32 %v3031, %v3205
  %v3207 = vpop.f32.mrb[0].mxu0
  %3208 = vdwg.mxu0
  %3209 = vmatprep.subr.mxu0 0.0
  %v3210 = vand.u32 %v443, 4294901760
  %3211 = vmatpush1.msra.mxu0 %v3210
  %3212 = vmatprep.subr.mxu0 0.0
  %v3213 = vand.u32 %v444, 4294901760
  %3214 = vmatpush1.msra.mxu0 %v3213
  %3215 = vmatprep.subr.mxu0 0.0
  %v3216 = vand.u32 %v445, 4294901760
  %3217 = vmatpush1.msra.mxu0 %v3216
  %3218 = vmatprep.subr.mxu0 0.0
  %v3219 = vand.u32 %v446, 4294901760
  %3220 = vmatpush1.msra.mxu0 %v3219
  %3221 = vmatprep.subr.mxu0 0.0
  %v3222 = vand.u32 %v447, 4294901760
  %3223 = vmatpush1.msra.mxu0 %v3222
  %3224 = vmatprep.subr.mxu0 0.0
  %v3225 = vand.u32 %v448, 4294901760
  %3226 = vmatpush1.msra.mxu0 %v3225
  %3227 = vmatprep.subr.mxu0 0.0
  %v3228 = vand.u32 %v449, 4294901760
  %3229 = vmatpush1.msra.mxu0 %v3228
  %3230 = vmatprep.subr.mxu0 0.0
  %v3231 = vand.u32 %v450, 4294901760
  %3232 = vmatpush1.msra.mxu0 %v3231
  %3233 = vmatprep.subr.mxu0 0.0
  %v3234 = vand.u32 %v451, 4294901760
  %3235 = vmatpush1.msra.mxu0 %v3234
  %3236 = vmatprep.subr.mxu0 0.0
  %v3237 = vand.u32 %v452, 4294901760
  %3238 = vmatpush1.msra.mxu0 %v3237
  %3239 = vmatprep.subr.mxu0 0.0
  %v3240 = vand.u32 %v453, 4294901760
  %3241 = vmatpush1.msra.mxu0 %v3240
  %3242 = vmatprep.subr.mxu0 0.0
  %v3243 = vand.u32 %v454, 4294901760
  %3244 = vmatpush1.msra.mxu0 %v3243
  %3245 = vmatprep.subr.mxu0 0.0
  %v3246 = vand.u32 %v455, 4294901760
  %3247 = vmatpush1.msra.mxu0 %v3246
  %3248 = vmatprep.subr.mxu0 0.0
  %v3249 = vand.u32 %v456, 4294901760
  %3250 = vmatpush1.msra.mxu0 %v3249
  %3251 = vmatprep.subr.mxu0 0.0
  %v3252 = vand.u32 %v457, 4294901760
  %3253 = vmatpush1.msra.mxu0 %v3252
  %3254 = vmatprep.subr.mxu0 0.0
  %v3255 = vand.u32 %v458, 4294901760
  %3256 = vmatpush1.msra.mxu0 %v3255
  %3257 = vmatprep.subr.mxu0 0.0
  %v3258 = vand.u32 %v459, 4294901760
  %3259 = vmatpush1.msra.mxu0 %v3258
  %3260 = vmatprep.subr.mxu0 0.0
  %v3261 = vand.u32 %v460, 4294901760
  %3262 = vmatpush1.msra.mxu0 %v3261
  %3263 = vmatprep.subr.mxu0 0.0
  %v3264 = vand.u32 %v461, 4294901760
  %3265 = vmatpush1.msra.mxu0 %v3264
  %3266 = vmatprep.subr.mxu0 0.0
  %v3267 = vand.u32 %v462, 4294901760
  %3268 = vmatpush1.msra.mxu0 %v3267
  %3269 = vmatprep.subr.mxu0 0.0
  %v3270 = vand.u32 %v463, 4294901760
  %3271 = vmatpush1.msra.mxu0 %v3270
  %3272 = vmatprep.subr.mxu0 0.0
  %v3273 = vand.u32 %v464, 4294901760
  %3274 = vmatpush1.msra.mxu0 %v3273
  %3275 = vmatprep.subr.mxu0 0.0
  %v3276 = vand.u32 %v465, 4294901760
  %3277 = vmatpush1.msra.mxu0 %v3276
  %3278 = vmatprep.subr.mxu0 0.0
  %v3279 = vand.u32 %v466, 4294901760
  %3280 = vmatpush1.msra.mxu0 %v3279
  %3281 = vmatprep.subr.mxu0 0.0
  %v3282 = vand.u32 %v467, 4294901760
  %3283 = vmatpush1.msra.mxu0 %v3282
  %3284 = vmatprep.subr.mxu0 0.0
  %v3285 = vand.u32 %v468, 4294901760
  %3286 = vmatpush1.msra.mxu0 %v3285
  %3287 = vmatprep.subr.mxu0 0.0
  %v3288 = vand.u32 %v469, 4294901760
  %3289 = vmatpush1.msra.mxu0 %v3288
  %3290 = vmatprep.subr.mxu0 0.0
  %v3291 = vand.u32 %v470, 4294901760
  %3292 = vmatpush1.msra.mxu0 %v3291
  %3293 = vmatprep.subr.mxu0 0.0
  %v3294 = vand.u32 %v471, 4294901760
  %3295 = vmatpush1.msra.mxu0 %v3294
  %3296 = vmatprep.subr.mxu0 0.0
  %v3297 = vand.u32 %v472, 4294901760
  %3298 = vmatpush1.msra.mxu0 %v3297
  %3299 = vmatprep.subr.mxu0 0.0
  %v3300 = vand.u32 %v473, 4294901760
  %3301 = vmatpush1.msra.mxu0 %v3300
  %3302 = vmatprep.subr.mxu0 0.0
  %v3303 = vand.u32 %v474, 4294901760
  %3304 = vmatpush1.msra.mxu0 %v3303
  %v3305 = vand.u32 %v553, 4294901760
  %3306 = vmatprep.mubr.f32.mxu0 %v3305
  %v3307 = vand.u32 %v552, 4294901760
  %3308 = vmatmul.mubr.f32.gmra.mrb[0].mxu0 %v3307
  %v3309 = vpop.f32.mrb[0].mxu0
  %v3310 = vadd.f32 %v3199, %v3309
  %v3311 = vpop.f32.mrb[0].mxu0
  %v3312 = vand.u32 %v562, 4294901760
  %3313 = vmatprep.mubr.f32.mxu0 %v3312
  %v3314 = vand.u32 %v561, 4294901760
  %3315 = vmatmul.mubr.f32.gmra.mrb[0].mxu0 %v3314
  %v3316 = vpop.f32.mrb[0].mxu0
  %v3317 = vadd.f32 %v3206, %v3316
  %v3318 = vpop.f32.mrb[0].mxu0
  %3319 = vdwg.mxu0
  %3320 = vmatprep.subr.mxu0 0.0
  %v3321 = vand.u32 %v475, 4294901760
  %3322 = vmatpush1.msra.mxu0 %v3321
  %3323 = vmatprep.subr.mxu0 0.0
  %v3324 = vand.u32 %v476, 4294901760
  %3325 = vmatpush1.msra.mxu0 %v3324
  %3326 = vmatprep.subr.mxu0 0.0
  %v3327 = vand.u32 %v477, 4294901760
  %3328 = vmatpush1.msra.mxu0 %v3327
  %3329 = vmatprep.subr.mxu0 0.0
  %v3330 = vand.u32 %v478, 4294901760
  %3331 = vmatpush1.msra.mxu0 %v3330
  %3332 = vmatprep.subr.mxu0 0.0
  %v3333 = vand.u32 %v479, 4294901760
  %3334 = vmatpush1.msra.mxu0 %v3333
  %3335 = vmatprep.subr.mxu0 0.0
  %v3336 = vand.u32 %v480, 4294901760
  %3337 = vmatpush1.msra.mxu0 %v3336
  %3338 = vmatprep.subr.mxu0 0.0
  %v3339 = vand.u32 %v481, 4294901760
  %3340 = vmatpush1.msra.mxu0 %v3339
  %3341 = vmatprep.subr.mxu0 0.0
  %v3342 = vand.u32 %v482, 4294901760
  %3343 = vmatpush1.msra.mxu0 %v3342
  %3344 = vmatprep.subr.mxu0 0.0
  %v3345 = vand.u32 %v483, 4294901760
  %3346 = vmatpush1.msra.mxu0 %v3345
  %3347 = vmatprep.subr.mxu0 0.0
  %v3348 = vand.u32 %v484, 4294901760
  %3349 = vmatpush1.msra.mxu0 %v3348
  %3350 = vmatprep.subr.mxu0 0.0
  %v3351 = vand.u32 %v485, 4294901760
  %3352 = vmatpush1.msra.mxu0 %v3351
  %3353 = vmatprep.subr.mxu0 0.0
  %v3354 = vand.u32 %v486, 4294901760
  %3355 = vmatpush1.msra.mxu0 %v3354
  %3356 = vmatprep.subr.mxu0 0.0
  %v3357 = vand.u32 %v487, 4294901760
  %3358 = vmatpush1.msra.mxu0 %v3357
  %3359 = vmatprep.subr.mxu0 0.0
  %v3360 = vand.u32 %v488, 4294901760
  %3361 = vmatpush1.msra.mxu0 %v3360
  %3362 = vmatprep.subr.mxu0 0.0
  %v3363 = vand.u32 %v489, 4294901760
  %3364 = vmatpush1.msra.mxu0 %v3363
  %3365 = vmatprep.subr.mxu0 0.0
  %v3366 = vand.u32 %v490, 4294901760
  %3367 = vmatpush1.msra.mxu0 %v3366
  %3368 = vmatprep.subr.mxu0 0.0
  %v3369 = vand.u32 %v491, 4294901760
  %3370 = vmatpush1.msra.mxu0 %v3369
  %3371 = vmatprep.subr.mxu0 0.0
  %v3372 = vand.u32 %v492, 4294901760
  %3373 = vmatpush1.msra.mxu0 %v3372
  %3374 = vmatprep.subr.mxu0 0.0
  %v3375 = vand.u32 %v493, 4294901760
  %3376 = vmatpush1.msra.mxu0 %v3375
  %3377 = vmatprep.subr.mxu0 0.0
  %v3378 = vand.u32 %v494, 4294901760
  %3379 = vmatpush1.msra.mxu0 %v3378
  %3380 = vmatprep.subr.mxu0 0.0
  %v3381 = vand.u32 %v495, 4294901760
  %3382 = vmatpush1.msra.mxu0 %v3381
  %3383 = vmatprep.subr.mxu0 0.0
  %v3384 = vand.u32 %v496, 4294901760
  %3385 = vmatpush1.msra.mxu0 %v3384
  %3386 = vmatprep.subr.mxu0 0.0
  %v3387 = vand.u32 %v497, 4294901760
  %3388 = vmatpush1.msra.mxu0 %v3387
  %3389 = vmatprep.subr.mxu0 0.0
  %v3390 = vand.u32 %v498, 4294901760
  %3391 = vmatpush1.msra.mxu0 %v3390
  %3392 = vmatprep.subr.mxu0 0.0
  %v3393 = vand.u32 %v499, 4294901760
  %3394 = vmatpush1.msra.mxu0 %v3393
  %3395 = vmatprep.subr.mxu0 0.0
  %v3396 = vand.u32 %v500, 4294901760
  %3397 = vmatpush1.msra.mxu0 %v3396
  %3398 = vmatprep.subr.mxu0 0.0
  %v3399 = vand.u32 %v501, 4294901760
  %3400 = vmatpush1.msra.mxu0 %v3399
  %3401 = vmatprep.subr.mxu0 0.0
  %v3402 = vand.u32 %v502, 4294901760
  %3403 = vmatpush1.msra.mxu0 %v3402
  %3404 = vmatprep.subr.mxu0 0.0
  %v3405 = vand.u32 %v503, 4294901760
  %3406 = vmatpush1.msra.mxu0 %v3405
  %3407 = vmatprep.subr.mxu0 0.0
  %v3408 = vand.u32 %v504, 4294901760
  %3409 = vmatpush1.msra.mxu0 %v3408
  %3410 = vmatprep.subr.mxu0 0.0
  %v3411 = vand.u32 %v505, 4294901760
  %3412 = vmatpush1.msra.mxu0 %v3411
  %3413 = vmatprep.subr.mxu0 0.0
  %v3414 = vand.u32 %v506, 4294901760
  %3415 = vmatpush1.msra.mxu0 %v3414
  %v3416 = vand.u32 %v555, 4294901760
  %v3417 = vsub.f32 %v555, %v3416
  %v3418 = vand.u32 %v3417, 4294901760
  %v3419 = vsub.f32 %v3417, %v3418
  %v3420 = vand.u32 %v3419, 4294901760
  %3421 = vmatprep.mubr.f32.mxu0 %v3420
  %v3422 = vand.u32 %v554, 4294901760
  %v3423 = vsub.f32 %v554, %v3422
  %v3424 = vand.u32 %v3423, 4294901760
  %v3425 = vsub.f32 %v3423, %v3424
  %v3426 = vand.u32 %v3425, 4294901760
  %3427 = vmatmul.mubr.f32.gmra.mrb[0].mxu0 %v3426
  %v3428 = vpop.f32.mrb[0].mxu0
  %v3429 = vadd.f32 %v3310, %v3428
  %v3430 = vpop.f32.mrb[0].mxu0
  %v3431 = vand.u32 %v564, 4294901760
  %v3432 = vsub.f32 %v564, %v3431
  %v3433 = vand.u32 %v3432, 4294901760
  %v3434 = vsub.f32 %v3432, %v3433
  %v3435 = vand.u32 %v3434, 4294901760
  %3436 = vmatprep.mubr.f32.mxu0 %v3435
  %v3437 = vand.u32 %v563, 4294901760
  %v3438 = vsub.f32 %v563, %v3437
  %v3439 = vand.u32 %v3438, 4294901760
  %v3440 = vsub.f32 %v3438, %v3439
  %v3441 = vand.u32 %v3440, 4294901760
  %3442 = vmatmul.mubr.f32.gmra.mrb[0].mxu0 %v3441
  %v3443 = vpop.f32.mrb[0].mxu0
  %v3444 = vadd.f32 %v3317, %v3443
  %v3445 = vpop.f32.mrb[0].mxu0
  %3446 = vdwg.mxu0
  %3447 = vmatprep.subr.mxu0 0.0
  %v3448 = vand.u32 %v475, 4294901760
  %v3449 = vsub.f32 %v475, %v3448
  %v3450 = vand.u32 %v3449, 4294901760
  %v3451 = vsub.f32 %v3449, %v3450
  %v3452 = vand.u32 %v3451, 4294901760
  %3453 = vmatpush1.msra.mxu0 %v3452
  %3454 = vmatprep.subr.mxu0 0.0
  %v3455 = vand.u32 %v476, 4294901760
  %v3456 = vsub.f32 %v476, %v3455
  %v3457 = vand.u32 %v3456, 4294901760
  %v3458 = vsub.f32 %v3456, %v3457
  %v3459 = vand.u32 %v3458, 4294901760
  %3460 = vmatpush1.msra.mxu0 %v3459
  %3461 = vmatprep.subr.mxu0 0.0
  %v3462 = vand.u32 %v477, 4294901760
  %v3463 = vsub.f32 %v477, %v3462
  %v3464 = vand.u32 %v3463, 4294901760
  %v3465 = vsub.f32 %v3463, %v3464
  %v3466 = vand.u32 %v3465, 4294901760
  %3467 = vmatpush1.msra.mxu0 %v3466
  %3468 = vmatprep.subr.mxu0 0.0
  %v3469 = vand.u32 %v478, 4294901760
  %v3470 = vsub.f32 %v478, %v3469
  %v3471 = vand.u32 %v3470, 4294901760
  %v3472 = vsub.f32 %v3470, %v3471
  %v3473 = vand.u32 %v3472, 4294901760
  %3474 = vmatpush1.msra.mxu0 %v3473
  %3475 = vmatprep.subr.mxu0 0.0
  %v3476 = vand.u32 %v479, 4294901760
  %v3477 = vsub.f32 %v479, %v3476
  %v3478 = vand.u32 %v3477, 4294901760
  %v3479 = vsub.f32 %v3477, %v3478
  %v3480 = vand.u32 %v3479, 4294901760
  %3481 = vmatpush1.msra.mxu0 %v3480
  %3482 = vmatprep.subr.mxu0 0.0
  %v3483 = vand.u32 %v480, 4294901760
  %v3484 = vsub.f32 %v480, %v3483
  %v3485 = vand.u32 %v3484, 4294901760
  %v3486 = vsub.f32 %v3484, %v3485
  %v3487 = vand.u32 %v3486, 4294901760
  %3488 = vmatpush1.msra.mxu0 %v3487
  %3489 = vmatprep.subr.mxu0 0.0
  %v3490 = vand.u32 %v481, 4294901760
  %v3491 = vsub.f32 %v481, %v3490
  %v3492 = vand.u32 %v3491, 4294901760
  %v3493 = vsub.f32 %v3491, %v3492
  %v3494 = vand.u32 %v3493, 4294901760
  %3495 = vmatpush1.msra.mxu0 %v3494
  %3496 = vmatprep.subr.mxu0 0.0
  %v3497 = vand.u32 %v482, 4294901760
  %v3498 = vsub.f32 %v482, %v3497
  %v3499 = vand.u32 %v3498, 4294901760
  %v3500 = vsub.f32 %v3498, %v3499
  %v3501 = vand.u32 %v3500, 4294901760
  %3502 = vmatpush1.msra.mxu0 %v3501
  %3503 = vmatprep.subr.mxu0 0.0
  %v3504 = vand.u32 %v483, 4294901760
  %v3505 = vsub.f32 %v483, %v3504
  %v3506 = vand.u32 %v3505, 4294901760
  %v3507 = vsub.f32 %v3505, %v3506
  %v3508 = vand.u32 %v3507, 4294901760
  %3509 = vmatpush1.msra.mxu0 %v3508
  %3510 = vmatprep.subr.mxu0 0.0
  %v3511 = vand.u32 %v484, 4294901760
  %v3512 = vsub.f32 %v484, %v3511
  %v3513 = vand.u32 %v3512, 4294901760
  %v3514 = vsub.f32 %v3512, %v3513
  %v3515 = vand.u32 %v3514, 4294901760
  %3516 = vmatpush1.msra.mxu0 %v3515
  %3517 = vmatprep.subr.mxu0 0.0
  %v3518 = vand.u32 %v485, 4294901760
  %v3519 = vsub.f32 %v485, %v3518
  %v3520 = vand.u32 %v3519, 4294901760
  %v3521 = vsub.f32 %v3519, %v3520
  %v3522 = vand.u32 %v3521, 4294901760
  %3523 = vmatpush1.msra.mxu0 %v3522
  %3524 = vmatprep.subr.mxu0 0.0
  %v3525 = vand.u32 %v486, 4294901760
  %v3526 = vsub.f32 %v486, %v3525
  %v3527 = vand.u32 %v3526, 4294901760
  %v3528 = vsub.f32 %v3526, %v3527
  %v3529 = vand.u32 %v3528, 4294901760
  %3530 = vmatpush1.msra.mxu0 %v3529
  %3531 = vmatprep.subr.mxu0 0.0
  %v3532 = vand.u32 %v487, 4294901760
  %v3533 = vsub.f32 %v487, %v3532
  %v3534 = vand.u32 %v3533, 4294901760
  %v3535 = vsub.f32 %v3533, %v3534
  %v3536 = vand.u32 %v3535, 4294901760
  %3537 = vmatpush1.msra.mxu0 %v3536
  %3538 = vmatprep.subr.mxu0 0.0
  %v3539 = vand.u32 %v488, 4294901760
  %v3540 = vsub.f32 %v488, %v3539
  %v3541 = vand.u32 %v3540, 4294901760
  %v3542 = vsub.f32 %v3540, %v3541
  %v3543 = vand.u32 %v3542, 4294901760
  %3544 = vmatpush1.msra.mxu0 %v3543
  %3545 = vmatprep.subr.mxu0 0.0
  %v3546 = vand.u32 %v489, 4294901760
  %v3547 = vsub.f32 %v489, %v3546
  %v3548 = vand.u32 %v3547, 4294901760
  %v3549 = vsub.f32 %v3547, %v3548
  %v3550 = vand.u32 %v3549, 4294901760
  %3551 = vmatpush1.msra.mxu0 %v3550
  %3552 = vmatprep.subr.mxu0 0.0
  %v3553 = vand.u32 %v490, 4294901760
  %v3554 = vsub.f32 %v490, %v3553
  %v3555 = vand.u32 %v3554, 4294901760
  %v3556 = vsub.f32 %v3554, %v3555
  %v3557 = vand.u32 %v3556, 4294901760
  %3558 = vmatpush1.msra.mxu0 %v3557
  %3559 = vmatprep.subr.mxu0 0.0
  %v3560 = vand.u32 %v491, 4294901760
  %v3561 = vsub.f32 %v491, %v3560
  %v3562 = vand.u32 %v3561, 4294901760
  %v3563 = vsub.f32 %v3561, %v3562
  %v3564 = vand.u32 %v3563, 4294901760
  %3565 = vmatpush1.msra.mxu0 %v3564
  %3566 = vmatprep.subr.mxu0 0.0
  %v3567 = vand.u32 %v492, 4294901760
  %v3568 = vsub.f32 %v492, %v3567
  %v3569 = vand.u32 %v3568, 4294901760
  %v3570 = vsub.f32 %v3568, %v3569
  %v3571 = vand.u32 %v3570, 4294901760
  %3572 = vmatpush1.msra.mxu0 %v3571
  %3573 = vmatprep.subr.mxu0 0.0
  %v3574 = vand.u32 %v493, 4294901760
  %v3575 = vsub.f32 %v493, %v3574
  %v3576 = vand.u32 %v3575, 4294901760
  %v3577 = vsub.f32 %v3575, %v3576
  %v3578 = vand.u32 %v3577, 4294901760
  %3579 = vmatpush1.msra.mxu0 %v3578
  %3580 = vmatprep.subr.mxu0 0.0
  %v3581 = vand.u32 %v494, 4294901760
  %v3582 = vsub.f32 %v494, %v3581
  %v3583 = vand.u32 %v3582, 4294901760
  %v3584 = vsub.f32 %v3582, %v3583
  %v3585 = vand.u32 %v3584, 4294901760
  %3586 = vmatpush1.msra.mxu0 %v3585
  %3587 = vmatprep.subr.mxu0 0.0
  %v3588 = vand.u32 %v495, 4294901760
  %v3589 = vsub.f32 %v495, %v3588
  %v3590 = vand.u32 %v3589, 4294901760
  %v3591 = vsub.f32 %v3589, %v3590
  %v3592 = vand.u32 %v3591, 4294901760
  %3593 = vmatpush1.msra.mxu0 %v3592
  %3594 = vmatprep.subr.mxu0 0.0
  %v3595 = vand.u32 %v496, 4294901760
  %v3596 = vsub.f32 %v496, %v3595
  %v3597 = vand.u32 %v3596, 4294901760
  %v3598 = vsub.f32 %v3596, %v3597
  %v3599 = vand.u32 %v3598, 4294901760
  %3600 = vmatpush1.msra.mxu0 %v3599
  %3601 = vmatprep.subr.mxu0 0.0
  %v3602 = vand.u32 %v497, 4294901760
  %v3603 = vsub.f32 %v497, %v3602
  %v3604 = vand.u32 %v3603, 4294901760
  %v3605 = vsub.f32 %v3603, %v3604
  %v3606 = vand.u32 %v3605, 4294901760
  %3607 = vmatpush1.msra.mxu0 %v3606
  %3608 = vmatprep.subr.mxu0 0.0
  %v3609 = vand.u32 %v498, 4294901760
  %v3610 = vsub.f32 %v498, %v3609
  %v3611 = vand.u32 %v3610, 4294901760
  %v3612 = vsub.f32 %v3610, %v3611
  %v3613 = vand.u32 %v3612, 4294901760
  %3614 = vmatpush1.msra.mxu0 %v3613
  %3615 = vmatprep.subr.mxu0 0.0
  %v3616 = vand.u32 %v499, 4294901760
  %v3617 = vsub.f32 %v499, %v3616
  %v3618 = vand.u32 %v3617, 4294901760
  %v3619 = vsub.f32 %v3617, %v3618
  %v3620 = vand.u32 %v3619, 4294901760
  %3621 = vmatpush1.msra.mxu0 %v3620
  %3622 = vmatprep.subr.mxu0 0.0
  %v3623 = vand.u32 %v500, 4294901760
  %v3624 = vsub.f32 %v500, %v3623
  %v3625 = vand.u32 %v3624, 4294901760
  %v3626 = vsub.f32 %v3624, %v3625
  %v3627 = vand.u32 %v3626, 4294901760
  %3628 = vmatpush1.msra.mxu0 %v3627
  %3629 = vmatprep.subr.mxu0 0.0
  %v3630 = vand.u32 %v501, 4294901760
  %v3631 = vsub.f32 %v501, %v3630
  %v3632 = vand.u32 %v3631, 4294901760
  %v3633 = vsub.f32 %v3631, %v3632
  %v3634 = vand.u32 %v3633, 4294901760
  %3635 = vmatpush1.msra.mxu0 %v3634
  %3636 = vmatprep.subr.mxu0 0.0
  %v3637 = vand.u32 %v502, 4294901760
  %v3638 = vsub.f32 %v502, %v3637
  %v3639 = vand.u32 %v3638, 4294901760
  %v3640 = vsub.f32 %v3638, %v3639
  %v3641 = vand.u32 %v3640, 4294901760
  %3642 = vmatpush1.msra.mxu0 %v3641
  %3643 = vmatprep.subr.mxu0 0.0
  %v3644 = vand.u32 %v503, 4294901760
  %v3645 = vsub.f32 %v503, %v3644
  %v3646 = vand.u32 %v3645, 4294901760
  %v3647 = vsub.f32 %v3645, %v3646
  %v3648 = vand.u32 %v3647, 4294901760
  %3649 = vmatpush1.msra.mxu0 %v3648
  %3650 = vmatprep.subr.mxu0 0.0
  %v3651 = vand.u32 %v504, 4294901760
  %v3652 = vsub.f32 %v504, %v3651
  %v3653 = vand.u32 %v3652, 4294901760
  %v3654 = vsub.f32 %v3652, %v3653
  %v3655 = vand.u32 %v3654, 4294901760
  %3656 = vmatpush1.msra.mxu0 %v3655
  %3657 = vmatprep.subr.mxu0 0.0
  %v3658 = vand.u32 %v505, 4294901760
  %v3659 = vsub.f32 %v505, %v3658
  %v3660 = vand.u32 %v3659, 4294901760
  %v3661 = vsub.f32 %v3659, %v3660
  %v3662 = vand.u32 %v3661, 4294901760
  %3663 = vmatpush1.msra.mxu0 %v3662
  %3664 = vmatprep.subr.mxu0 0.0
  %v3665 = vand.u32 %v506, 4294901760
  %v3666 = vsub.f32 %v506, %v3665
  %v3667 = vand.u32 %v3666, 4294901760
  %v3668 = vsub.f32 %v3666, %v3667
  %v3669 = vand.u32 %v3668, 4294901760
  %3670 = vmatpush1.msra.mxu0 %v3669
  %v3671 = vand.u32 %v555, 4294901760
  %3672 = vmatprep.mubr.f32.mxu0 %v3671
  %v3673 = vand.u32 %v554, 4294901760
  %3674 = vmatmul.mubr.f32.gmra.mrb[0].mxu0 %v3673
  %v3675 = vpop.f32.mrb[0].mxu0
  %v3676 = vadd.f32 %v3429, %v3675
  %v3677 = vpop.f32.mrb[0].mxu0
  %v3678 = vand.u32 %v564, 4294901760
  %3679 = vmatprep.mubr.f32.mxu0 %v3678
  %v3680 = vand.u32 %v563, 4294901760
  %3681 = vmatmul.mubr.f32.gmra.mrb[0].mxu0 %v3680
  %v3682 = vpop.f32.mrb[0].mxu0
  %v3683 = vadd.f32 %v3444, %v3682
  %v3684 = vpop.f32.mrb[0].mxu0
  %3685 = vdwg.mxu0
  %3686 = vmatprep.subr.mxu0 0.0
  %v3687 = vand.u32 %v475, 4294901760
  %v3688 = vsub.f32 %v475, %v3687
  %3689 = vmatpush1.msra.mxu0 %v3688
  %3690 = vmatprep.subr.mxu0 0.0
  %v3691 = vand.u32 %v476, 4294901760
  %v3692 = vsub.f32 %v476, %v3691
  %3693 = vmatpush1.msra.mxu0 %v3692
  %3694 = vmatprep.subr.mxu0 0.0
  %v3695 = vand.u32 %v477, 4294901760
  %v3696 = vsub.f32 %v477, %v3695
  %3697 = vmatpush1.msra.mxu0 %v3696
  %3698 = vmatprep.subr.mxu0 0.0
  %v3699 = vand.u32 %v478, 4294901760
  %v3700 = vsub.f32 %v478, %v3699
  %3701 = vmatpush1.msra.mxu0 %v3700
  %3702 = vmatprep.subr.mxu0 0.0
  %v3703 = vand.u32 %v479, 4294901760
  %v3704 = vsub.f32 %v479, %v3703
  %3705 = vmatpush1.msra.mxu0 %v3704
  %3706 = vmatprep.subr.mxu0 0.0
  %v3707 = vand.u32 %v480, 4294901760
  %v3708 = vsub.f32 %v480, %v3707
  %3709 = vmatpush1.msra.mxu0 %v3708
  %3710 = vmatprep.subr.mxu0 0.0
  %v3711 = vand.u32 %v481, 4294901760
  %v3712 = vsub.f32 %v481, %v3711
  %3713 = vmatpush1.msra.mxu0 %v3712
  %3714 = vmatprep.subr.mxu0 0.0
  %v3715 = vand.u32 %v482, 4294901760
  %v3716 = vsub.f32 %v482, %v3715
  %3717 = vmatpush1.msra.mxu0 %v3716
  %3718 = vmatprep.subr.mxu0 0.0
  %v3719 = vand.u32 %v483, 4294901760
  %v3720 = vsub.f32 %v483, %v3719
  %3721 = vmatpush1.msra.mxu0 %v3720
  %3722 = vmatprep.subr.mxu0 0.0
  %v3723 = vand.u32 %v484, 4294901760
  %v3724 = vsub.f32 %v484, %v3723
  %3725 = vmatpush1.msra.mxu0 %v3724
  %3726 = vmatprep.subr.mxu0 0.0
  %v3727 = vand.u32 %v485, 4294901760
  %v3728 = vsub.f32 %v485, %v3727
  %3729 = vmatpush1.msra.mxu0 %v3728
  %3730 = vmatprep.subr.mxu0 0.0
  %v3731 = vand.u32 %v486, 4294901760
  %v3732 = vsub.f32 %v486, %v3731
  %3733 = vmatpush1.msra.mxu0 %v3732
  %3734 = vmatprep.subr.mxu0 0.0
  %v3735 = vand.u32 %v487, 4294901760
  %v3736 = vsub.f32 %v487, %v3735
  %3737 = vmatpush1.msra.mxu0 %v3736
  %3738 = vmatprep.subr.mxu0 0.0
  %v3739 = vand.u32 %v488, 4294901760
  %v3740 = vsub.f32 %v488, %v3739
  %3741 = vmatpush1.msra.mxu0 %v3740
  %3742 = vmatprep.subr.mxu0 0.0
  %v3743 = vand.u32 %v489, 4294901760
  %v3744 = vsub.f32 %v489, %v3743
  %3745 = vmatpush1.msra.mxu0 %v3744
  %3746 = vmatprep.subr.mxu0 0.0
  %v3747 = vand.u32 %v490, 4294901760
  %v3748 = vsub.f32 %v490, %v3747
  %3749 = vmatpush1.msra.mxu0 %v3748
  %3750 = vmatprep.subr.mxu0 0.0
  %v3751 = vand.u32 %v491, 4294901760
  %v3752 = vsub.f32 %v491, %v3751
  %3753 = vmatpush1.msra.mxu0 %v3752
  %3754 = vmatprep.subr.mxu0 0.0
  %v3755 = vand.u32 %v492, 4294901760
  %v3756 = vsub.f32 %v492, %v3755
  %3757 = vmatpush1.msra.mxu0 %v3756
  %3758 = vmatprep.subr.mxu0 0.0
  %v3759 = vand.u32 %v493, 4294901760
  %v3760 = vsub.f32 %v493, %v3759
  %3761 = vmatpush1.msra.mxu0 %v3760
  %3762 = vmatprep.subr.mxu0 0.0
  %v3763 = vand.u32 %v494, 4294901760
  %v3764 = vsub.f32 %v494, %v3763
  %3765 = vmatpush1.msra.mxu0 %v3764
  %3766 = vmatprep.subr.mxu0 0.0
  %v3767 = vand.u32 %v495, 4294901760
  %v3768 = vsub.f32 %v495, %v3767
  %3769 = vmatpush1.msra.mxu0 %v3768
  %3770 = vmatprep.subr.mxu0 0.0
  %v3771 = vand.u32 %v496, 4294901760
  %v3772 = vsub.f32 %v496, %v3771
  %3773 = vmatpush1.msra.mxu0 %v3772
  %3774 = vmatprep.subr.mxu0 0.0
  %v3775 = vand.u32 %v497, 4294901760
  %v3776 = vsub.f32 %v497, %v3775
  %3777 = vmatpush1.msra.mxu0 %v3776
  %3778 = vmatprep.subr.mxu0 0.0
  %v3779 = vand.u32 %v498, 4294901760
  %v3780 = vsub.f32 %v498, %v3779
  %3781 = vmatpush1.msra.mxu0 %v3780
  %3782 = vmatprep.subr.mxu0 0.0
  %v3783 = vand.u32 %v499, 4294901760
  %v3784 = vsub.f32 %v499, %v3783
  %3785 = vmatpush1.msra.mxu0 %v3784
  %3786 = vmatprep.subr.mxu0 0.0
  %v3787 = vand.u32 %v500, 4294901760
  %v3788 = vsub.f32 %v500, %v3787
  %3789 = vmatpush1.msra.mxu0 %v3788
  %3790 = vmatprep.subr.mxu0 0.0
  %v3791 = vand.u32 %v501, 4294901760
  %v3792 = vsub.f32 %v501, %v3791
  %3793 = vmatpush1.msra.mxu0 %v3792
  %3794 = vmatprep.subr.mxu0 0.0
  %v3795 = vand.u32 %v502, 4294901760
  %v3796 = vsub.f32 %v502, %v3795
  %3797 = vmatpush1.msra.mxu0 %v3796
  %3798 = vmatprep.subr.mxu0 0.0
  %v3799 = vand.u32 %v503, 4294901760
  %v3800 = vsub.f32 %v503, %v3799
  %3801 = vmatpush1.msra.mxu0 %v3800
  %3802 = vmatprep.subr.mxu0 0.0
  %v3803 = vand.u32 %v504, 4294901760
  %v3804 = vsub.f32 %v504, %v3803
  %3805 = vmatpush1.msra.mxu0 %v3804
  %3806 = vmatprep.subr.mxu0 0.0
  %v3807 = vand.u32 %v505, 4294901760
  %v3808 = vsub.f32 %v505, %v3807
  %3809 = vmatpush1.msra.mxu0 %v3808
  %3810 = vmatprep.subr.mxu0 0.0
  %v3811 = vand.u32 %v506, 4294901760
  %v3812 = vsub.f32 %v506, %v3811
  %3813 = vmatpush1.msra.mxu0 %v3812
  %v3814 = vand.u32 %v555, 4294901760
  %v3815 = vsub.f32 %v555, %v3814
  %3816 = vmatprep.mubr.f32.mxu0 %v3815
  %v3817 = vand.u32 %v554, 4294901760
  %v3818 = vsub.f32 %v554, %v3817
  %3819 = vmatmul.mubr.f32.gmra.mrb[0].mxu0 %v3818
  %v3820 = vpop.f32.mrb[0].mxu0
  %v3821 = vadd.f32 %v3676, %v3820
  %v3822 = vpop.f32.mrb[0].mxu0
  %v3823 = vand.u32 %v564, 4294901760
  %v3824 = vsub.f32 %v564, %v3823
  %3825 = vmatprep.mubr.f32.mxu0 %v3824
  %v3826 = vand.u32 %v563, 4294901760
  %v3827 = vsub.f32 %v563, %v3826
  %3828 = vmatmul.mubr.f32.gmra.mrb[0].mxu0 %v3827
  %v3829 = vpop.f32.mrb[0].mxu0
  %v3830 = vadd.f32 %v3683, %v3829
  %v3831 = vpop.f32.mrb[0].mxu0
  %3832 = vdwg.mxu0
  %3833 = vmatprep.subr.mxu0 0.0
  %v3834 = vand.u32 %v475, 4294901760
  %3835 = vmatpush1.msra.mxu0 %v3834
  %3836 = vmatprep.subr.mxu0 0.0
  %v3837 = vand.u32 %v476, 4294901760
  %3838 = vmatpush1.msra.mxu0 %v3837
  %3839 = vmatprep.subr.mxu0 0.0
  %v3840 = vand.u32 %v477, 4294901760
  %3841 = vmatpush1.msra.mxu0 %v3840
  %3842 = vmatprep.subr.mxu0 0.0
  %v3843 = vand.u32 %v478, 4294901760
  %3844 = vmatpush1.msra.mxu0 %v3843
  %3845 = vmatprep.subr.mxu0 0.0
  %v3846 = vand.u32 %v479, 4294901760
  %3847 = vmatpush1.msra.mxu0 %v3846
  %3848 = vmatprep.subr.mxu0 0.0
  %v3849 = vand.u32 %v480, 4294901760
  %3850 = vmatpush1.msra.mxu0 %v3849
  %3851 = vmatprep.subr.mxu0 0.0
  %v3852 = vand.u32 %v481, 4294901760
  %3853 = vmatpush1.msra.mxu0 %v3852
  %3854 = vmatprep.subr.mxu0 0.0
  %v3855 = vand.u32 %v482, 4294901760
  %3856 = vmatpush1.msra.mxu0 %v3855
  %3857 = vmatprep.subr.mxu0 0.0
  %v3858 = vand.u32 %v483, 4294901760
  %3859 = vmatpush1.msra.mxu0 %v3858
  %3860 = vmatprep.subr.mxu0 0.0
  %v3861 = vand.u32 %v484, 4294901760
  %3862 = vmatpush1.msra.mxu0 %v3861
  %3863 = vmatprep.subr.mxu0 0.0
  %v3864 = vand.u32 %v485, 4294901760
  %3865 = vmatpush1.msra.mxu0 %v3864
  %3866 = vmatprep.subr.mxu0 0.0
  %v3867 = vand.u32 %v486, 4294901760
  %3868 = vmatpush1.msra.mxu0 %v3867
  %3869 = vmatprep.subr.mxu0 0.0
  %v3870 = vand.u32 %v487, 4294901760
  %3871 = vmatpush1.msra.mxu0 %v3870
  %3872 = vmatprep.subr.mxu0 0.0
  %v3873 = vand.u32 %v488, 4294901760
  %3874 = vmatpush1.msra.mxu0 %v3873
  %3875 = vmatprep.subr.mxu0 0.0
  %v3876 = vand.u32 %v489, 4294901760
  %3877 = vmatpush1.msra.mxu0 %v3876
  %3878 = vmatprep.subr.mxu0 0.0
  %v3879 = vand.u32 %v490, 4294901760
  %3880 = vmatpush1.msra.mxu0 %v3879
  %3881 = vmatprep.subr.mxu0 0.0
  %v3882 = vand.u32 %v491, 4294901760
  %3883 = vmatpush1.msra.mxu0 %v3882
  %3884 = vmatprep.subr.mxu0 0.0
  %v3885 = vand.u32 %v492, 4294901760
  %3886 = vmatpush1.msra.mxu0 %v3885
  %3887 = vmatprep.subr.mxu0 0.0
  %v3888 = vand.u32 %v493, 4294901760
  %3889 = vmatpush1.msra.mxu0 %v3888
  %3890 = vmatprep.subr.mxu0 0.0
  %v3891 = vand.u32 %v494, 4294901760
  %3892 = vmatpush1.msra.mxu0 %v3891
  %3893 = vmatprep.subr.mxu0 0.0
  %v3894 = vand.u32 %v495, 4294901760
  %3895 = vmatpush1.msra.mxu0 %v3894
  %3896 = vmatprep.subr.mxu0 0.0
  %v3897 = vand.u32 %v496, 4294901760
  %3898 = vmatpush1.msra.mxu0 %v3897
  %3899 = vmatprep.subr.mxu0 0.0
  %v3900 = vand.u32 %v497, 4294901760
  %3901 = vmatpush1.msra.mxu0 %v3900
  %3902 = vmatprep.subr.mxu0 0.0
  %v3903 = vand.u32 %v498, 4294901760
  %3904 = vmatpush1.msra.mxu0 %v3903
  %3905 = vmatprep.subr.mxu0 0.0
  %v3906 = vand.u32 %v499, 4294901760
  %3907 = vmatpush1.msra.mxu0 %v3906
  %3908 = vmatprep.subr.mxu0 0.0
  %v3909 = vand.u32 %v500, 4294901760
  %3910 = vmatpush1.msra.mxu0 %v3909
  %3911 = vmatprep.subr.mxu0 0.0
  %v3912 = vand.u32 %v501, 4294901760
  %3913 = vmatpush1.msra.mxu0 %v3912
  %3914 = vmatprep.subr.mxu0 0.0
  %v3915 = vand.u32 %v502, 4294901760
  %3916 = vmatpush1.msra.mxu0 %v3915
  %3917 = vmatprep.subr.mxu0 0.0
  %v3918 = vand.u32 %v503, 4294901760
  %3919 = vmatpush1.msra.mxu0 %v3918
  %3920 = vmatprep.subr.mxu0 0.0
  %v3921 = vand.u32 %v504, 4294901760
  %3922 = vmatpush1.msra.mxu0 %v3921
  %3923 = vmatprep.subr.mxu0 0.0
  %v3924 = vand.u32 %v505, 4294901760
  %3925 = vmatpush1.msra.mxu0 %v3924
  %3926 = vmatprep.subr.mxu0 0.0
  %v3927 = vand.u32 %v506, 4294901760
  %3928 = vmatpush1.msra.mxu0 %v3927
  %v3929 = vand.u32 %v555, 4294901760
  %v3930 = vsub.f32 %v555, %v3929
  %v3931 = vand.u32 %v3930, 4294901760
  %3932 = vmatprep.mubr.f32.mxu0 %v3931
  %v3933 = vand.u32 %v554, 4294901760
  %v3934 = vsub.f32 %v554, %v3933
  %v3935 = vand.u32 %v3934, 4294901760
  %3936 = vmatmul.mubr.f32.gmra.mrb[0].mxu0 %v3935
  %v3937 = vpop.f32.mrb[0].mxu0
  %v3938 = vadd.f32 %v3821, %v3937
  %v3939 = vpop.f32.mrb[0].mxu0
  %v3940 = vand.u32 %v564, 4294901760
  %v3941 = vsub.f32 %v564, %v3940
  %v3942 = vand.u32 %v3941, 4294901760
  %3943 = vmatprep.mubr.f32.mxu0 %v3942
  %v3944 = vand.u32 %v563, 4294901760
  %v3945 = vsub.f32 %v563, %v3944
  %v3946 = vand.u32 %v3945, 4294901760
  %3947 = vmatmul.mubr.f32.gmra.mrb[0].mxu0 %v3946
  %v3948 = vpop.f32.mrb[0].mxu0
  %v3949 = vadd.f32 %v3830, %v3948
  %v3950 = vpop.f32.mrb[0].mxu0
  %3951 = vdwg.mxu0
  %3952 = vmatprep.subr.mxu0 0.0
  %v3953 = vand.u32 %v475, 4294901760
  %v3954 = vsub.f32 %v475, %v3953
  %v3955 = vand.u32 %v3954, 4294901760
  %3956 = vmatpush1.msra.mxu0 %v3955
  %3957 = vmatprep.subr.mxu0 0.0
  %v3958 = vand.u32 %v476, 4294901760
  %v3959 = vsub.f32 %v476, %v3958
  %v3960 = vand.u32 %v3959, 4294901760
  %3961 = vmatpush1.msra.mxu0 %v3960
  %3962 = vmatprep.subr.mxu0 0.0
  %v3963 = vand.u32 %v477, 4294901760
  %v3964 = vsub.f32 %v477, %v3963
  %v3965 = vand.u32 %v3964, 4294901760
  %3966 = vmatpush1.msra.mxu0 %v3965
  %3967 = vmatprep.subr.mxu0 0.0
  %v3968 = vand.u32 %v478, 4294901760
  %v3969 = vsub.f32 %v478, %v3968
  %v3970 = vand.u32 %v3969, 4294901760
  %3971 = vmatpush1.msra.mxu0 %v3970
  %3972 = vmatprep.subr.mxu0 0.0
  %v3973 = vand.u32 %v479, 4294901760
  %v3974 = vsub.f32 %v479, %v3973
  %v3975 = vand.u32 %v3974, 4294901760
  %3976 = vmatpush1.msra.mxu0 %v3975
  %3977 = vmatprep.subr.mxu0 0.0
  %v3978 = vand.u32 %v480, 4294901760
  %v3979 = vsub.f32 %v480, %v3978
  %v3980 = vand.u32 %v3979, 4294901760
  %3981 = vmatpush1.msra.mxu0 %v3980
  %3982 = vmatprep.subr.mxu0 0.0
  %v3983 = vand.u32 %v481, 4294901760
  %v3984 = vsub.f32 %v481, %v3983
  %v3985 = vand.u32 %v3984, 4294901760
  %3986 = vmatpush1.msra.mxu0 %v3985
  %3987 = vmatprep.subr.mxu0 0.0
  %v3988 = vand.u32 %v482, 4294901760
  %v3989 = vsub.f32 %v482, %v3988
  %v3990 = vand.u32 %v3989, 4294901760
  %3991 = vmatpush1.msra.mxu0 %v3990
  %3992 = vmatprep.subr.mxu0 0.0
  %v3993 = vand.u32 %v483, 4294901760
  %v3994 = vsub.f32 %v483, %v3993
  %v3995 = vand.u32 %v3994, 4294901760
  %3996 = vmatpush1.msra.mxu0 %v3995
  %3997 = vmatprep.subr.mxu0 0.0
  %v3998 = vand.u32 %v484, 4294901760
  %v3999 = vsub.f32 %v484, %v3998
  %v4000 = vand.u32 %v3999, 4294901760
  %4001 = vmatpush1.msra.mxu0 %v4000
  %4002 = vmatprep.subr.mxu0 0.0
  %v4003 = vand.u32 %v485, 4294901760
  %v4004 = vsub.f32 %v485, %v4003
  %v4005 = vand.u32 %v4004, 4294901760
  %4006 = vmatpush1.msra.mxu0 %v4005
  %4007 = vmatprep.subr.mxu0 0.0
  %v4008 = vand.u32 %v486, 4294901760
  %v4009 = vsub.f32 %v486, %v4008
  %v4010 = vand.u32 %v4009, 4294901760
  %4011 = vmatpush1.msra.mxu0 %v4010
  %4012 = vmatprep.subr.mxu0 0.0
  %v4013 = vand.u32 %v487, 4294901760
  %v4014 = vsub.f32 %v487, %v4013
  %v4015 = vand.u32 %v4014, 4294901760
  %4016 = vmatpush1.msra.mxu0 %v4015
  %4017 = vmatprep.subr.mxu0 0.0
  %v4018 = vand.u32 %v488, 4294901760
  %v4019 = vsub.f32 %v488, %v4018
  %v4020 = vand.u32 %v4019, 4294901760
  %4021 = vmatpush1.msra.mxu0 %v4020
  %4022 = vmatprep.subr.mxu0 0.0
  %v4023 = vand.u32 %v489, 4294901760
  %v4024 = vsub.f32 %v489, %v4023
  %v4025 = vand.u32 %v4024, 4294901760
  %4026 = vmatpush1.msra.mxu0 %v4025
  %4027 = vmatprep.subr.mxu0 0.0
  %v4028 = vand.u32 %v490, 4294901760
  %v4029 = vsub.f32 %v490, %v4028
  %v4030 = vand.u32 %v4029, 4294901760
  %4031 = vmatpush1.msra.mxu0 %v4030
  %4032 = vmatprep.subr.mxu0 0.0
  %v4033 = vand.u32 %v491, 4294901760
  %v4034 = vsub.f32 %v491, %v4033
  %v4035 = vand.u32 %v4034, 4294901760
  %4036 = vmatpush1.msra.mxu0 %v4035
  %4037 = vmatprep.subr.mxu0 0.0
  %v4038 = vand.u32 %v492, 4294901760
  %v4039 = vsub.f32 %v492, %v4038
  %v4040 = vand.u32 %v4039, 4294901760
  %4041 = vmatpush1.msra.mxu0 %v4040
  %4042 = vmatprep.subr.mxu0 0.0
  %v4043 = vand.u32 %v493, 4294901760
  %v4044 = vsub.f32 %v493, %v4043
  %v4045 = vand.u32 %v4044, 4294901760
  %4046 = vmatpush1.msra.mxu0 %v4045
  %4047 = vmatprep.subr.mxu0 0.0
  %v4048 = vand.u32 %v494, 4294901760
  %v4049 = vsub.f32 %v494, %v4048
  %v4050 = vand.u32 %v4049, 4294901760
  %4051 = vmatpush1.msra.mxu0 %v4050
  %4052 = vmatprep.subr.mxu0 0.0
  %v4053 = vand.u32 %v495, 4294901760
  %v4054 = vsub.f32 %v495, %v4053
  %v4055 = vand.u32 %v4054, 4294901760
  %4056 = vmatpush1.msra.mxu0 %v4055
  %4057 = vmatprep.subr.mxu0 0.0
  %v4058 = vand.u32 %v496, 4294901760
  %v4059 = vsub.f32 %v496, %v4058
  %v4060 = vand.u32 %v4059, 4294901760
  %4061 = vmatpush1.msra.mxu0 %v4060
  %4062 = vmatprep.subr.mxu0 0.0
  %v4063 = vand.u32 %v497, 4294901760
  %v4064 = vsub.f32 %v497, %v4063
  %v4065 = vand.u32 %v4064, 4294901760
  %4066 = vmatpush1.msra.mxu0 %v4065
  %4067 = vmatprep.subr.mxu0 0.0
  %v4068 = vand.u32 %v498, 4294901760
  %v4069 = vsub.f32 %v498, %v4068
  %v4070 = vand.u32 %v4069, 4294901760
  %4071 = vmatpush1.msra.mxu0 %v4070
  %4072 = vmatprep.subr.mxu0 0.0
  %v4073 = vand.u32 %v499, 4294901760
  %v4074 = vsub.f32 %v499, %v4073
  %v4075 = vand.u32 %v4074, 4294901760
  %4076 = vmatpush1.msra.mxu0 %v4075
  %4077 = vmatprep.subr.mxu0 0.0
  %v4078 = vand.u32 %v500, 4294901760
  %v4079 = vsub.f32 %v500, %v4078
  %v4080 = vand.u32 %v4079, 4294901760
  %4081 = vmatpush1.msra.mxu0 %v4080
  %4082 = vmatprep.subr.mxu0 0.0
  %v4083 = vand.u32 %v501, 4294901760
  %v4084 = vsub.f32 %v501, %v4083
  %v4085 = vand.u32 %v4084, 4294901760
  %4086 = vmatpush1.msra.mxu0 %v4085
  %4087 = vmatprep.subr.mxu0 0.0
  %v4088 = vand.u32 %v502, 4294901760
  %v4089 = vsub.f32 %v502, %v4088
  %v4090 = vand.u32 %v4089, 4294901760
  %4091 = vmatpush1.msra.mxu0 %v4090
  %4092 = vmatprep.subr.mxu0 0.0
  %v4093 = vand.u32 %v503, 4294901760
  %v4094 = vsub.f32 %v503, %v4093
  %v4095 = vand.u32 %v4094, 4294901760
  %4096 = vmatpush1.msra.mxu0 %v4095
  %4097 = vmatprep.subr.mxu0 0.0
  %v4098 = vand.u32 %v504, 4294901760
  %v4099 = vsub.f32 %v504, %v4098
  %v4100 = vand.u32 %v4099, 4294901760
  %4101 = vmatpush1.msra.mxu0 %v4100
  %4102 = vmatprep.subr.mxu0 0.0
  %v4103 = vand.u32 %v505, 4294901760
  %v4104 = vsub.f32 %v505, %v4103
  %v4105 = vand.u32 %v4104, 4294901760
  %4106 = vmatpush1.msra.mxu0 %v4105
  %4107 = vmatprep.subr.mxu0 0.0
  %v4108 = vand.u32 %v506, 4294901760
  %v4109 = vsub.f32 %v506, %v4108
  %v4110 = vand.u32 %v4109, 4294901760
  %4111 = vmatpush1.msra.mxu0 %v4110
  %v4112 = vand.u32 %v555, 4294901760
  %4113 = vmatprep.mubr.f32.mxu0 %v4112
  %v4114 = vand.u32 %v554, 4294901760
  %4115 = vmatmul.mubr.f32.gmra.mrb[0].mxu0 %v4114
  %v4116 = vpop.f32.mrb[0].mxu0
  %v4117 = vadd.f32 %v3938, %v4116
  %v4118 = vpop.f32.mrb[0].mxu0
  %v4119 = vand.u32 %v564, 4294901760
  %4120 = vmatprep.mubr.f32.mxu0 %v4119
  %v4121 = vand.u32 %v563, 4294901760
  %4122 = vmatmul.mubr.f32.gmra.mrb[0].mxu0 %v4121
  %v4123 = vpop.f32.mrb[0].mxu0
  %v4124 = vadd.f32 %v3949, %v4123
  %v4125 = vpop.f32.mrb[0].mxu0
  %4126 = vdwg.mxu0
  %4127 = vmatprep.subr.mxu0 0.0
  %v4128 = vand.u32 %v475, 4294901760
  %4129 = vmatpush1.msra.mxu0 %v4128
  %4130 = vmatprep.subr.mxu0 0.0
  %v4131 = vand.u32 %v476, 4294901760
  %4132 = vmatpush1.msra.mxu0 %v4131
  %4133 = vmatprep.subr.mxu0 0.0
  %v4134 = vand.u32 %v477, 4294901760
  %4135 = vmatpush1.msra.mxu0 %v4134
  %4136 = vmatprep.subr.mxu0 0.0
  %v4137 = vand.u32 %v478, 4294901760
  %4138 = vmatpush1.msra.mxu0 %v4137
  %4139 = vmatprep.subr.mxu0 0.0
  %v4140 = vand.u32 %v479, 4294901760
  %4141 = vmatpush1.msra.mxu0 %v4140
  %4142 = vmatprep.subr.mxu0 0.0
  %v4143 = vand.u32 %v480, 4294901760
  %4144 = vmatpush1.msra.mxu0 %v4143
  %4145 = vmatprep.subr.mxu0 0.0
  %v4146 = vand.u32 %v481, 4294901760
  %4147 = vmatpush1.msra.mxu0 %v4146
  %4148 = vmatprep.subr.mxu0 0.0
  %v4149 = vand.u32 %v482, 4294901760
  %4150 = vmatpush1.msra.mxu0 %v4149
  %4151 = vmatprep.subr.mxu0 0.0
  %v4152 = vand.u32 %v483, 4294901760
  %4153 = vmatpush1.msra.mxu0 %v4152
  %4154 = vmatprep.subr.mxu0 0.0
  %v4155 = vand.u32 %v484, 4294901760
  %4156 = vmatpush1.msra.mxu0 %v4155
  %4157 = vmatprep.subr.mxu0 0.0
  %v4158 = vand.u32 %v485, 4294901760
  %4159 = vmatpush1.msra.mxu0 %v4158
  %4160 = vmatprep.subr.mxu0 0.0
  %v4161 = vand.u32 %v486, 4294901760
  %4162 = vmatpush1.msra.mxu0 %v4161
  %4163 = vmatprep.subr.mxu0 0.0
  %v4164 = vand.u32 %v487, 4294901760
  %4165 = vmatpush1.msra.mxu0 %v4164
  %4166 = vmatprep.subr.mxu0 0.0
  %v4167 = vand.u32 %v488, 4294901760
  %4168 = vmatpush1.msra.mxu0 %v4167
  %4169 = vmatprep.subr.mxu0 0.0
  %v4170 = vand.u32 %v489, 4294901760
  %4171 = vmatpush1.msra.mxu0 %v4170
  %4172 = vmatprep.subr.mxu0 0.0
  %v4173 = vand.u32 %v490, 4294901760
  %4174 = vmatpush1.msra.mxu0 %v4173
  %4175 = vmatprep.subr.mxu0 0.0
  %v4176 = vand.u32 %v491, 4294901760
  %4177 = vmatpush1.msra.mxu0 %v4176
  %4178 = vmatprep.subr.mxu0 0.0
  %v4179 = vand.u32 %v492, 4294901760
  %4180 = vmatpush1.msra.mxu0 %v4179
  %4181 = vmatprep.subr.mxu0 0.0
  %v4182 = vand.u32 %v493, 4294901760
  %4183 = vmatpush1.msra.mxu0 %v4182
  %4184 = vmatprep.subr.mxu0 0.0
  %v4185 = vand.u32 %v494, 4294901760
  %4186 = vmatpush1.msra.mxu0 %v4185
  %4187 = vmatprep.subr.mxu0 0.0
  %v4188 = vand.u32 %v495, 4294901760
  %4189 = vmatpush1.msra.mxu0 %v4188
  %4190 = vmatprep.subr.mxu0 0.0
  %v4191 = vand.u32 %v496, 4294901760
  %4192 = vmatpush1.msra.mxu0 %v4191
  %4193 = vmatprep.subr.mxu0 0.0
  %v4194 = vand.u32 %v497, 4294901760
  %4195 = vmatpush1.msra.mxu0 %v4194
  %4196 = vmatprep.subr.mxu0 0.0
  %v4197 = vand.u32 %v498, 4294901760
  %4198 = vmatpush1.msra.mxu0 %v4197
  %4199 = vmatprep.subr.mxu0 0.0
  %v4200 = vand.u32 %v499, 4294901760
  %4201 = vmatpush1.msra.mxu0 %v4200
  %4202 = vmatprep.subr.mxu0 0.0
  %v4203 = vand.u32 %v500, 4294901760
  %4204 = vmatpush1.msra.mxu0 %v4203
  %4205 = vmatprep.subr.mxu0 0.0
  %v4206 = vand.u32 %v501, 4294901760
  %4207 = vmatpush1.msra.mxu0 %v4206
  %4208 = vmatprep.subr.mxu0 0.0
  %v4209 = vand.u32 %v502, 4294901760
  %4210 = vmatpush1.msra.mxu0 %v4209
  %4211 = vmatprep.subr.mxu0 0.0
  %v4212 = vand.u32 %v503, 4294901760
  %4213 = vmatpush1.msra.mxu0 %v4212
  %4214 = vmatprep.subr.mxu0 0.0
  %v4215 = vand.u32 %v504, 4294901760
  %4216 = vmatpush1.msra.mxu0 %v4215
  %4217 = vmatprep.subr.mxu0 0.0
  %v4218 = vand.u32 %v505, 4294901760
  %4219 = vmatpush1.msra.mxu0 %v4218
  %4220 = vmatprep.subr.mxu0 0.0
  %v4221 = vand.u32 %v506, 4294901760
  %4222 = vmatpush1.msra.mxu0 %v4221
  %v4223 = vand.u32 %v555, 4294901760
  %4224 = vmatprep.mubr.f32.mxu0 %v4223
  %v4225 = vand.u32 %v554, 4294901760
  %4226 = vmatmul.mubr.f32.gmra.mrb[0].mxu0 %v4225
  %v4227 = vpop.f32.mrb[0].mxu0
  %v4228 = vadd.f32 %v4117, %v4227
  %v4229 = vpop.f32.mrb[0].mxu0
  %v4230 = vand.u32 %v564, 4294901760
  %4231 = vmatprep.mubr.f32.mxu0 %v4230
  %v4232 = vand.u32 %v563, 4294901760
  %4233 = vmatmul.mubr.f32.gmra.mrb[0].mxu0 %v4232
  %v4234 = vpop.f32.mrb[0].mxu0
  %v4235 = vadd.f32 %v4124, %v4234
  %v4236 = vpop.f32.mrb[0].mxu0
  %4237 = vdwg.mxu0
  %4238 = vmatprep.subr.mxu0 0.0
  %v4239 = vand.u32 %v540, 4294901760
  %4240 = vmatpush1.msra.mxu0 %v4239
  %4241 = vmatprep.subr.mxu0 0.0
  %v4242 = vand.u32 %v541, 4294901760
  %4243 = vmatpush1.msra.mxu0 %v4242
  %4244 = vmatprep.subr.mxu0 0.0
  %v4245 = vand.u32 %v542, 4294901760
  %4246 = vmatpush1.msra.mxu0 %v4245
  %4247 = vmatprep.subr.mxu0 0.0
  %v4248 = vand.u32 %v543, 4294901760
  %4249 = vmatpush1.msra.mxu0 %v4248
  %4250 = vmatprep.subr.mxu0 0.0
  %v4251 = vand.u32 %v544, 4294901760
  %4252 = vmatpush1.msra.mxu0 %v4251
  %4253 = vmatprep.subr.mxu0 0.0
  %v4254 = vand.u32 %v545, 4294901760
  %4255 = vmatpush1.msra.mxu0 %v4254
  %4256 = vmatprep.subr.mxu0 0.0
  %v4257 = vand.u32 %v546, 4294901760
  %4258 = vmatpush1.msra.mxu0 %v4257
  %4259 = vmatprep.subr.mxu0 0.0
  %v4260 = vand.u32 %v547, 4294901760
  %4261 = vmatpush1.msra.mxu0 %v4260
  %4262 = vmatprep.subr.mxu0 0.0
  %v4263 = vand.u32 %v532, 4294901760
  %4264 = vmatpush1.msra.mxu0 %v4263
  %4265 = vmatprep.subr.mxu0 0.0
  %v4266 = vand.u32 %v533, 4294901760
  %4267 = vmatpush1.msra.mxu0 %v4266
  %4268 = vmatprep.subr.mxu0 0.0
  %v4269 = vand.u32 %v534, 4294901760
  %4270 = vmatpush1.msra.mxu0 %v4269
  %4271 = vmatprep.subr.mxu0 0.0
  %v4272 = vand.u32 %v535, 4294901760
  %4273 = vmatpush1.msra.mxu0 %v4272
  %4274 = vmatprep.subr.mxu0 0.0
  %v4275 = vand.u32 %v536, 4294901760
  %4276 = vmatpush1.msra.mxu0 %v4275
  %4277 = vmatprep.subr.mxu0 0.0
  %v4278 = vand.u32 %v537, 4294901760
  %4279 = vmatpush1.msra.mxu0 %v4278
  %4280 = vmatprep.subr.mxu0 0.0
  %v4281 = vand.u32 %v538, 4294901760
  %4282 = vmatpush1.msra.mxu0 %v4281
  %4283 = vmatprep.subr.mxu0 0.0
  %v4284 = vand.u32 %v539, 4294901760
  %4285 = vmatpush1.msra.mxu0 %v4284
  %4286 = vmatprep.subr.mxu0 0.0
  %4287 = vmatpush1.msra.mxu0 0.0
  %4288 = vmatprep.subr.mxu0 0.0
  %4289 = vmatpush1.msra.mxu0 0.0
  %4290 = vmatprep.subr.mxu0 0.0
  %4291 = vmatpush1.msra.mxu0 0.0
  %4292 = vmatprep.subr.mxu0 0.0
  %4293 = vmatpush1.msra.mxu0 0.0
  %4294 = vmatprep.subr.mxu0 0.0
  %4295 = vmatpush1.msra.mxu0 0.0
  %4296 = vmatprep.subr.mxu0 0.0
  %4297 = vmatpush1.msra.mxu0 0.0
  %4298 = vmatprep.subr.mxu0 0.0
  %4299 = vmatpush1.msra.mxu0 0.0
  %4300 = vmatprep.subr.mxu0 0.0
  %4301 = vmatpush1.msra.mxu0 0.0
  %4302 = vmatprep.subr.mxu0 0.0
  %4303 = vmatpush1.msra.mxu0 0.0
  %4304 = vmatprep.subr.mxu0 0.0
  %4305 = vmatpush1.msra.mxu0 0.0
  %4306 = vmatprep.subr.mxu0 0.0
  %4307 = vmatpush1.msra.mxu0 0.0
  %4308 = vmatprep.subr.mxu0 0.0
  %4309 = vmatpush1.msra.mxu0 0.0
  %4310 = vmatprep.subr.mxu0 0.0
  %4311 = vmatpush1.msra.mxu0 0.0
  %4312 = vmatprep.subr.mxu0 0.0
  %4313 = vmatpush1.msra.mxu0 0.0
  %4314 = vmatprep.subr.mxu0 0.0
  %4315 = vmatpush1.msra.mxu0 0.0
  %4316 = vmatprep.subr.mxu0 0.0
  %4317 = vmatpush1.msra.mxu0 0.0
  %4318 = vmatprep.mubr.f32.mxu0 0.0
  %v4319 = vand.u32 %v556, 4294901760
  %v4320 = vsub.f32 %v556, %v4319
  %v4321 = vand.u32 %v4320, 4294901760
  %v4322 = vsub.f32 %v4320, %v4321
  %v4323 = vand.u32 %v4322, 4294901760
  %4324 = vmatmul.mubr.f32.gmra.mrb[0].mxu0 %v4323
  %v4325 = vpop.f32.mrb[0].mxu0
  %v4326 = vadd.f32 %v4228, %v4325
  %v4327 = vpop.f32.mrb[0].mxu0
  %4328 = vmatprep.mubr.f32.mxu0 0.0
  %v4329 = vand.u32 %v565, 4294901760
  %v4330 = vsub.f32 %v565, %v4329
  %v4331 = vand.u32 %v4330, 4294901760
  %v4332 = vsub.f32 %v4330, %v4331
  %v4333 = vand.u32 %v4332, 4294901760
  %4334 = vmatmul.mubr.f32.gmra.mrb[0].mxu0 %v4333
  %v4335 = vpop.f32.mrb[0].mxu0
  %v4336 = vadd.f32 %v4235, %v4335
  %v4337 = vpop.f32.mrb[0].mxu0
  %4338 = vdwg.mxu0
  %4339 = vmatprep.subr.mxu0 0.0
  %v4340 = vand.u32 %v540, 4294901760
  %v4341 = vsub.f32 %v540, %v4340
  %v4342 = vand.u32 %v4341, 4294901760
  %v4343 = vsub.f32 %v4341, %v4342
  %v4344 = vand.u32 %v4343, 4294901760
  %4345 = vmatpush1.msra.mxu0 %v4344
  %4346 = vmatprep.subr.mxu0 0.0
  %v4347 = vand.u32 %v541, 4294901760
  %v4348 = vsub.f32 %v541, %v4347
  %v4349 = vand.u32 %v4348, 4294901760
  %v4350 = vsub.f32 %v4348, %v4349
  %v4351 = vand.u32 %v4350, 4294901760
  %4352 = vmatpush1.msra.mxu0 %v4351
  %4353 = vmatprep.subr.mxu0 0.0
  %v4354 = vand.u32 %v542, 4294901760
  %v4355 = vsub.f32 %v542, %v4354
  %v4356 = vand.u32 %v4355, 4294901760
  %v4357 = vsub.f32 %v4355, %v4356
  %v4358 = vand.u32 %v4357, 4294901760
  %4359 = vmatpush1.msra.mxu0 %v4358
  %4360 = vmatprep.subr.mxu0 0.0
  %v4361 = vand.u32 %v543, 4294901760
  %v4362 = vsub.f32 %v543, %v4361
  %v4363 = vand.u32 %v4362, 4294901760
  %v4364 = vsub.f32 %v4362, %v4363
  %v4365 = vand.u32 %v4364, 4294901760
  %4366 = vmatpush1.msra.mxu0 %v4365
  %4367 = vmatprep.subr.mxu0 0.0
  %v4368 = vand.u32 %v544, 4294901760
  %v4369 = vsub.f32 %v544, %v4368
  %v4370 = vand.u32 %v4369, 4294901760
  %v4371 = vsub.f32 %v4369, %v4370
  %v4372 = vand.u32 %v4371, 4294901760
  %4373 = vmatpush1.msra.mxu0 %v4372
  %4374 = vmatprep.subr.mxu0 0.0
  %v4375 = vand.u32 %v545, 4294901760
  %v4376 = vsub.f32 %v545, %v4375
  %v4377 = vand.u32 %v4376, 4294901760
  %v4378 = vsub.f32 %v4376, %v4377
  %v4379 = vand.u32 %v4378, 4294901760
  %4380 = vmatpush1.msra.mxu0 %v4379
  %4381 = vmatprep.subr.mxu0 0.0
  %v4382 = vand.u32 %v546, 4294901760
  %v4383 = vsub.f32 %v546, %v4382
  %v4384 = vand.u32 %v4383, 4294901760
  %v4385 = vsub.f32 %v4383, %v4384
  %v4386 = vand.u32 %v4385, 4294901760
  %4387 = vmatpush1.msra.mxu0 %v4386
  %4388 = vmatprep.subr.mxu0 0.0
  %v4389 = vand.u32 %v547, 4294901760
  %v4390 = vsub.f32 %v547, %v4389
  %v4391 = vand.u32 %v4390, 4294901760
  %v4392 = vsub.f32 %v4390, %v4391
  %v4393 = vand.u32 %v4392, 4294901760
  %4394 = vmatpush1.msra.mxu0 %v4393
  %4395 = vmatprep.subr.mxu0 0.0
  %v4396 = vand.u32 %v532, 4294901760
  %v4397 = vsub.f32 %v532, %v4396
  %v4398 = vand.u32 %v4397, 4294901760
  %v4399 = vsub.f32 %v4397, %v4398
  %v4400 = vand.u32 %v4399, 4294901760
  %4401 = vmatpush1.msra.mxu0 %v4400
  %4402 = vmatprep.subr.mxu0 0.0
  %v4403 = vand.u32 %v533, 4294901760
  %v4404 = vsub.f32 %v533, %v4403
  %v4405 = vand.u32 %v4404, 4294901760
  %v4406 = vsub.f32 %v4404, %v4405
  %v4407 = vand.u32 %v4406, 4294901760
  %4408 = vmatpush1.msra.mxu0 %v4407
  %4409 = vmatprep.subr.mxu0 0.0
  %v4410 = vand.u32 %v534, 4294901760
  %v4411 = vsub.f32 %v534, %v4410
  %v4412 = vand.u32 %v4411, 4294901760
  %v4413 = vsub.f32 %v4411, %v4412
  %v4414 = vand.u32 %v4413, 4294901760
  %4415 = vmatpush1.msra.mxu0 %v4414
  %4416 = vmatprep.subr.mxu0 0.0
  %v4417 = vand.u32 %v535, 4294901760
  %v4418 = vsub.f32 %v535, %v4417
  %v4419 = vand.u32 %v4418, 4294901760
  %v4420 = vsub.f32 %v4418, %v4419
  %v4421 = vand.u32 %v4420, 4294901760
  %4422 = vmatpush1.msra.mxu0 %v4421
  %4423 = vmatprep.subr.mxu0 0.0
  %v4424 = vand.u32 %v536, 4294901760
  %v4425 = vsub.f32 %v536, %v4424
  %v4426 = vand.u32 %v4425, 4294901760
  %v4427 = vsub.f32 %v4425, %v4426
  %v4428 = vand.u32 %v4427, 4294901760
  %4429 = vmatpush1.msra.mxu0 %v4428
  %4430 = vmatprep.subr.mxu0 0.0
  %v4431 = vand.u32 %v537, 4294901760
  %v4432 = vsub.f32 %v537, %v4431
  %v4433 = vand.u32 %v4432, 4294901760
  %v4434 = vsub.f32 %v4432, %v4433
  %v4435 = vand.u32 %v4434, 4294901760
  %4436 = vmatpush1.msra.mxu0 %v4435
  %4437 = vmatprep.subr.mxu0 0.0
  %v4438 = vand.u32 %v538, 4294901760
  %v4439 = vsub.f32 %v538, %v4438
  %v4440 = vand.u32 %v4439, 4294901760
  %v4441 = vsub.f32 %v4439, %v4440
  %v4442 = vand.u32 %v4441, 4294901760
  %4443 = vmatpush1.msra.mxu0 %v4442
  %4444 = vmatprep.subr.mxu0 0.0
  %v4445 = vand.u32 %v539, 4294901760
  %v4446 = vsub.f32 %v539, %v4445
  %v4447 = vand.u32 %v4446, 4294901760
  %v4448 = vsub.f32 %v4446, %v4447
  %v4449 = vand.u32 %v4448, 4294901760
  %4450 = vmatpush1.msra.mxu0 %v4449
  %4451 = vmatprep.subr.mxu0 0.0
  %4452 = vmatpush1.msra.mxu0 0.0
  %4453 = vmatprep.subr.mxu0 0.0
  %4454 = vmatpush1.msra.mxu0 0.0
  %4455 = vmatprep.subr.mxu0 0.0
  %4456 = vmatpush1.msra.mxu0 0.0
  %4457 = vmatprep.subr.mxu0 0.0
  %4458 = vmatpush1.msra.mxu0 0.0
  %4459 = vmatprep.subr.mxu0 0.0
  %4460 = vmatpush1.msra.mxu0 0.0
  %4461 = vmatprep.subr.mxu0 0.0
  %4462 = vmatpush1.msra.mxu0 0.0
  %4463 = vmatprep.subr.mxu0 0.0
  %4464 = vmatpush1.msra.mxu0 0.0
  %4465 = vmatprep.subr.mxu0 0.0
  %4466 = vmatpush1.msra.mxu0 0.0
  %4467 = vmatprep.subr.mxu0 0.0
  %4468 = vmatpush1.msra.mxu0 0.0
  %4469 = vmatprep.subr.mxu0 0.0
  %4470 = vmatpush1.msra.mxu0 0.0
  %4471 = vmatprep.subr.mxu0 0.0
  %4472 = vmatpush1.msra.mxu0 0.0
  %4473 = vmatprep.subr.mxu0 0.0
  %4474 = vmatpush1.msra.mxu0 0.0
  %4475 = vmatprep.subr.mxu0 0.0
  %4476 = vmatpush1.msra.mxu0 0.0
  %4477 = vmatprep.subr.mxu0 0.0
  %4478 = vmatpush1.msra.mxu0 0.0
  %4479 = vmatprep.subr.mxu0 0.0
  %4480 = vmatpush1.msra.mxu0 0.0
  %4481 = vmatprep.subr.mxu0 0.0
  %4482 = vmatpush1.msra.mxu0 0.0
  %4483 = vmatprep.mubr.f32.mxu0 0.0
  %v4484 = vand.u32 %v556, 4294901760
  %4485 = vmatmul.mubr.f32.gmra.mrb[0].mxu0 %v4484
  %v4486 = vpop.f32.mrb[0].mxu0
  %v4487 = vadd.f32 %v4326, %v4486
  %v4488 = vpop.f32.mrb[0].mxu0
  %4489 = vmatprep.mubr.f32.mxu0 0.0
  %v4490 = vand.u32 %v565, 4294901760
  %4491 = vmatmul.mubr.f32.gmra.mrb[0].mxu0 %v4490
  %v4492 = vpop.f32.mrb[0].mxu0
  %v4493 = vadd.f32 %v4336, %v4492
  %v4494 = vpop.f32.mrb[0].mxu0
  %4495 = vdwg.mxu0
  %4496 = vmatprep.subr.mxu0 0.0
  %v4497 = vand.u32 %v540, 4294901760
  %v4498 = vsub.f32 %v540, %v4497
  %4499 = vmatpush1.msra.mxu0 %v4498
  %4500 = vmatprep.subr.mxu0 0.0
  %v4501 = vand.u32 %v541, 4294901760
  %v4502 = vsub.f32 %v541, %v4501
  %4503 = vmatpush1.msra.mxu0 %v4502
  %4504 = vmatprep.subr.mxu0 0.0
  %v4505 = vand.u32 %v542, 4294901760
  %v4506 = vsub.f32 %v542, %v4505
  %4507 = vmatpush1.msra.mxu0 %v4506
  %4508 = vmatprep.subr.mxu0 0.0
  %v4509 = vand.u32 %v543, 4294901760
  %v4510 = vsub.f32 %v543, %v4509
  %4511 = vmatpush1.msra.mxu0 %v4510
  %4512 = vmatprep.subr.mxu0 0.0
  %v4513 = vand.u32 %v544, 4294901760
  %v4514 = vsub.f32 %v544, %v4513
  %4515 = vmatpush1.msra.mxu0 %v4514
  %4516 = vmatprep.subr.mxu0 0.0
  %v4517 = vand.u32 %v545, 4294901760
  %v4518 = vsub.f32 %v545, %v4517
  %4519 = vmatpush1.msra.mxu0 %v4518
  %4520 = vmatprep.subr.mxu0 0.0
  %v4521 = vand.u32 %v546, 4294901760
  %v4522 = vsub.f32 %v546, %v4521
  %4523 = vmatpush1.msra.mxu0 %v4522
  %4524 = vmatprep.subr.mxu0 0.0
  %v4525 = vand.u32 %v547, 4294901760
  %v4526 = vsub.f32 %v547, %v4525
  %4527 = vmatpush1.msra.mxu0 %v4526
  %4528 = vmatprep.subr.mxu0 0.0
  %v4529 = vand.u32 %v532, 4294901760
  %v4530 = vsub.f32 %v532, %v4529
  %4531 = vmatpush1.msra.mxu0 %v4530
  %4532 = vmatprep.subr.mxu0 0.0
  %v4533 = vand.u32 %v533, 4294901760
  %v4534 = vsub.f32 %v533, %v4533
  %4535 = vmatpush1.msra.mxu0 %v4534
  %4536 = vmatprep.subr.mxu0 0.0
  %v4537 = vand.u32 %v534, 4294901760
  %v4538 = vsub.f32 %v534, %v4537
  %4539 = vmatpush1.msra.mxu0 %v4538
  %4540 = vmatprep.subr.mxu0 0.0
  %v4541 = vand.u32 %v535, 4294901760
  %v4542 = vsub.f32 %v535, %v4541
  %4543 = vmatpush1.msra.mxu0 %v4542
  %4544 = vmatprep.subr.mxu0 0.0
  %v4545 = vand.u32 %v536, 4294901760
  %v4546 = vsub.f32 %v536, %v4545
  %4547 = vmatpush1.msra.mxu0 %v4546
  %4548 = vmatprep.subr.mxu0 0.0
  %v4549 = vand.u32 %v537, 4294901760
  %v4550 = vsub.f32 %v537, %v4549
  %4551 = vmatpush1.msra.mxu0 %v4550
  %4552 = vmatprep.subr.mxu0 0.0
  %v4553 = vand.u32 %v538, 4294901760
  %v4554 = vsub.f32 %v538, %v4553
  %4555 = vmatpush1.msra.mxu0 %v4554
  %4556 = vmatprep.subr.mxu0 0.0
  %v4557 = vand.u32 %v539, 4294901760
  %v4558 = vsub.f32 %v539, %v4557
  %4559 = vmatpush1.msra.mxu0 %v4558
  %4560 = vmatprep.subr.mxu0 0.0
  %4561 = vmatpush1.msra.mxu0 0.0
  %4562 = vmatprep.subr.mxu0 0.0
  %4563 = vmatpush1.msra.mxu0 0.0
  %4564 = vmatprep.subr.mxu0 0.0
  %4565 = vmatpush1.msra.mxu0 0.0
  %4566 = vmatprep.subr.mxu0 0.0
  %4567 = vmatpush1.msra.mxu0 0.0
  %4568 = vmatprep.subr.mxu0 0.0
  %4569 = vmatpush1.msra.mxu0 0.0
  %4570 = vmatprep.subr.mxu0 0.0
  %4571 = vmatpush1.msra.mxu0 0.0
  %4572 = vmatprep.subr.mxu0 0.0
  %4573 = vmatpush1.msra.mxu0 0.0
  %4574 = vmatprep.subr.mxu0 0.0
  %4575 = vmatpush1.msra.mxu0 0.0
  %4576 = vmatprep.subr.mxu0 0.0
  %4577 = vmatpush1.msra.mxu0 0.0
  %4578 = vmatprep.subr.mxu0 0.0
  %4579 = vmatpush1.msra.mxu0 0.0
  %4580 = vmatprep.subr.mxu0 0.0
  %4581 = vmatpush1.msra.mxu0 0.0
  %4582 = vmatprep.subr.mxu0 0.0
  %4583 = vmatpush1.msra.mxu0 0.0
  %4584 = vmatprep.subr.mxu0 0.0
  %4585 = vmatpush1.msra.mxu0 0.0
  %4586 = vmatprep.subr.mxu0 0.0
  %4587 = vmatpush1.msra.mxu0 0.0
  %4588 = vmatprep.subr.mxu0 0.0
  %4589 = vmatpush1.msra.mxu0 0.0
  %4590 = vmatprep.subr.mxu0 0.0
  %4591 = vmatpush1.msra.mxu0 0.0
  %4592 = vmatprep.mubr.f32.mxu0 0.0
  %v4593 = vand.u32 %v556, 4294901760
  %v4594 = vsub.f32 %v556, %v4593
  %4595 = vmatmul.mubr.f32.gmra.mrb[0].mxu0 %v4594
  %v4596 = vpop.f32.mrb[0].mxu0
  %v4597 = vadd.f32 %v4487, %v4596
  %v4598 = vpop.f32.mrb[0].mxu0
  %4599 = vmatprep.mubr.f32.mxu0 0.0
  %v4600 = vand.u32 %v565, 4294901760
  %v4601 = vsub.f32 %v565, %v4600
  %4602 = vmatmul.mubr.f32.gmra.mrb[0].mxu0 %v4601
  %v4603 = vpop.f32.mrb[0].mxu0
  %v4604 = vadd.f32 %v4493, %v4603
  %v4605 = vpop.f32.mrb[0].mxu0
  %4606 = vdwg.mxu0
  %4607 = vmatprep.subr.mxu0 0.0
  %v4608 = vand.u32 %v540, 4294901760
  %4609 = vmatpush1.msra.mxu0 %v4608
  %4610 = vmatprep.subr.mxu0 0.0
  %v4611 = vand.u32 %v541, 4294901760
  %4612 = vmatpush1.msra.mxu0 %v4611
  %4613 = vmatprep.subr.mxu0 0.0
  %v4614 = vand.u32 %v542, 4294901760
  %4615 = vmatpush1.msra.mxu0 %v4614
  %4616 = vmatprep.subr.mxu0 0.0
  %v4617 = vand.u32 %v543, 4294901760
  %4618 = vmatpush1.msra.mxu0 %v4617
  %4619 = vmatprep.subr.mxu0 0.0
  %v4620 = vand.u32 %v544, 4294901760
  %4621 = vmatpush1.msra.mxu0 %v4620
  %4622 = vmatprep.subr.mxu0 0.0
  %v4623 = vand.u32 %v545, 4294901760
  %4624 = vmatpush1.msra.mxu0 %v4623
  %4625 = vmatprep.subr.mxu0 0.0
  %v4626 = vand.u32 %v546, 4294901760
  %4627 = vmatpush1.msra.mxu0 %v4626
  %4628 = vmatprep.subr.mxu0 0.0
  %v4629 = vand.u32 %v547, 4294901760
  %4630 = vmatpush1.msra.mxu0 %v4629
  %4631 = vmatprep.subr.mxu0 0.0
  %v4632 = vand.u32 %v532, 4294901760
  %4633 = vmatpush1.msra.mxu0 %v4632
  %4634 = vmatprep.subr.mxu0 0.0
  %v4635 = vand.u32 %v533, 4294901760
  %4636 = vmatpush1.msra.mxu0 %v4635
  %4637 = vmatprep.subr.mxu0 0.0
  %v4638 = vand.u32 %v534, 4294901760
  %4639 = vmatpush1.msra.mxu0 %v4638
  %4640 = vmatprep.subr.mxu0 0.0
  %v4641 = vand.u32 %v535, 4294901760
  %4642 = vmatpush1.msra.mxu0 %v4641
  %4643 = vmatprep.subr.mxu0 0.0
  %v4644 = vand.u32 %v536, 4294901760
  %4645 = vmatpush1.msra.mxu0 %v4644
  %4646 = vmatprep.subr.mxu0 0.0
  %v4647 = vand.u32 %v537, 4294901760
  %4648 = vmatpush1.msra.mxu0 %v4647
  %4649 = vmatprep.subr.mxu0 0.0
  %v4650 = vand.u32 %v538, 4294901760
  %4651 = vmatpush1.msra.mxu0 %v4650
  %4652 = vmatprep.subr.mxu0 0.0
  %v4653 = vand.u32 %v539, 4294901760
  %4654 = vmatpush1.msra.mxu0 %v4653
  %4655 = vmatprep.subr.mxu0 0.0
  %4656 = vmatpush1.msra.mxu0 0.0
  %4657 = vmatprep.subr.mxu0 0.0
  %4658 = vmatpush1.msra.mxu0 0.0
  %4659 = vmatprep.subr.mxu0 0.0
  %4660 = vmatpush1.msra.mxu0 0.0
  %4661 = vmatprep.subr.mxu0 0.0
  %4662 = vmatpush1.msra.mxu0 0.0
  %4663 = vmatprep.subr.mxu0 0.0
  %4664 = vmatpush1.msra.mxu0 0.0
  %4665 = vmatprep.subr.mxu0 0.0
  %4666 = vmatpush1.msra.mxu0 0.0
  %4667 = vmatprep.subr.mxu0 0.0
  %4668 = vmatpush1.msra.mxu0 0.0
  %4669 = vmatprep.subr.mxu0 0.0
  %4670 = vmatpush1.msra.mxu0 0.0
  %4671 = vmatprep.subr.mxu0 0.0
  %4672 = vmatpush1.msra.mxu0 0.0
  %4673 = vmatprep.subr.mxu0 0.0
  %4674 = vmatpush1.msra.mxu0 0.0
  %4675 = vmatprep.subr.mxu0 0.0
  %4676 = vmatpush1.msra.mxu0 0.0
  %4677 = vmatprep.subr.mxu0 0.0
  %4678 = vmatpush1.msra.mxu0 0.0
  %4679 = vmatprep.subr.mxu0 0.0
  %4680 = vmatpush1.msra.mxu0 0.0
  %4681 = vmatprep.subr.mxu0 0.0
  %4682 = vmatpush1.msra.mxu0 0.0
  %4683 = vmatprep.subr.mxu0 0.0
  %4684 = vmatpush1.msra.mxu0 0.0
  %4685 = vmatprep.subr.mxu0 0.0
  %4686 = vmatpush1.msra.mxu0 0.0
  %4687 = vmatprep.mubr.f32.mxu0 0.0
  %v4688 = vand.u32 %v556, 4294901760
  %v4689 = vsub.f32 %v556, %v4688
  %v4690 = vand.u32 %v4689, 4294901760
  %4691 = vmatmul.mubr.f32.gmra.mrb[0].mxu0 %v4690
  %v4692 = vpop.f32.mrb[0].mxu0
  %v4693 = vadd.f32 %v4597, %v4692
  %v4694 = vpop.f32.mrb[0].mxu0
  %4695 = vmatprep.mubr.f32.mxu0 0.0
  %v4696 = vand.u32 %v565, 4294901760
  %v4697 = vsub.f32 %v565, %v4696
  %v4698 = vand.u32 %v4697, 4294901760
  %4699 = vmatmul.mubr.f32.gmra.mrb[0].mxu0 %v4698
  %v4700 = vpop.f32.mrb[0].mxu0
  %v4701 = vadd.f32 %v4604, %v4700
  %v4702 = vpop.f32.mrb[0].mxu0
  %4703 = vdwg.mxu0
  %4704 = vmatprep.subr.mxu0 0.0
  %v4705 = vand.u32 %v540, 4294901760
  %v4706 = vsub.f32 %v540, %v4705
  %v4707 = vand.u32 %v4706, 4294901760
  %4708 = vmatpush1.msra.mxu0 %v4707
  %4709 = vmatprep.subr.mxu0 0.0
  %v4710 = vand.u32 %v541, 4294901760
  %v4711 = vsub.f32 %v541, %v4710
  %v4712 = vand.u32 %v4711, 4294901760
  %4713 = vmatpush1.msra.mxu0 %v4712
  %4714 = vmatprep.subr.mxu0 0.0
  %v4715 = vand.u32 %v542, 4294901760
  %v4716 = vsub.f32 %v542, %v4715
  %v4717 = vand.u32 %v4716, 4294901760
  %4718 = vmatpush1.msra.mxu0 %v4717
  %4719 = vmatprep.subr.mxu0 0.0
  %v4720 = vand.u32 %v543, 4294901760
  %v4721 = vsub.f32 %v543, %v4720
  %v4722 = vand.u32 %v4721, 4294901760
  %4723 = vmatpush1.msra.mxu0 %v4722
  %4724 = vmatprep.subr.mxu0 0.0
  %v4725 = vand.u32 %v544, 4294901760
  %v4726 = vsub.f32 %v544, %v4725
  %v4727 = vand.u32 %v4726, 4294901760
  %4728 = vmatpush1.msra.mxu0 %v4727
  %4729 = vmatprep.subr.mxu0 0.0
  %v4730 = vand.u32 %v545, 4294901760
  %v4731 = vsub.f32 %v545, %v4730
  %v4732 = vand.u32 %v4731, 4294901760
  %4733 = vmatpush1.msra.mxu0 %v4732
  %4734 = vmatprep.subr.mxu0 0.0
  %v4735 = vand.u32 %v546, 4294901760
  %v4736 = vsub.f32 %v546, %v4735
  %v4737 = vand.u32 %v4736, 4294901760
  %4738 = vmatpush1.msra.mxu0 %v4737
  %4739 = vmatprep.subr.mxu0 0.0
  %v4740 = vand.u32 %v547, 4294901760
  %v4741 = vsub.f32 %v547, %v4740
  %v4742 = vand.u32 %v4741, 4294901760
  %4743 = vmatpush1.msra.mxu0 %v4742
  %4744 = vmatprep.subr.mxu0 0.0
  %v4745 = vand.u32 %v532, 4294901760
  %v4746 = vsub.f32 %v532, %v4745
  %v4747 = vand.u32 %v4746, 4294901760
  %4748 = vmatpush1.msra.mxu0 %v4747
  %4749 = vmatprep.subr.mxu0 0.0
  %v4750 = vand.u32 %v533, 4294901760
  %v4751 = vsub.f32 %v533, %v4750
  %v4752 = vand.u32 %v4751, 4294901760
  %4753 = vmatpush1.msra.mxu0 %v4752
  %4754 = vmatprep.subr.mxu0 0.0
  %v4755 = vand.u32 %v534, 4294901760
  %v4756 = vsub.f32 %v534, %v4755
  %v4757 = vand.u32 %v4756, 4294901760
  %4758 = vmatpush1.msra.mxu0 %v4757
  %4759 = vmatprep.subr.mxu0 0.0
  %v4760 = vand.u32 %v535, 4294901760
  %v4761 = vsub.f32 %v535, %v4760
  %v4762 = vand.u32 %v4761, 4294901760
  %4763 = vmatpush1.msra.mxu0 %v4762
  %4764 = vmatprep.subr.mxu0 0.0
  %v4765 = vand.u32 %v536, 4294901760
  %v4766 = vsub.f32 %v536, %v4765
  %v4767 = vand.u32 %v4766, 4294901760
  %4768 = vmatpush1.msra.mxu0 %v4767
  %4769 = vmatprep.subr.mxu0 0.0
  %v4770 = vand.u32 %v537, 4294901760
  %v4771 = vsub.f32 %v537, %v4770
  %v4772 = vand.u32 %v4771, 4294901760
  %4773 = vmatpush1.msra.mxu0 %v4772
  %4774 = vmatprep.subr.mxu0 0.0
  %v4775 = vand.u32 %v538, 4294901760
  %v4776 = vsub.f32 %v538, %v4775
  %v4777 = vand.u32 %v4776, 4294901760
  %4778 = vmatpush1.msra.mxu0 %v4777
  %4779 = vmatprep.subr.mxu0 0.0
  %v4780 = vand.u32 %v539, 4294901760
  %v4781 = vsub.f32 %v539, %v4780
  %v4782 = vand.u32 %v4781, 4294901760
  %4783 = vmatpush1.msra.mxu0 %v4782
  %4784 = vmatprep.subr.mxu0 0.0
  %4785 = vmatpush1.msra.mxu0 0.0
  %4786 = vmatprep.subr.mxu0 0.0
  %4787 = vmatpush1.msra.mxu0 0.0
  %4788 = vmatprep.subr.mxu0 0.0
  %4789 = vmatpush1.msra.mxu0 0.0
  %4790 = vmatprep.subr.mxu0 0.0
  %4791 = vmatpush1.msra.mxu0 0.0
  %4792 = vmatprep.subr.mxu0 0.0
  %4793 = vmatpush1.msra.mxu0 0.0
  %4794 = vmatprep.subr.mxu0 0.0
  %4795 = vmatpush1.msra.mxu0 0.0
  %4796 = vmatprep.subr.mxu0 0.0
  %4797 = vmatpush1.msra.mxu0 0.0
  %4798 = vmatprep.subr.mxu0 0.0
  %4799 = vmatpush1.msra.mxu0 0.0
  %4800 = vmatprep.subr.mxu0 0.0
  %4801 = vmatpush1.msra.mxu0 0.0
  %4802 = vmatprep.subr.mxu0 0.0
  %4803 = vmatpush1.msra.mxu0 0.0
  %4804 = vmatprep.subr.mxu0 0.0
  %4805 = vmatpush1.msra.mxu0 0.0
  %4806 = vmatprep.subr.mxu0 0.0
  %4807 = vmatpush1.msra.mxu0 0.0
  %4808 = vmatprep.subr.mxu0 0.0
  %4809 = vmatpush1.msra.mxu0 0.0
  %4810 = vmatprep.subr.mxu0 0.0
  %4811 = vmatpush1.msra.mxu0 0.0
  %4812 = vmatprep.subr.mxu0 0.0
  %4813 = vmatpush1.msra.mxu0 0.0
  %4814 = vmatprep.subr.mxu0 0.0
  %4815 = vmatpush1.msra.mxu0 0.0
  %4816 = vmatprep.mubr.f32.mxu0 0.0
  %v4817 = vand.u32 %v556, 4294901760
  %4818 = vmatmul.mubr.f32.gmra.mrb[0].mxu0 %v4817
  %v4819 = vpop.f32.mrb[0].mxu0
  %v4820 = vadd.f32 %v4693, %v4819
  %v4821 = vpop.f32.mrb[0].mxu0
  %4822 = vmatprep.mubr.f32.mxu0 0.0
  %v4823 = vand.u32 %v565, 4294901760
  %4824 = vmatmul.mubr.f32.gmra.mrb[0].mxu0 %v4823
  %v4825 = vpop.f32.mrb[0].mxu0
  %v4826 = vadd.f32 %v4701, %v4825
  %v4827 = vpop.f32.mrb[0].mxu0
  %4828 = vdwg.mxu0
  %4829 = vmatprep.subr.mxu0 0.0
  %v4830 = vand.u32 %v540, 4294901760
  %4831 = vmatpush1.msra.mxu0 %v4830
  %4832 = vmatprep.subr.mxu0 0.0
  %v4833 = vand.u32 %v541, 4294901760
  %4834 = vmatpush1.msra.mxu0 %v4833
  %4835 = vmatprep.subr.mxu0 0.0
  %v4836 = vand.u32 %v542, 4294901760
  %4837 = vmatpush1.msra.mxu0 %v4836
  %4838 = vmatprep.subr.mxu0 0.0
  %v4839 = vand.u32 %v543, 4294901760
  %4840 = vmatpush1.msra.mxu0 %v4839
  %4841 = vmatprep.subr.mxu0 0.0
  %v4842 = vand.u32 %v544, 4294901760
  %4843 = vmatpush1.msra.mxu0 %v4842
  %4844 = vmatprep.subr.mxu0 0.0
  %v4845 = vand.u32 %v545, 4294901760
  %4846 = vmatpush1.msra.mxu0 %v4845
  %4847 = vmatprep.subr.mxu0 0.0
  %v4848 = vand.u32 %v546, 4294901760
  %4849 = vmatpush1.msra.mxu0 %v4848
  %4850 = vmatprep.subr.mxu0 0.0
  %v4851 = vand.u32 %v547, 4294901760
  %4852 = vmatpush1.msra.mxu0 %v4851
  %4853 = vmatprep.subr.mxu0 0.0
  %v4854 = vand.u32 %v532, 4294901760
  %4855 = vmatpush1.msra.mxu0 %v4854
  %4856 = vmatprep.subr.mxu0 0.0
  %v4857 = vand.u32 %v533, 4294901760
  %4858 = vmatpush1.msra.mxu0 %v4857
  %4859 = vmatprep.subr.mxu0 0.0
  %v4860 = vand.u32 %v534, 4294901760
  %4861 = vmatpush1.msra.mxu0 %v4860
  %4862 = vmatprep.subr.mxu0 0.0
  %v4863 = vand.u32 %v535, 4294901760
  %4864 = vmatpush1.msra.mxu0 %v4863
  %4865 = vmatprep.subr.mxu0 0.0
  %v4866 = vand.u32 %v536, 4294901760
  %4867 = vmatpush1.msra.mxu0 %v4866
  %4868 = vmatprep.subr.mxu0 0.0
  %v4869 = vand.u32 %v537, 4294901760
  %4870 = vmatpush1.msra.mxu0 %v4869
  %4871 = vmatprep.subr.mxu0 0.0
  %v4872 = vand.u32 %v538, 4294901760
  %4873 = vmatpush1.msra.mxu0 %v4872
  %4874 = vmatprep.subr.mxu0 0.0
  %v4875 = vand.u32 %v539, 4294901760
  %4876 = vmatpush1.msra.mxu0 %v4875
  %4877 = vmatprep.subr.mxu0 0.0
  %4878 = vmatpush1.msra.mxu0 0.0
  %4879 = vmatprep.subr.mxu0 0.0
  %4880 = vmatpush1.msra.mxu0 0.0
  %4881 = vmatprep.subr.mxu0 0.0
  %4882 = vmatpush1.msra.mxu0 0.0
  %4883 = vmatprep.subr.mxu0 0.0
  %4884 = vmatpush1.msra.mxu0 0.0
  %4885 = vmatprep.subr.mxu0 0.0
  %4886 = vmatpush1.msra.mxu0 0.0
  %4887 = vmatprep.subr.mxu0 0.0
  %4888 = vmatpush1.msra.mxu0 0.0
  %4889 = vmatprep.subr.mxu0 0.0
  %4890 = vmatpush1.msra.mxu0 0.0
  %4891 = vmatprep.subr.mxu0 0.0
  %4892 = vmatpush1.msra.mxu0 0.0
  %4893 = vmatprep.subr.mxu0 0.0
  %4894 = vmatpush1.msra.mxu0 0.0
  %4895 = vmatprep.subr.mxu0 0.0
  %4896 = vmatpush1.msra.mxu0 0.0
  %4897 = vmatprep.subr.mxu0 0.0
  %4898 = vmatpush1.msra.mxu0 0.0
  %4899 = vmatprep.subr.mxu0 0.0
  %4900 = vmatpush1.msra.mxu0 0.0
  %4901 = vmatprep.subr.mxu0 0.0
  %4902 = vmatpush1.msra.mxu0 0.0
  %4903 = vmatprep.subr.mxu0 0.0
  %4904 = vmatpush1.msra.mxu0 0.0
  %4905 = vmatprep.subr.mxu0 0.0
  %4906 = vmatpush1.msra.mxu0 0.0
  %4907 = vmatprep.subr.mxu0 0.0
  %4908 = vmatpush1.msra.mxu0 0.0
  %4909 = vmatprep.mubr.f32.mxu0 0.0
  %v4910 = vand.u32 %v556, 4294901760
  %4911 = vmatmul.mubr.f32.gmra.mrb[0].mxu0 %v4910
  %v4912 = vpop.f32.mrb[0].mxu0
  %v4913 = vadd.f32 %v4820, %v4912
  %v4914 = vpop.f32.mrb[0].mxu0
  %4915 = vmatprep.mubr.f32.mxu0 0.0
  %v4916 = vand.u32 %v565, 4294901760
  %4917 = vmatmul.mubr.f32.gmra.mrb[0].mxu0 %v4916
  %v4918 = vpop.f32.mrb[0].mxu0
  %v4919 = vadd.f32 %v4826, %v4918
  %v4920 = vpop.f32.mrb[0].mxu0
  %4921 = vdwg.mxu0
  %v4922 = vmax.f32 %v4913, 0.0
  %v4923 = vmax.f32 %v4919, 0.0
  %4924 = vst [vmem:[%s2] sm:$0xff] %v4922
  %4925 = vst [vmem:[%s2 + $0x8] sm:$0xff] %v4923
  // Predicated region
  $region10: #{tensor_network_batched.1} parent=0 // pred_check
    _
  $region11: #{tensor_network_batched.1} parent=0 // pred_check_branch
    %4927 = sbr.rel (0) target = $region13
  $region12: #{tensor_network_batched.1} parent=0 // pred_region
    _
  $region13: #{tensor_network_batched.1} parent=0 // pred_fallthru
    _
  // Predicated region
  $region14: #{tensor_network_batched.1} parent=0 // pred_check
    _
  $region15: #{tensor_network_batched.1} parent=0 // pred_check_branch
    %4929 = sbr.rel (0) target = $region17
  $region16: #{tensor_network_batched.1} parent=0 // pred_region
    _
  $region17: #{tensor_network_batched.1} parent=0 // pred_fallthru
    _

</llo_original>
